<compile_context>
chip_gen: v5e
topology: v5e:2x2
jax: 0.10.0
libtpu: 0.0.40
codegen_flags: <defaults>
</compile_context>

<pallas_src>
import functools

import jax
import jax.numpy as jnp
from jax import lax
from jax.experimental import pallas as pl
from jax.experimental.pallas import tpu as pltpu


# ----------------------------- fused Pallas kernel -----------------------------

def down_fused_kernel(x_ref, w1_ref, s1_ref, t1_ref, w2_ref, s2_ref, t2_ref, o_ref):
    # x_ref : (1, Cin, H, W)   f32   one batch element, NCHW
    # w1_ref: (Cout, 9*Cin)    bf16/f32   conv1 weights, col index = (dh*3+dw)*Cin + c
    # s1/t1 : (Cout, 1)        f32   folded BN1 scale / shift
    # w2_ref: (Cout, 9*Cout)   bf16/f32   conv2 weights
    # s2/t2 : (Cout, 1)        f32   folded BN2 scale / shift
    # o_ref : (1, Cout, Ho*Wo) f32   lane-dense output (minor dim = Ho*Wo)
    Cin, H, W = x_ref.shape[1], x_ref.shape[2], x_ref.shape[3]
    Cout = o_ref.shape[1]
    Ho, Wo = H // 2, W // 2

    # --- MaxPool2d(2): (Cin, H, W) -> (Cin, Ho, Wo); never leaves VMEM ---
    x = x_ref[0]
    x = jnp.max(x.reshape(Cin, Ho, 2, W), axis=2)        # pool rows
    x = jnp.max(x.reshape(Cin, Ho, Wo, 2), axis=3)       # pool cols

    def pad1_hw(v):
        # zero-pad 1 on both spatial dims: (C, Ho, Wo) -> (C, Ho+2, Wo+2)
        C = v.shape[0]
        zc = jnp.zeros((C, Ho, 1), v.dtype)
        v = jnp.concatenate([zc, v, zc], axis=2)
        zr = jnp.zeros((C, 1, Wo + 2), v.dtype)
        return jnp.concatenate([zr, v, zr], axis=1)

    def im2col_T(vpad):
        # (C, Ho+2, Wo+2) -> (9*C, Ho*Wo); row index = (dh*3+dw)*C + c
        C = vpad.shape[0]
        taps = [vpad[:, dh:dh + Ho, dw:dw + Wo]
                for dh in range(3) for dw in range(3)]
        return jnp.concatenate(taps, axis=0).reshape(9 * C, Ho * Wo)

    # --- conv1 3x3 (pad=1) + BN + ReLU: one MXU matmul, K = 9*Cin ---
    p1 = im2col_T(pad1_hw(x.astype(w1_ref.dtype)))                        # (9*Cin, Ho*Wo)
    y1 = jnp.dot(w1_ref[...], p1, preferred_element_type=jnp.float32)     # (Cout, Ho*Wo)
    y1 = jnp.maximum(y1 * s1_ref[...] + t1_ref[...], 0.0)                 # f32 epilogue

    # --- conv2 3x3 (pad=1) + BN + ReLU: one MXU matmul, K = 9*Cout ---
    h1 = y1.reshape(Cout, Ho, Wo).astype(w2_ref.dtype)
    p2 = im2col_T(pad1_hw(h1))                                            # (9*Cout, Ho*Wo)
    y2 = jnp.dot(w2_ref[...], p2, preferred_element_type=jnp.float32)     # (Cout, Ho*Wo)
    y2 = jnp.maximum(y2 * s2_ref[...] + t2_ref[...], 0.0)

    # lane-dense store: minor dim is Ho*Wo (=64 here), not Cout (=8)
    o_ref[0] = y2.astype(o_ref.dtype)


# ------------------------------ host wrappers ------------------------------

def fold_bn(bias, gamma, beta, mean, var, eps=1e-5):
    scale = gamma / jnp.sqrt(var + eps)
    shift = beta + (bias - mean) * scale
    return scale, shift


def conv_w_to_mat(w_oihw, compute_dtype):
    # OIHW -> (Cout, 9*Cin) with column index = (dh*3+dw)*Cin + c  (matches im2col_T rows)
    Cout, Cin = w_oihw.shape[0], w_oihw.shape[1]
    w = jnp.transpose(w_oihw, (2, 3, 1, 0)).reshape(9 * Cin, Cout)
    return jnp.transpose(w, (1, 0)).astype(compute_dtype)


@functools.partial(jax.jit, static_argnames=("compute_dtype",))
def down_forward(x_nchw, params, compute_dtype=jnp.bfloat16, eps=1e-5):
    """Down.forward.  x_nchw: (N, C_in, H, W) -> (N, C_out, H//2, W//2), all NCHW."""
    N, Cin, H, W = x_nchw.shape
    assert H % 2 == 0 and W % 2 == 0, "MaxPool2d(2) requires even H and W"
    Ho, Wo = H // 2, W // 2
    Cout = params["w1"].shape[0]

    w1 = conv_w_to_mat(params["w1"], compute_dtype)                  # (Cout, 9*Cin)
    w2 = conv_w_to_mat(params["w2"], compute_dtype)                  # (Cout, 9*Cout)
    s1, t1 = fold_bn(params["b1"], params["g1"], params["be1"], params["m1"], params["v1"], eps)
    s2, t2 = fold_bn(params["b2"], params["g2"], params["be2"], params["m2"], params["v2"], eps)
    s1 = s1.reshape(Cout, 1).astype(jnp.float32)
    t1 = t1.reshape(Cout, 1).astype(jnp.float32)
    s2 = s2.reshape(Cout, 1).astype(jnp.float32)
    t2 = t2.reshape(Cout, 1).astype(jnp.float32)

    out = pl.pallas_call(
        down_fused_kernel,
        out_shape=jax.ShapeDtypeStruct((N, Cout, Ho * Wo), jnp.float32),
        grid=(N,),
        in_specs=[
            pl.BlockSpec((1, Cin, H, W), lambda n: (n, 0, 0, 0)),
            pl.BlockSpec((Cout, 9 * Cin), lambda n: (0, 0)),
            pl.BlockSpec((Cout, 1), lambda n: (0, 0)),
            pl.BlockSpec((Cout, 1), lambda n: (0, 0)),
            pl.BlockSpec((Cout, 9 * Cout), lambda n: (0, 0)),
            pl.BlockSpec((Cout, 1), lambda n: (0, 0)),
            pl.BlockSpec((Cout, 1), lambda n: (0, 0)),
        ],
        out_specs=pl.BlockSpec((1, Cout, Ho * Wo), lambda n: (n, 0, 0)),
        compiler_params=pltpu.CompilerParams(dimension_semantics=("parallel",)),
    )(x_nchw, w1, s1, t1, w2, s2, t2)

    return out.reshape(N, Cout, Ho, Wo)                               # free reshape, NCHW


def init_params(key, in_ch, out_ch):
    """Deterministic synthetic parameters matching the PyTorch module shapes."""
    ks = jax.random.split(key, 10)
    p = {}
    p["w1"] = 0.1 * jax.random.normal(ks[0], (out_ch, in_ch, 3, 3), jnp.float32)   # OIHW
    p["b1"] = 0.05 * jax.random.normal(ks[1], (out_ch,), jnp.float32)
    p["g1"] = 1.0 + 0.1 * jax.random.normal(ks[2], (out_ch,), jnp.float32)
    p["be1"] = 0.1 * jax.random.normal(ks[3], (out_ch,), jnp.float32)
    p["m1"] = 0.05 * jax.random.normal(ks[4], (out_ch,), jnp.float32)
    p["v1"] = jnp.abs(1.0 + 0.1 * jax.random.normal(ks[5], (out_ch,), jnp.float32))
    p["w2"] = 0.1 * jax.random.normal(ks[6], (out_ch, out_ch, 3, 3), jnp.float32)
    p["b2"] = 0.05 * jax.random.normal(ks[7], (out_ch,), jnp.float32)
    p["g2"] = 1.0 + 0.1 * jax.random.normal(ks[8], (out_ch,), jnp.float32)
    p["be2"] = 0.1 * jax.random.normal(ks[9], (out_ch,), jnp.float32)
    p["m2"] = jnp.zeros((out_ch,), jnp.float32)
    p["v2"] = jnp.ones((out_ch,), jnp.float32)
    return p


# ------------------------- pure-JAX reference check -------------------------

def down_reference(x_nchw, params, compute_dtype=jnp.float32, eps=1e-5):
    """Reference with the same operand-cast points as the kernel (exact module for f32)."""
    x = lax.reduce_window(x_nchw, -jnp.inf, lax.max,
                          (1, 1, 2, 2), (1, 1, 2, 2), "VALID")

    def conv_bn_relu(x, w, b, g, be, m, v):
        y = lax.conv_general_dilated(
            x.astype(compute_dtype), w.astype(compute_dtype), (1, 1), "SAME",
            dimension_numbers=("NCHW", "OIHW", "NCHW"),
            preferred_element_type=jnp.float32)
        y = y + b[None, :, None, None]
        y = (y - m[None, :, None, None]) / jnp.sqrt(v[None, :, None, None] + eps)
        y = y * g[None, :, None, None] + be[None, :, None, None]
        return jnp.maximum(y, 0.0)

    x = conv_bn_relu(x, params["w1"], params["b1"], params["g1"],
                     params["be1"], params["m1"], params["v1"])
    x = conv_bn_relu(x, params["w2"], params["b2"], params["g2"],
                     params["be2"], params["m2"], params["v2"])
    return x


# ----------------------------------- main -----------------------------------

if __name__ == "__main__":
    key = jax.random.PRNGKey(0)
    k_x, k_p = jax.random.split(key)

    N, C_IN, C_OUT, H, W = 2, 4, 8, 16, 16
    x = jax.random.normal(k_x, (N, C_IN, H, W), jnp.float32)     # NCHW like PyTorch
    params = init_params(k_p, C_IN, C_OUT)

    # f32 operand path: exact semantics of the PyTorch module.
    out_f32 = jax.block_until_ready(down_forward(x, params, compute_dtype=jnp.float32))
    ref_f32 = down_reference(x, params, compute_dtype=jnp.float32)
    assert out_f32.shape == (N, C_OUT, H // 2, W // 2), out_f32.shape
    assert jnp.allclose(out_f32, ref_f32, atol=1e-3, rtol=1e-3), \
        float(jnp.max(jnp.abs(out_f32 - ref_f32)))

    # bf16 matmul-operand fast path (default; v6e/v7x native MXU dtype).
    # Compared against a reference that casts the conv operands at the same points.
    out_bf16 = jax.block_until_ready(down_forward(x, params))
    ref_bf16 = down_reference(x, params, compute_dtype=jnp.bfloat16)
    assert out_bf16.shape == (N, C_OUT, H // 2, W // 2), out_bf16.shape
    assert jnp.allclose(out_bf16, ref_bf16, atol=2e-3, rtol=2e-3), \
        float(jnp.max(jnp.abs(out_bf16 - ref_bf16)))

    print("KERNEL_OK")
</pallas_src>

<mosaic_0001>
module attributes {stable_mosaic.version = 11 : i64} {
  func.func @down_fused_kernel(%arg0: i32, %arg1: memref<1x4x16x16xf32, #tpu.memory_space<vmem>>, %arg2: memref<8x36xf32, #tpu.memory_space<vmem>>, %arg3: memref<8x1xf32, #tpu.memory_space<vmem>>, %arg4: memref<8x1xf32, #tpu.memory_space<vmem>>, %arg5: memref<8x72xf32, #tpu.memory_space<vmem>>, %arg6: memref<8x1xf32, #tpu.memory_space<vmem>>, %arg7: memref<8x1xf32, #tpu.memory_space<vmem>>, %arg8: memref<1x8x64xf32, #tpu.memory_space<vmem>>) attributes {dimension_semantics = [#tpu.dimension_semantics<parallel>], iteration_bounds = array<i64: 2>, scalar_prefetch = 0 : i64, scratch_operands = 0 : i64, tpu.core_type = #tpu.core_type<tc>, window_params = [{transform_indices = @transform_0, window_bounds = array<i64: 1, 4, 16, 16>}, {pipeline_mode = #tpu.pipeline_mode<synchronous>, transform_indices = @transform_1, window_bounds = array<i64: 8, 36>}, {pipeline_mode = #tpu.pipeline_mode<synchronous>, transform_indices = @transform_2, window_bounds = array<i64: 8, 1>}, {pipeline_mode = #tpu.pipeline_mode<synchronous>, transform_indices = @transform_3, window_bounds = array<i64: 8, 1>}, {pipeline_mode = #tpu.pipeline_mode<synchronous>, transform_indices = @transform_4, window_bounds = array<i64: 8, 72>}, {pipeline_mode = #tpu.pipeline_mode<synchronous>, transform_indices = @transform_5, window_bounds = array<i64: 8, 1>}, {pipeline_mode = #tpu.pipeline_mode<synchronous>, transform_indices = @transform_6, window_bounds = array<i64: 8, 1>}, {transform_indices = @transform_7, window_bounds = array<i64: 1, 8, 64>}]} {
    %c0 = arith.constant 0 : index
    %c0_0 = arith.constant 0 : index
    %c0_1 = arith.constant 0 : index
    %c0_2 = arith.constant 0 : index
    %0 = vector.load %arg1[%c0, %c0_0, %c0_1, %c0_2] : memref<1x4x16x16xf32, #tpu.memory_space<vmem>>, vector<1x4x16x16xf32>
    %1 = vector.shape_cast %0 : vector<1x4x16x16xf32> to vector<4x16x16xf32>
    %2 = vector.shape_cast %1 : vector<4x16x16xf32> to vector<4x8x2x16xf32>
    %cst = arith.constant dense<0xFF800000> : vector<4x8x16xf32>
    %3 = vector.multi_reduction <maximumf>, %2, %cst [2] : vector<4x8x2x16xf32> to vector<4x8x16xf32>
    %4 = vector.shape_cast %3 : vector<4x8x16xf32> to vector<4x8x8x2xf32>
    %cst_3 = arith.constant dense<0xFF800000> : vector<4x8x8xf32>
    %5 = vector.multi_reduction <maximumf>, %4, %cst_3 [3] : vector<4x8x8x2xf32> to vector<4x8x8xf32>
    %cst_4 = arith.constant 0.000000e+00 : f32
    %6 = vector.broadcast %cst_4 : f32 to vector<4x8x1xf32>
    %7 = tpu.concatenate %6, %5, %6 in 2 : vector<4x8x1xf32>, vector<4x8x8xf32>, vector<4x8x1xf32> -> vector<4x8x10xf32>
    %cst_5 = arith.constant 0.000000e+00 : f32
    %8 = vector.broadcast %cst_5 : f32 to vector<4x1x10xf32>
    %9 = tpu.concatenate %8, %7, %8 in 1 : vector<4x1x10xf32>, vector<4x8x10xf32>, vector<4x1x10xf32> -> vector<4x10x10xf32>
    %10 = vector.extract_strided_slice %9 {offsets = [0, 0, 0], sizes = [4, 8, 8], strides = [1, 1, 1]} : vector<4x10x10xf32> to vector<4x8x8xf32>
    %11 = vector.extract_strided_slice %9 {offsets = [0, 0, 1], sizes = [4, 8, 8], strides = [1, 1, 1]} : vector<4x10x10xf32> to vector<4x8x8xf32>
    %12 = vector.extract_strided_slice %9 {offsets = [0, 0, 2], sizes = [4, 8, 8], strides = [1, 1, 1]} : vector<4x10x10xf32> to vector<4x8x8xf32>
    %13 = vector.extract_strided_slice %9 {offsets = [0, 1, 0], sizes = [4, 8, 8], strides = [1, 1, 1]} : vector<4x10x10xf32> to vector<4x8x8xf32>
    %14 = vector.extract_strided_slice %9 {offsets = [0, 1, 1], sizes = [4, 8, 8], strides = [1, 1, 1]} : vector<4x10x10xf32> to vector<4x8x8xf32>
    %15 = vector.extract_strided_slice %9 {offsets = [0, 1, 2], sizes = [4, 8, 8], strides = [1, 1, 1]} : vector<4x10x10xf32> to vector<4x8x8xf32>
    %16 = vector.extract_strided_slice %9 {offsets = [0, 2, 0], sizes = [4, 8, 8], strides = [1, 1, 1]} : vector<4x10x10xf32> to vector<4x8x8xf32>
    %17 = vector.extract_strided_slice %9 {offsets = [0, 2, 1], sizes = [4, 8, 8], strides = [1, 1, 1]} : vector<4x10x10xf32> to vector<4x8x8xf32>
    %18 = vector.extract_strided_slice %9 {offsets = [0, 2, 2], sizes = [4, 8, 8], strides = [1, 1, 1]} : vector<4x10x10xf32> to vector<4x8x8xf32>
    %19 = tpu.concatenate %10, %11, %12, %13, %14, %15, %16, %17, %18 in 0 : vector<4x8x8xf32>, vector<4x8x8xf32>, vector<4x8x8xf32>, vector<4x8x8xf32>, vector<4x8x8xf32>, vector<4x8x8xf32>, vector<4x8x8xf32>, vector<4x8x8xf32>, vector<4x8x8xf32> -> vector<36x8x8xf32>
    %20 = vector.shape_cast %19 : vector<36x8x8xf32> to vector<36x64xf32>
    %c0_6 = arith.constant 0 : index
    %c0_7 = arith.constant 0 : index
    %21 = vector.load %arg2[%c0_6, %c0_7] : memref<8x36xf32, #tpu.memory_space<vmem>>, vector<8x36xf32>
    %cst_8 = arith.constant dense<0.000000e+00> : vector<8x64xf32>
    %22 = tpu.matmul %21, %20, %cst_8 {dimension_numbers = #tpu.dot_dimension_numbers<[1], [0], [0], [1], [0, 0, 1, 1], [], []>} : vector<8x36xf32>, vector<36x64xf32>, vector<8x64xf32> -> vector<8x64xf32>
    %c0_9 = arith.constant 0 : index
    %c0_10 = arith.constant 0 : index
    %23 = vector.load %arg3[%c0_9, %c0_10] : memref<8x1xf32, #tpu.memory_space<vmem>>, vector<8x1xf32>
    %24 = vector.broadcast %23 : vector<8x1xf32> to vector<8x64xf32>
    %25 = arith.mulf %22, %24 : vector<8x64xf32>
    %c0_11 = arith.constant 0 : index
    %c0_12 = arith.constant 0 : index
    %26 = vector.load %arg4[%c0_11, %c0_12] : memref<8x1xf32, #tpu.memory_space<vmem>>, vector<8x1xf32>
    %27 = vector.broadcast %26 : vector<8x1xf32> to vector<8x64xf32>
    %28 = arith.addf %25, %27 : vector<8x64xf32>
    %cst_13 = arith.constant 0.000000e+00 : f32
    %29 = vector.broadcast %cst_13 : f32 to vector<8x64xf32>
    %30 = arith.maximumf %28, %29 : vector<8x64xf32>
    %31 = vector.shape_cast %30 : vector<8x64xf32> to vector<8x8x8xf32>
    %cst_14 = arith.constant 0.000000e+00 : f32
    %32 = vector.broadcast %cst_14 : f32 to vector<8x8x1xf32>
    %33 = tpu.concatenate %32, %31, %32 in 2 : vector<8x8x1xf32>, vector<8x8x8xf32>, vector<8x8x1xf32> -> vector<8x8x10xf32>
    %cst_15 = arith.constant 0.000000e+00 : f32
    %34 = vector.broadcast %cst_15 : f32 to vector<8x1x10xf32>
    %35 = tpu.concatenate %34, %33, %34 in 1 : vector<8x1x10xf32>, vector<8x8x10xf32>, vector<8x1x10xf32> -> vector<8x10x10xf32>
    %36 = vector.extract_strided_slice %35 {offsets = [0, 0, 0], sizes = [8, 8, 8], strides = [1, 1, 1]} : vector<8x10x10xf32> to vector<8x8x8xf32>
    %37 = vector.extract_strided_slice %35 {offsets = [0, 0, 1], sizes = [8, 8, 8], strides = [1, 1, 1]} : vector<8x10x10xf32> to vector<8x8x8xf32>
    %38 = vector.extract_strided_slice %35 {offsets = [0, 0, 2], sizes = [8, 8, 8], strides = [1, 1, 1]} : vector<8x10x10xf32> to vector<8x8x8xf32>
    %39 = vector.extract_strided_slice %35 {offsets = [0, 1, 0], sizes = [8, 8, 8], strides = [1, 1, 1]} : vector<8x10x10xf32> to vector<8x8x8xf32>
    %40 = vector.extract_strided_slice %35 {offsets = [0, 1, 1], sizes = [8, 8, 8], strides = [1, 1, 1]} : vector<8x10x10xf32> to vector<8x8x8xf32>
    %41 = vector.extract_strided_slice %35 {offsets = [0, 1, 2], sizes = [8, 8, 8], strides = [1, 1, 1]} : vector<8x10x10xf32> to vector<8x8x8xf32>
    %42 = vector.extract_strided_slice %35 {offsets = [0, 2, 0], sizes = [8, 8, 8], strides = [1, 1, 1]} : vector<8x10x10xf32> to vector<8x8x8xf32>
    %43 = vector.extract_strided_slice %35 {offsets = [0, 2, 1], sizes = [8, 8, 8], strides = [1, 1, 1]} : vector<8x10x10xf32> to vector<8x8x8xf32>
    %44 = vector.extract_strided_slice %35 {offsets = [0, 2, 2], sizes = [8, 8, 8], strides = [1, 1, 1]} : vector<8x10x10xf32> to vector<8x8x8xf32>
    %45 = tpu.concatenate %36, %37, %38, %39, %40, %41, %42, %43, %44 in 0 : vector<8x8x8xf32>, vector<8x8x8xf32>, vector<8x8x8xf32>, vector<8x8x8xf32>, vector<8x8x8xf32>, vector<8x8x8xf32>, vector<8x8x8xf32>, vector<8x8x8xf32>, vector<8x8x8xf32> -> vector<72x8x8xf32>
    %46 = vector.shape_cast %45 : vector<72x8x8xf32> to vector<72x64xf32>
    %c0_16 = arith.constant 0 : index
    %c0_17 = arith.constant 0 : index
    %47 = vector.load %arg5[%c0_16, %c0_17] : memref<8x72xf32, #tpu.memory_space<vmem>>, vector<8x72xf32>
    %cst_18 = arith.constant dense<0.000000e+00> : vector<8x64xf32>
    %48 = tpu.matmul %47, %46, %cst_18 {dimension_numbers = #tpu.dot_dimension_numbers<[1], [0], [0], [1], [0, 0, 1, 1], [], []>} : vector<8x72xf32>, vector<72x64xf32>, vector<8x64xf32> -> vector<8x64xf32>
    %c0_19 = arith.constant 0 : index
    %c0_20 = arith.constant 0 : index
    %49 = vector.load %arg6[%c0_19, %c0_20] : memref<8x1xf32, #tpu.memory_space<vmem>>, vector<8x1xf32>
    %50 = vector.broadcast %49 : vector<8x1xf32> to vector<8x64xf32>
    %51 = arith.mulf %48, %50 : vector<8x64xf32>
    %c0_21 = arith.constant 0 : index
    %c0_22 = arith.constant 0 : index
    %52 = vector.load %arg7[%c0_21, %c0_22] : memref<8x1xf32, #tpu.memory_space<vmem>>, vector<8x1xf32>
    %53 = vector.broadcast %52 : vector<8x1xf32> to vector<8x64xf32>
    %54 = arith.addf %51, %53 : vector<8x64xf32>
    %cst_23 = arith.constant 0.000000e+00 : f32
    %55 = vector.broadcast %cst_23 : f32 to vector<8x64xf32>
    %56 = arith.maximumf %54, %55 : vector<8x64xf32>
    %c0_24 = arith.constant 0 : index
    %c0_25 = arith.constant 0 : index
    %c0_26 = arith.constant 0 : index
    %57 = vector.load %arg8[%c0_24, %c0_25, %c0_26] : memref<1x8x64xf32, #tpu.memory_space<vmem>>, vector<1x8x64xf32>
    %58 = vector.shape_cast %57 : vector<1x8x64xf32> to vector<8x64xf32>
    %59 = vector.shape_cast %56 : vector<8x64xf32> to vector<1x8x64xf32>
    tpu.vector_store %arg8[%c0_24, %c0_25, %c0_26], %59 {strides = array<i32>} : memref<1x8x64xf32, #tpu.memory_space<vmem>>, vector<1x8x64xf32>,
    return
  }
  func.func @transform_0(%arg0: i32) -> (i32, i32, i32, i32) {
    %c0_i32 = arith.constant 0 : i32
    %c0_i32_0 = arith.constant 0 : i32
    %c0_i32_1 = arith.constant 0 : i32
    %c0_i32_2 = arith.constant 0 : i32
    return %arg0, %c0_i32, %c0_i32_0, %c0_i32_1 : i32, i32, i32, i32
  }
  func.func @transform_1(%arg0: i32) -> (i32, i32) {
    %c0_i32 = arith.constant 0 : i32
    %c0_i32_0 = arith.constant 0 : i32
    %c0_i32_1 = arith.constant 0 : i32
    return %c0_i32, %c0_i32_0 : i32, i32
  }
  func.func @transform_2(%arg0: i32) -> (i32, i32) {
    %c0_i32 = arith.constant 0 : i32
    %c0_i32_0 = arith.constant 0 : i32
    %c0_i32_1 = arith.constant 0 : i32
    return %c0_i32, %c0_i32_0 : i32, i32
  }
  func.func @transform_3(%arg0: i32) -> (i32, i32) {
    %c0_i32 = arith.constant 0 : i32
    %c0_i32_0 = arith.constant 0 : i32
    %c0_i32_1 = arith.constant 0 : i32
    return %c0_i32, %c0_i32_0 : i32, i32
  }
  func.func @transform_4(%arg0: i32) -> (i32, i32) {
    %c0_i32 = arith.constant 0 : i32
    %c0_i32_0 = arith.constant 0 : i32
    %c0_i32_1 = arith.constant 0 : i32
    return %c0_i32, %c0_i32_0 : i32, i32
  }
  func.func @transform_5(%arg0: i32) -> (i32, i32) {
    %c0_i32 = arith.constant 0 : i32
    %c0_i32_0 = arith.constant 0 : i32
    %c0_i32_1 = arith.constant 0 : i32
    return %c0_i32, %c0_i32_0 : i32, i32
  }
  func.func @transform_6(%arg0: i32) -> (i32, i32) {
    %c0_i32 = arith.constant 0 : i32
    %c0_i32_0 = arith.constant 0 : i32
    %c0_i32_1 = arith.constant 0 : i32
    return %c0_i32, %c0_i32_0 : i32, i32
  }
  func.func @transform_7(%arg0: i32) -> (i32, i32, i32) {
    %c0_i32 = arith.constant 0 : i32
    %c0_i32_0 = arith.constant 0 : i32
    %c0_i32_1 = arith.constant 0 : i32
    return %arg0, %c0_i32, %c0_i32_0 : i32, i32, i32
  }
}

</mosaic_0001>

<llo_original>
// kernel: down_forward.1
$region0: #{down_forward.1}
  #allocation0 [shape = 'u32[]', space=smem, size = 0x4, offset = 0x4, fixed_abs, tag = 'smem constant byte address 0x4 - core index']
  #allocation1 [shape = 'u32[72,128]{1,0:T(1,128)}', space=vmem, size = 0x9000, scoped, tag = 'internal scratch']
  %s0 = inlined_call_operand.vmem [shape: f32[2,4,16,16], index: 0, kind: input, shape index: {}]
  %s1 = inlined_call_operand.vmem [shape: f32[8,36], index: 1, kind: input, shape index: {}]
  %s2 = inlined_call_operand.vmem [shape: f32[8,1], index: 2, kind: input, shape index: {}]
  %s3 = inlined_call_operand.vmem [shape: f32[8,1], index: 3, kind: input, shape index: {}]
  %s4 = inlined_call_operand.vmem [shape: f32[8,72], index: 4, kind: input, shape index: {}]
  %s5 = inlined_call_operand.vmem [shape: f32[8,1], index: 5, kind: input, shape index: {}]
  %s6 = inlined_call_operand.vmem [shape: f32[8,1], index: 6, kind: input, shape index: {}]
  %s7 = inlined_call_operand.vmem [shape: f32[2,8,64], index: 7, kind: output, shape index: {}]
  %s8 = sld [smem:[#allocation0]]
  $region61: #{down_forward.1} parent=0
    _
  %s10 = ssub.s32 1, %s8
  %s11 = scalar_select 0, %s10, %s8
  loop: start=0, step=1, limit=4
  $region2: #{down_forward.1} parent=0 // loop_pre_header
    _
  $region3: #{down_forward.1} parent=0 // loop_header
    %s13 = sphi 0, %s17
    %p14 = scmp.ge.s32.totalorder %s13, 4
    %s23 = sphi 0, %s25
    %s26 = sphi 0, %s23
    %s27 = sphi 0, %s26
    %s43 = sphi 0, %s27
    %s47 = sphi 0, %s47
    %s49 = sphi 0, %s47
    %s50 = sphi 0, %s49
    %s64 = sphi 0, %s50
    %s68 = sphi 0, %s68
    %s70 = sphi 0, %s68
    %s71 = sphi 0, %s70
    %s85 = sphi 0, %s71
    %s89 = sphi 0, %s89
    %s91 = sphi 0, %s89
    %s92 = sphi 0, %s91
    %s106 = sphi 0, %s92
    %s110 = sphi 0, %s110
    %s112 = sphi 0, %s110
    %s113 = sphi 0, %s112
    %s127 = sphi 0, %s113
    %s131 = sphi 0, %s131
    %s133 = sphi 0, %s131
    %s134 = sphi 0, %s133
    %s148 = sphi 0, %s134
    %s152 = sphi 0, %s152
    %s154 = sphi 0, %s152
    %s155 = sphi 0, %s154
    %s169 = sphi 0, %s155
    %s175 = sphi 0, %s177
    %s178 = sphi 0, %s175
    %s179 = sphi 0, %s178
    %s195 = sphi 0, %s179
  $region4: #{down_forward.1} parent=0 // loop_header_branch
    %16 = sbr.rel (%p14) target = $region8
  $region5: #{down_forward.1} parent=0 // loop_body
    %s18 = ssub.s32 %s13, 1
    %s19 = ssub.s32 %s13, 2
    %s20 = sadd.s32 %s13, 1
    %s21 = ssub.s32 %s13, %s20
    %p22 = scmp.eq.s32.totalorder %s21, 0
    %s24 = sadd.s32 %s23, 1
    %s25 = scalar_select %p22, %s23, %s24
    %p28 = pneg %p22
    %p29 = scmp.eq.s32.totalorder %s13, 1
    %p30 = por %p28, %p29
    %p31 = scmp.ne.s32.totalorder %s23, %s26
    %p32 = scmp.eq.s32.totalorder %s13, 0
    %p33 = por %p31, %p32
    %p34 = scmp.ne.s32.totalorder %s23, %s26
    %p35 = scmp.eq.s32.totalorder %s18, 1
    %p36 = por %p34, %p35
    %p37 = scmp.ne.s32.totalorder %s26, %s27
    %p38 = scmp.eq.s32.totalorder %s18, 0
    %p39 = por %p37, %p38
    %p40 = scmp.ne.s32.totalorder %s26, %s27
    %p41 = scmp.eq.s32.totalorder %s19, 1
    %p42 = por %p40, %p41
    %p44 = scmp.ne.s32.totalorder %s27, %s43
    %p45 = scmp.eq.s32.totalorder %s19, 0
    %p46 = por %p44, %p45
    %s48 = sadd.s32 %s47, 1
    %p51 = scmp.eq.s32.totalorder %s13, 1
    %p52 = scmp.ne.s32.totalorder %s47, %s49
    %p53 = scmp.eq.s32.totalorder %s13, 0
    %p54 = por %p52, %p53
    %p55 = scmp.ne.s32.totalorder %s47, %s49
    %p56 = scmp.eq.s32.totalorder %s18, 1
    %p57 = por %p55, %p56
    %p58 = scmp.ne.s32.totalorder %s49, %s50
    %p59 = scmp.eq.s32.totalorder %s18, 0
    %p60 = por %p58, %p59
    %p61 = scmp.ne.s32.totalorder %s49, %s50
    %p62 = scmp.eq.s32.totalorder %s19, 1
    %p63 = por %p61, %p62
    %p65 = scmp.ne.s32.totalorder %s50, %s64
    %p66 = scmp.eq.s32.totalorder %s19, 0
    %p67 = por %p65, %p66
    %s69 = sadd.s32 %s68, 1
    %p72 = scmp.eq.s32.totalorder %s13, 1
    %p73 = scmp.ne.s32.totalorder %s68, %s70
    %p74 = scmp.eq.s32.totalorder %s13, 0
    %p75 = por %p73, %p74
    %p76 = scmp.ne.s32.totalorder %s68, %s70
    %p77 = scmp.eq.s32.totalorder %s18, 1
    %p78 = por %p76, %p77
    %p79 = scmp.ne.s32.totalorder %s70, %s71
    %p80 = scmp.eq.s32.totalorder %s18, 0
    %p81 = por %p79, %p80
    %p82 = scmp.ne.s32.totalorder %s70, %s71
    %p83 = scmp.eq.s32.totalorder %s19, 1
    %p84 = por %p82, %p83
    %p86 = scmp.ne.s32.totalorder %s71, %s85
    %p87 = scmp.eq.s32.totalorder %s19, 0
    %p88 = por %p86, %p87
    %s90 = sadd.s32 %s89, 1
    %p93 = scmp.eq.s32.totalorder %s13, 1
    %p94 = scmp.ne.s32.totalorder %s89, %s91
    %p95 = scmp.eq.s32.totalorder %s13, 0
    %p96 = por %p94, %p95
    %p97 = scmp.ne.s32.totalorder %s89, %s91
    %p98 = scmp.eq.s32.totalorder %s18, 1
    %p99 = por %p97, %p98
    %p100 = scmp.ne.s32.totalorder %s91, %s92
    %p101 = scmp.eq.s32.totalorder %s18, 0
    %p102 = por %p100, %p101
    %p103 = scmp.ne.s32.totalorder %s91, %s92
    %p104 = scmp.eq.s32.totalorder %s19, 1
    %p105 = por %p103, %p104
    %p107 = scmp.ne.s32.totalorder %s92, %s106
    %p108 = scmp.eq.s32.totalorder %s19, 0
    %p109 = por %p107, %p108
    %s111 = sadd.s32 %s110, 1
    %p114 = scmp.eq.s32.totalorder %s13, 1
    %p115 = scmp.ne.s32.totalorder %s110, %s112
    %p116 = scmp.eq.s32.totalorder %s13, 0
    %p117 = por %p115, %p116
    %p118 = scmp.ne.s32.totalorder %s110, %s112
    %p119 = scmp.eq.s32.totalorder %s18, 1
    %p120 = por %p118, %p119
    %p121 = scmp.ne.s32.totalorder %s112, %s113
    %p122 = scmp.eq.s32.totalorder %s18, 0
    %p123 = por %p121, %p122
    %p124 = scmp.ne.s32.totalorder %s112, %s113
    %p125 = scmp.eq.s32.totalorder %s19, 1
    %p126 = por %p124, %p125
    %p128 = scmp.ne.s32.totalorder %s113, %s127
    %p129 = scmp.eq.s32.totalorder %s19, 0
    %p130 = por %p128, %p129
    %s132 = sadd.s32 %s131, 1
    %p135 = scmp.eq.s32.totalorder %s13, 1
    %p136 = scmp.ne.s32.totalorder %s131, %s133
    %p137 = scmp.eq.s32.totalorder %s13, 0
    %p138 = por %p136, %p137
    %p139 = scmp.ne.s32.totalorder %s131, %s133
    %p140 = scmp.eq.s32.totalorder %s18, 1
    %p141 = por %p139, %p140
    %p142 = scmp.ne.s32.totalorder %s133, %s134
    %p143 = scmp.eq.s32.totalorder %s18, 0
    %p144 = por %p142, %p143
    %p145 = scmp.ne.s32.totalorder %s133, %s134
    %p146 = scmp.eq.s32.totalorder %s19, 1
    %p147 = por %p145, %p146
    %p149 = scmp.ne.s32.totalorder %s134, %s148
    %p150 = scmp.eq.s32.totalorder %s19, 0
    %p151 = por %p149, %p150
    %s153 = sadd.s32 %s152, 1
    %p156 = scmp.eq.s32.totalorder %s13, 1
    %p157 = scmp.ne.s32.totalorder %s152, %s154
    %p158 = scmp.eq.s32.totalorder %s13, 0
    %p159 = por %p157, %p158
    %p160 = scmp.ne.s32.totalorder %s152, %s154
    %p161 = scmp.eq.s32.totalorder %s18, 1
    %p162 = por %p160, %p161
    %p163 = scmp.ne.s32.totalorder %s154, %s155
    %p164 = scmp.eq.s32.totalorder %s18, 0
    %p165 = por %p163, %p164
    %p166 = scmp.ne.s32.totalorder %s154, %s155
    %p167 = scmp.eq.s32.totalorder %s19, 1
    %p168 = por %p166, %p167
    %p170 = scmp.ne.s32.totalorder %s155, %s169
    %p171 = scmp.eq.s32.totalorder %s19, 0
    %p172 = por %p170, %p171
    %s173 = ssub.s32 %s13, %s20
    %p174 = scmp.eq.s32.totalorder %s173, 0
    %s176 = sadd.s32 %s175, 1
    %s177 = scalar_select %p174, %s175, %s176
    %p180 = pneg %p174
    %p181 = scmp.eq.s32.totalorder %s13, 1
    %p182 = por %p180, %p181
    %p183 = scmp.ne.s32.totalorder %s175, %s178
    %p184 = scmp.eq.s32.totalorder %s13, 0
    %p185 = por %p183, %p184
    %p186 = scmp.ne.s32.totalorder %s175, %s178
    %p187 = scmp.eq.s32.totalorder %s18, 1
    %p188 = por %p186, %p187
    %p189 = scmp.ne.s32.totalorder %s178, %s179
    %p190 = scmp.eq.s32.totalorder %s18, 0
    %p191 = por %p189, %p190
    %p192 = scmp.ne.s32.totalorder %s178, %s179
    %p193 = scmp.eq.s32.totalorder %s19, 1
    %p194 = por %p192, %p193
    %p196 = scmp.ne.s32.totalorder %s179, %s195
    %p197 = scmp.eq.s32.totalorder %s19, 0
    %p198 = por %p196, %p197
    %p199 = scmp.le.s32.totalorder 1, %s13
    %p200 = scmp.lt.s32.totalorder %s13, 3
    %p201 = pnand %p199, %p200
    %p202 = pneg %p201
    // Predicated region
    $region9: #{down_forward.1} parent=5 // pred_check
      _
    $region10: #{down_forward.1} parent=5 // pred_check_branch
      %204 = sbr.rel (%p201) target = $region12
    $region11: #{down_forward.1} parent=5 // pred_region
      %s205 = ssub.s32 %s13, 1
      // Predicated region
      $region13: #{down_forward.1} parent=11 // pred_check
        %p206 = pneg %p60
      $region14: #{down_forward.1} parent=11 // pred_check_branch
        %208 = sbr.rel (%p206) target = $region16
      $region15: #{down_forward.1} parent=11 // pred_region
        _
      $region16: #{down_forward.1} parent=11 // pred_fallthru
        _
      // Predicated region
      $region17: #{down_forward.1} parent=11 // pred_check
        %p209 = pneg %p81
      $region18: #{down_forward.1} parent=11 // pred_check_branch
        %211 = sbr.rel (%p209) target = $region20
      $region19: #{down_forward.1} parent=11 // pred_region
        _
      $region20: #{down_forward.1} parent=11 // pred_fallthru
        _
      // Predicated region
      $region21: #{down_forward.1} parent=11 // pred_check
        %p212 = pneg %p102
      $region22: #{down_forward.1} parent=11 // pred_check_branch
        %214 = sbr.rel (%p212) target = $region24
      $region23: #{down_forward.1} parent=11 // pred_region
        _
      $region24: #{down_forward.1} parent=11 // pred_fallthru
        _
      // Predicated region
      $region25: #{down_forward.1} parent=11 // pred_check
        %p215 = pneg %p123
      $region26: #{down_forward.1} parent=11 // pred_check_branch
        %217 = sbr.rel (%p215) target = $region28
      $region27: #{down_forward.1} parent=11 // pred_region
        _
      $region28: #{down_forward.1} parent=11 // pred_fallthru
        _
      // Predicated region
      $region29: #{down_forward.1} parent=11 // pred_check
        %p218 = pneg %p144
      $region30: #{down_forward.1} parent=11 // pred_check_branch
        %220 = sbr.rel (%p218) target = $region32
      $region31: #{down_forward.1} parent=11 // pred_region
        _
      $region32: #{down_forward.1} parent=11 // pred_fallthru
        _
      // Predicated region
      $region33: #{down_forward.1} parent=11 // pred_check
        %p221 = pneg %p165
      $region34: #{down_forward.1} parent=11 // pred_check_branch
        %223 = sbr.rel (%p221) target = $region36
      $region35: #{down_forward.1} parent=11 // pred_region
        _
      $region36: #{down_forward.1} parent=11 // pred_fallthru
        _
    $region12: #{down_forward.1} parent=5 // pred_fallthru
      _
    %p224 = scmp.lt.s32.totalorder %s13, 2
    // Predicated region
    $region37: #{down_forward.1} parent=5 // pred_check
      %p225 = pneg %p224
    $region38: #{down_forward.1} parent=5 // pred_check_branch
      %227 = sbr.rel (%p225) target = $region40
    $region39: #{down_forward.1} parent=5 // pred_region
      // Predicated region
      $region41: #{down_forward.1} parent=39 // pred_check
        %p228 = pneg %p33
      $region42: #{down_forward.1} parent=39 // pred_check_branch
        %230 = sbr.rel (%p228) target = $region44
      $region43: #{down_forward.1} parent=39 // pred_region
        %p231 = scmp.lt.s32.totalorder %s13, 1
        %s232 = scalar_select %p231, %s13, 1
        %s233 = smul.addr %s232, 8
        %s234 = smul.addr %s233, 8
        %s235 = scalar_lea.vmem %s0, %s234
      $region44: #{down_forward.1} parent=39 // pred_fallthru
        _
    $region40: #{down_forward.1} parent=5 // pred_fallthru
      _
    %p236 = scmp.le.s32.totalorder 1, %s13
    %p237 = scmp.lt.s32.totalorder %s13, 3
    %p238 = pnand %p236, %p237
    %p239 = pneg %p238
    // Predicated region
    $region45: #{down_forward.1} parent=5 // pred_check
      _
    $region46: #{down_forward.1} parent=5 // pred_check_branch
      %241 = sbr.rel (%p238) target = $region48
    $region47: #{down_forward.1} parent=5 // pred_region
      %s242 = ssub.s32 %s13, 1
      %p243 = scmp.lt.s32.totalorder %s18, 1
      %s244 = scalar_select %p243, %s18, 1
      %s245 = smul.addr %s244, 8
      %s246 = smul.addr %s245, 8
      %s247 = scalar_lea.vmem %s0, %s246
      %p248 = pneg %p39
      %p249 = pneg %p36
      %p250 = pneg %p60
      %p251 = pneg %p57
      %p252 = pneg %p81
      %p253 = pneg %p78
      %p254 = pneg %p102
      %p255 = pneg %p99
      %p256 = pneg %p123
      %p257 = pneg %p120
      %p258 = pneg %p144
      %p259 = pneg %p141
      %p260 = pneg %p165
      %p261 = pneg %p162
      %p262 = pneg %p191
      %p263 = pneg %p188
      %p264 = scmp.lt.s32.totalorder %s18, 1
      %s265 = scalar_select %p264, %s18, 1
      %s266 = smul.addr %s265, 8
      %s267 = scalar_lea.vmem %s7, %s266
      %p268 = scmp.lt.s32.totalorder %s18, 1
      %s269 = scalar_select %p268, %s18, 1
      %s270 = smul.addr %s269, 8
      %s271 = smul.addr %s270, 8
      %s272 = scalar_lea.vmem %s0, %s271
      %p273 = scmp.lt.s32.totalorder %s18, 1
      %s274 = scalar_select %p273, %s18, 1
      %s275 = smul.addr %s274, 8
      %s276 = scalar_lea.vmem %s7, %s275
      %v277 = vld [vmem:[%s272] sm:$0xff]
      %v278 = vld [vmem:[%s272 + $0x8] sm:$0xff]
      %v279 = vld [vmem:[%s272 + $0x10] sm:$0xff]
      %v280 = vld [vmem:[%s272 + $0x18] sm:$0xff]
      %v281 = vld [vmem:[%s272 + $0x20] sm:$0xff]
      %v282 = vld [vmem:[%s272 + $0x28] sm:$0xff]
      %v283 = vld [vmem:[%s272 + $0x30] sm:$0xff]
      %v284 = vld [vmem:[%s272 + $0x38] sm:$0xff]
      %v293 = vrot.slane %v277, 2
      %v294 = vrot.slane %v277, 4
      %v295 = vrot.slane %v277, 6
      %v296 = vrot.slane %v278, 2
      %v297 = vrot.slane %v278, 4
      %v298 = vrot.slane %v278, 6
      %v299 = vrot.slane %v279, 2
      %v300 = vrot.slane %v279, 4
      %v301 = vrot.slane %v279, 6
      %v302 = vrot.slane %v280, 2
      %v303 = vrot.slane %v280, 4
      %v304 = vrot.slane %v280, 6
      %v305 = vrot.slane %v281, 2
      %v306 = vrot.slane %v281, 4
      %v307 = vrot.slane %v281, 6
      %v308 = vrot.slane %v282, 2
      %v309 = vrot.slane %v282, 4
      %v310 = vrot.slane %v282, 6
      %v311 = vrot.slane %v283, 2
      %v312 = vrot.slane %v283, 4
      %v313 = vrot.slane %v283, 6
      %v314 = vrot.slane %v284, 2
      %v315 = vrot.slane %v284, 4
      %v316 = vrot.slane %v284, 6
      %vm341 = vcmask 123904
      %v342 = vsel %vm341, %v277, -inf
      %v343 = vrot.slane %v342, 4
      %v344 = vmax.f32 %v342, %v343
      %v345 = vrot.slane %v344, 2
      %v346 = vmax.f32 %v344, %v345
      %v347 = vrot.slane %v346, 1
      %v348 = vmax.f32 %v346, %v347
      %v349 = vsel %vm341, %v293, -inf
      %v350 = vrot.slane %v349, 4
      %v351 = vmax.f32 %v349, %v350
      %v352 = vrot.slane %v351, 2
      %v353 = vmax.f32 %v351, %v352
      %v354 = vrot.slane %v353, 1
      %v355 = vmax.f32 %v353, %v354
      %v356 = vsel %vm341, %v294, -inf
      %v357 = vrot.slane %v356, 4
      %v358 = vmax.f32 %v356, %v357
      %v359 = vrot.slane %v358, 2
      %v360 = vmax.f32 %v358, %v359
      %v361 = vrot.slane %v360, 1
      %v362 = vmax.f32 %v360, %v361
      %v363 = vsel %vm341, %v295, -inf
      %v364 = vrot.slane %v363, 4
      %v365 = vmax.f32 %v363, %v364
      %v366 = vrot.slane %v365, 2
      %v367 = vmax.f32 %v365, %v366
      %v368 = vrot.slane %v367, 1
      %v369 = vmax.f32 %v367, %v368
      %v370 = vsel %vm341, %v278, -inf
      %v371 = vrot.slane %v370, 4
      %v372 = vmax.f32 %v370, %v371
      %v373 = vrot.slane %v372, 2
      %v374 = vmax.f32 %v372, %v373
      %v375 = vrot.slane %v374, 1
      %v376 = vmax.f32 %v374, %v375
      %v377 = vsel %vm341, %v296, -inf
      %v378 = vrot.slane %v377, 4
      %v379 = vmax.f32 %v377, %v378
      %v380 = vrot.slane %v379, 2
      %v381 = vmax.f32 %v379, %v380
      %v382 = vrot.slane %v381, 1
      %v383 = vmax.f32 %v381, %v382
      %v384 = vsel %vm341, %v297, -inf
      %v385 = vrot.slane %v384, 4
      %v386 = vmax.f32 %v384, %v385
      %v387 = vrot.slane %v386, 2
      %v388 = vmax.f32 %v386, %v387
      %v389 = vrot.slane %v388, 1
      %v390 = vmax.f32 %v388, %v389
      %v391 = vsel %vm341, %v298, -inf
      %v392 = vrot.slane %v391, 4
      %v393 = vmax.f32 %v391, %v392
      %v394 = vrot.slane %v393, 2
      %v395 = vmax.f32 %v393, %v394
      %v396 = vrot.slane %v395, 1
      %v397 = vmax.f32 %v395, %v396
      %v398 = vsel %vm341, %v279, -inf
      %v399 = vrot.slane %v398, 4
      %v400 = vmax.f32 %v398, %v399
      %v401 = vrot.slane %v400, 2
      %v402 = vmax.f32 %v400, %v401
      %v403 = vrot.slane %v402, 1
      %v404 = vmax.f32 %v402, %v403
      %v405 = vsel %vm341, %v299, -inf
      %v406 = vrot.slane %v405, 4
      %v407 = vmax.f32 %v405, %v406
      %v408 = vrot.slane %v407, 2
      %v409 = vmax.f32 %v407, %v408
      %v410 = vrot.slane %v409, 1
      %v411 = vmax.f32 %v409, %v410
      %v412 = vsel %vm341, %v300, -inf
      %v413 = vrot.slane %v412, 4
      %v414 = vmax.f32 %v412, %v413
      %v415 = vrot.slane %v414, 2
      %v416 = vmax.f32 %v414, %v415
      %v417 = vrot.slane %v416, 1
      %v418 = vmax.f32 %v416, %v417
      %v419 = vsel %vm341, %v301, -inf
      %v420 = vrot.slane %v419, 4
      %v421 = vmax.f32 %v419, %v420
      %v422 = vrot.slane %v421, 2
      %v423 = vmax.f32 %v421, %v422
      %v424 = vrot.slane %v423, 1
      %v425 = vmax.f32 %v423, %v424
      %v426 = vsel %vm341, %v280, -inf
      %v427 = vrot.slane %v426, 4
      %v428 = vmax.f32 %v426, %v427
      %v429 = vrot.slane %v428, 2
      %v430 = vmax.f32 %v428, %v429
      %v431 = vrot.slane %v430, 1
      %v432 = vmax.f32 %v430, %v431
      %v433 = vsel %vm341, %v302, -inf
      %v434 = vrot.slane %v433, 4
      %v435 = vmax.f32 %v433, %v434
      %v436 = vrot.slane %v435, 2
      %v437 = vmax.f32 %v435, %v436
      %v438 = vrot.slane %v437, 1
      %v439 = vmax.f32 %v437, %v438
      %v440 = vsel %vm341, %v303, -inf
      %v441 = vrot.slane %v440, 4
      %v442 = vmax.f32 %v440, %v441
      %v443 = vrot.slane %v442, 2
      %v444 = vmax.f32 %v442, %v443
      %v445 = vrot.slane %v444, 1
      %v446 = vmax.f32 %v444, %v445
      %v447 = vsel %vm341, %v304, -inf
      %v448 = vrot.slane %v447, 4
      %v449 = vmax.f32 %v447, %v448
      %v450 = vrot.slane %v449, 2
      %v451 = vmax.f32 %v449, %v450
      %v452 = vrot.slane %v451, 1
      %v453 = vmax.f32 %v451, %v452
      %v454 = vsel %vm341, %v281, -inf
      %v455 = vrot.slane %v454, 4
      %v456 = vmax.f32 %v454, %v455
      %v457 = vrot.slane %v456, 2
      %v458 = vmax.f32 %v456, %v457
      %v459 = vrot.slane %v458, 1
      %v460 = vmax.f32 %v458, %v459
      %v461 = vsel %vm341, %v305, -inf
      %v462 = vrot.slane %v461, 4
      %v463 = vmax.f32 %v461, %v462
      %v464 = vrot.slane %v463, 2
      %v465 = vmax.f32 %v463, %v464
      %v466 = vrot.slane %v465, 1
      %v467 = vmax.f32 %v465, %v466
      %v468 = vsel %vm341, %v306, -inf
      %v469 = vrot.slane %v468, 4
      %v470 = vmax.f32 %v468, %v469
      %v471 = vrot.slane %v470, 2
      %v472 = vmax.f32 %v470, %v471
      %v473 = vrot.slane %v472, 1
      %v474 = vmax.f32 %v472, %v473
      %v475 = vsel %vm341, %v307, -inf
      %v476 = vrot.slane %v475, 4
      %v477 = vmax.f32 %v475, %v476
      %v478 = vrot.slane %v477, 2
      %v479 = vmax.f32 %v477, %v478
      %v480 = vrot.slane %v479, 1
      %v481 = vmax.f32 %v479, %v480
      %v482 = vsel %vm341, %v282, -inf
      %v483 = vrot.slane %v482, 4
      %v484 = vmax.f32 %v482, %v483
      %v485 = vrot.slane %v484, 2
      %v486 = vmax.f32 %v484, %v485
      %v487 = vrot.slane %v486, 1
      %v488 = vmax.f32 %v486, %v487
      %v489 = vsel %vm341, %v308, -inf
      %v490 = vrot.slane %v489, 4
      %v491 = vmax.f32 %v489, %v490
      %v492 = vrot.slane %v491, 2
      %v493 = vmax.f32 %v491, %v492
      %v494 = vrot.slane %v493, 1
      %v495 = vmax.f32 %v493, %v494
      %v496 = vsel %vm341, %v309, -inf
      %v497 = vrot.slane %v496, 4
      %v498 = vmax.f32 %v496, %v497
      %v499 = vrot.slane %v498, 2
      %v500 = vmax.f32 %v498, %v499
      %v501 = vrot.slane %v500, 1
      %v502 = vmax.f32 %v500, %v501
      %v503 = vsel %vm341, %v310, -inf
      %v504 = vrot.slane %v503, 4
      %v505 = vmax.f32 %v503, %v504
      %v506 = vrot.slane %v505, 2
      %v507 = vmax.f32 %v505, %v506
      %v508 = vrot.slane %v507, 1
      %v509 = vmax.f32 %v507, %v508
      %v510 = vsel %vm341, %v283, -inf
      %v511 = vrot.slane %v510, 4
      %v512 = vmax.f32 %v510, %v511
      %v513 = vrot.slane %v512, 2
      %v514 = vmax.f32 %v512, %v513
      %v515 = vrot.slane %v514, 1
      %v516 = vmax.f32 %v514, %v515
      %v517 = vsel %vm341, %v311, -inf
      %v518 = vrot.slane %v517, 4
      %v519 = vmax.f32 %v517, %v518
      %v520 = vrot.slane %v519, 2
      %v521 = vmax.f32 %v519, %v520
      %v522 = vrot.slane %v521, 1
      %v523 = vmax.f32 %v521, %v522
      %v524 = vsel %vm341, %v312, -inf
      %v525 = vrot.slane %v524, 4
      %v526 = vmax.f32 %v524, %v525
      %v527 = vrot.slane %v526, 2
      %v528 = vmax.f32 %v526, %v527
      %v529 = vrot.slane %v528, 1
      %v530 = vmax.f32 %v528, %v529
      %v531 = vsel %vm341, %v313, -inf
      %v532 = vrot.slane %v531, 4
      %v533 = vmax.f32 %v531, %v532
      %v534 = vrot.slane %v533, 2
      %v535 = vmax.f32 %v533, %v534
      %v536 = vrot.slane %v535, 1
      %v537 = vmax.f32 %v535, %v536
      %v538 = vsel %vm341, %v284, -inf
      %v539 = vrot.slane %v538, 4
      %v540 = vmax.f32 %v538, %v539
      %v541 = vrot.slane %v540, 2
      %v542 = vmax.f32 %v540, %v541
      %v543 = vrot.slane %v542, 1
      %v544 = vmax.f32 %v542, %v543
      %v545 = vsel %vm341, %v314, -inf
      %v546 = vrot.slane %v545, 4
      %v547 = vmax.f32 %v545, %v546
      %v548 = vrot.slane %v547, 2
      %v549 = vmax.f32 %v547, %v548
      %v550 = vrot.slane %v549, 1
      %v551 = vmax.f32 %v549, %v550
      %v552 = vsel %vm341, %v315, -inf
      %v553 = vrot.slane %v552, 4
      %v554 = vmax.f32 %v552, %v553
      %v555 = vrot.slane %v554, 2
      %v556 = vmax.f32 %v554, %v555
      %v557 = vrot.slane %v556, 1
      %v558 = vmax.f32 %v556, %v557
      %v559 = vsel %vm341, %v316, -inf
      %v560 = vrot.slane %v559, 4
      %v561 = vmax.f32 %v559, %v560
      %v562 = vrot.slane %v561, 2
      %v563 = vmax.f32 %v561, %v562
      %v564 = vrot.slane %v563, 1
      %v565 = vmax.f32 %v563, %v564
      %598 = vrot.lane.b32.xlu0 %v348, 126
      %v599 = vpop.permute.xlu0 %598
      %600 = vrot.lane.b32.xlu0 %v355, 126
      %v601 = vpop.permute.xlu0 %600
      %602 = vrot.lane.b32.xlu0 %v362, 126
      %v603 = vpop.permute.xlu0 %602
      %604 = vrot.lane.b32.xlu0 %v369, 126
      %v605 = vpop.permute.xlu0 %604
      %606 = vrot.lane.b32.xlu0 %v376, 126
      %v607 = vpop.permute.xlu0 %606
      %608 = vrot.lane.b32.xlu0 %v383, 126
      %v609 = vpop.permute.xlu0 %608
      %610 = vrot.lane.b32.xlu0 %v390, 126
      %v611 = vpop.permute.xlu0 %610
      %612 = vrot.lane.b32.xlu0 %v397, 126
      %v613 = vpop.permute.xlu0 %612
      %614 = vrot.lane.b32.xlu0 %v404, 126
      %v615 = vpop.permute.xlu0 %614
      %616 = vrot.lane.b32.xlu0 %v411, 126
      %v617 = vpop.permute.xlu0 %616
      %618 = vrot.lane.b32.xlu0 %v418, 126
      %v619 = vpop.permute.xlu0 %618
      %620 = vrot.lane.b32.xlu0 %v425, 126
      %v621 = vpop.permute.xlu0 %620
      %622 = vrot.lane.b32.xlu0 %v432, 126
      %v623 = vpop.permute.xlu0 %622
      %624 = vrot.lane.b32.xlu0 %v439, 126
      %v625 = vpop.permute.xlu0 %624
      %626 = vrot.lane.b32.xlu0 %v446, 126
      %v627 = vpop.permute.xlu0 %626
      %628 = vrot.lane.b32.xlu0 %v453, 126
      %v629 = vpop.permute.xlu0 %628
      %630 = vrot.lane.b32.xlu0 %v460, 126
      %v631 = vpop.permute.xlu0 %630
      %632 = vrot.lane.b32.xlu0 %v467, 126
      %v633 = vpop.permute.xlu0 %632
      %634 = vrot.lane.b32.xlu0 %v474, 126
      %v635 = vpop.permute.xlu0 %634
      %636 = vrot.lane.b32.xlu0 %v481, 126
      %v637 = vpop.permute.xlu0 %636
      %638 = vrot.lane.b32.xlu0 %v488, 126
      %v639 = vpop.permute.xlu0 %638
      %640 = vrot.lane.b32.xlu0 %v495, 126
      %v641 = vpop.permute.xlu0 %640
      %642 = vrot.lane.b32.xlu0 %v502, 126
      %v643 = vpop.permute.xlu0 %642
      %644 = vrot.lane.b32.xlu0 %v509, 126
      %v645 = vpop.permute.xlu0 %644
      %646 = vrot.lane.b32.xlu0 %v516, 126
      %v647 = vpop.permute.xlu0 %646
      %648 = vrot.lane.b32.xlu0 %v523, 126
      %v649 = vpop.permute.xlu0 %648
      %650 = vrot.lane.b32.xlu0 %v530, 126
      %v651 = vpop.permute.xlu0 %650
      %652 = vrot.lane.b32.xlu0 %v537, 126
      %v653 = vpop.permute.xlu0 %652
      %654 = vrot.lane.b32.xlu0 %v544, 126
      %v655 = vpop.permute.xlu0 %654
      %656 = vrot.lane.b32.xlu0 %v551, 126
      %v657 = vpop.permute.xlu0 %656
      %658 = vrot.lane.b32.xlu0 %v558, 126
      %v659 = vpop.permute.xlu0 %658
      %660 = vrot.lane.b32.xlu0 %v565, 126
      %v661 = vpop.permute.xlu0 %660
      %662 = vrot.lane.b32.xlu0 %v348, 124
      %v663 = vpop.permute.xlu0 %662
      %664 = vrot.lane.b32.xlu0 %v355, 124
      %v665 = vpop.permute.xlu0 %664
      %666 = vrot.lane.b32.xlu0 %v362, 124
      %v667 = vpop.permute.xlu0 %666
      %668 = vrot.lane.b32.xlu0 %v369, 124
      %v669 = vpop.permute.xlu0 %668
      %670 = vrot.lane.b32.xlu0 %v376, 124
      %v671 = vpop.permute.xlu0 %670
      %672 = vrot.lane.b32.xlu0 %v383, 124
      %v673 = vpop.permute.xlu0 %672
      %674 = vrot.lane.b32.xlu0 %v390, 124
      %v675 = vpop.permute.xlu0 %674
      %676 = vrot.lane.b32.xlu0 %v397, 124
      %v677 = vpop.permute.xlu0 %676
      %678 = vrot.lane.b32.xlu0 %v404, 124
      %v679 = vpop.permute.xlu0 %678
      %680 = vrot.lane.b32.xlu0 %v411, 124
      %v681 = vpop.permute.xlu0 %680
      %682 = vrot.lane.b32.xlu0 %v418, 124
      %v683 = vpop.permute.xlu0 %682
      %684 = vrot.lane.b32.xlu0 %v425, 124
      %v685 = vpop.permute.xlu0 %684
      %686 = vrot.lane.b32.xlu0 %v432, 124
      %v687 = vpop.permute.xlu0 %686
      %688 = vrot.lane.b32.xlu0 %v439, 124
      %v689 = vpop.permute.xlu0 %688
      %690 = vrot.lane.b32.xlu0 %v446, 124
      %v691 = vpop.permute.xlu0 %690
      %692 = vrot.lane.b32.xlu0 %v453, 124
      %v693 = vpop.permute.xlu0 %692
      %694 = vrot.lane.b32.xlu0 %v460, 124
      %v695 = vpop.permute.xlu0 %694
      %696 = vrot.lane.b32.xlu0 %v467, 124
      %v697 = vpop.permute.xlu0 %696
      %698 = vrot.lane.b32.xlu0 %v474, 124
      %v699 = vpop.permute.xlu0 %698
      %700 = vrot.lane.b32.xlu0 %v481, 124
      %v701 = vpop.permute.xlu0 %700
      %702 = vrot.lane.b32.xlu0 %v488, 124
      %v703 = vpop.permute.xlu0 %702
      %704 = vrot.lane.b32.xlu0 %v495, 124
      %v705 = vpop.permute.xlu0 %704
      %706 = vrot.lane.b32.xlu0 %v502, 124
      %v707 = vpop.permute.xlu0 %706
      %708 = vrot.lane.b32.xlu0 %v509, 124
      %v709 = vpop.permute.xlu0 %708
      %710 = vrot.lane.b32.xlu0 %v516, 124
      %v711 = vpop.permute.xlu0 %710
      %712 = vrot.lane.b32.xlu0 %v523, 124
      %v713 = vpop.permute.xlu0 %712
      %714 = vrot.lane.b32.xlu0 %v530, 124
      %v715 = vpop.permute.xlu0 %714
      %716 = vrot.lane.b32.xlu0 %v537, 124
      %v717 = vpop.permute.xlu0 %716
      %718 = vrot.lane.b32.xlu0 %v544, 124
      %v719 = vpop.permute.xlu0 %718
      %720 = vrot.lane.b32.xlu0 %v551, 124
      %v721 = vpop.permute.xlu0 %720
      %722 = vrot.lane.b32.xlu0 %v558, 124
      %v723 = vpop.permute.xlu0 %722
      %724 = vrot.lane.b32.xlu0 %v565, 124
      %v725 = vpop.permute.xlu0 %724
      %726 = vrot.lane.b32.xlu0 %v348, 122
      %v727 = vpop.permute.xlu0 %726
      %728 = vrot.lane.b32.xlu0 %v355, 122
      %v729 = vpop.permute.xlu0 %728
      %730 = vrot.lane.b32.xlu0 %v362, 122
      %v731 = vpop.permute.xlu0 %730
      %732 = vrot.lane.b32.xlu0 %v369, 122
      %v733 = vpop.permute.xlu0 %732
      %734 = vrot.lane.b32.xlu0 %v376, 122
      %v735 = vpop.permute.xlu0 %734
      %736 = vrot.lane.b32.xlu0 %v383, 122
      %v737 = vpop.permute.xlu0 %736
      %738 = vrot.lane.b32.xlu0 %v390, 122
      %v739 = vpop.permute.xlu0 %738
      %740 = vrot.lane.b32.xlu0 %v397, 122
      %v741 = vpop.permute.xlu0 %740
      %742 = vrot.lane.b32.xlu0 %v404, 122
      %v743 = vpop.permute.xlu0 %742
      %744 = vrot.lane.b32.xlu0 %v411, 122
      %v745 = vpop.permute.xlu0 %744
      %746 = vrot.lane.b32.xlu0 %v418, 122
      %v747 = vpop.permute.xlu0 %746
      %748 = vrot.lane.b32.xlu0 %v425, 122
      %v749 = vpop.permute.xlu0 %748
      %750 = vrot.lane.b32.xlu0 %v432, 122
      %v751 = vpop.permute.xlu0 %750
      %752 = vrot.lane.b32.xlu0 %v439, 122
      %v753 = vpop.permute.xlu0 %752
      %754 = vrot.lane.b32.xlu0 %v446, 122
      %v755 = vpop.permute.xlu0 %754
      %756 = vrot.lane.b32.xlu0 %v453, 122
      %v757 = vpop.permute.xlu0 %756
      %758 = vrot.lane.b32.xlu0 %v460, 122
      %v759 = vpop.permute.xlu0 %758
      %760 = vrot.lane.b32.xlu0 %v467, 122
      %v761 = vpop.permute.xlu0 %760
      %762 = vrot.lane.b32.xlu0 %v474, 122
      %v763 = vpop.permute.xlu0 %762
      %764 = vrot.lane.b32.xlu0 %v481, 122
      %v765 = vpop.permute.xlu0 %764
      %766 = vrot.lane.b32.xlu0 %v488, 122
      %v767 = vpop.permute.xlu0 %766
      %768 = vrot.lane.b32.xlu0 %v495, 122
      %v769 = vpop.permute.xlu0 %768
      %770 = vrot.lane.b32.xlu0 %v502, 122
      %v771 = vpop.permute.xlu0 %770
      %772 = vrot.lane.b32.xlu0 %v509, 122
      %v773 = vpop.permute.xlu0 %772
      %774 = vrot.lane.b32.xlu0 %v516, 122
      %v775 = vpop.permute.xlu0 %774
      %776 = vrot.lane.b32.xlu0 %v523, 122
      %v777 = vpop.permute.xlu0 %776
      %778 = vrot.lane.b32.xlu0 %v530, 122
      %v779 = vpop.permute.xlu0 %778
      %780 = vrot.lane.b32.xlu0 %v537, 122
      %v781 = vpop.permute.xlu0 %780
      %782 = vrot.lane.b32.xlu0 %v544, 122
      %v783 = vpop.permute.xlu0 %782
      %784 = vrot.lane.b32.xlu0 %v551, 122
      %v785 = vpop.permute.xlu0 %784
      %786 = vrot.lane.b32.xlu0 %v558, 122
      %v787 = vpop.permute.xlu0 %786
      %788 = vrot.lane.b32.xlu0 %v565, 122
      %v789 = vpop.permute.xlu0 %788
      %790 = vrot.lane.b32.xlu0 %v348, 120
      %v791 = vpop.permute.xlu0 %790
      %792 = vrot.lane.b32.xlu0 %v355, 120
      %v793 = vpop.permute.xlu0 %792
      %794 = vrot.lane.b32.xlu0 %v362, 120
      %v795 = vpop.permute.xlu0 %794
      %796 = vrot.lane.b32.xlu0 %v369, 120
      %v797 = vpop.permute.xlu0 %796
      %798 = vrot.lane.b32.xlu0 %v376, 120
      %v799 = vpop.permute.xlu0 %798
      %800 = vrot.lane.b32.xlu0 %v383, 120
      %v801 = vpop.permute.xlu0 %800
      %802 = vrot.lane.b32.xlu0 %v390, 120
      %v803 = vpop.permute.xlu0 %802
      %804 = vrot.lane.b32.xlu0 %v397, 120
      %v805 = vpop.permute.xlu0 %804
      %806 = vrot.lane.b32.xlu0 %v404, 120
      %v807 = vpop.permute.xlu0 %806
      %808 = vrot.lane.b32.xlu0 %v411, 120
      %v809 = vpop.permute.xlu0 %808
      %810 = vrot.lane.b32.xlu0 %v418, 120
      %v811 = vpop.permute.xlu0 %810
      %812 = vrot.lane.b32.xlu0 %v425, 120
      %v813 = vpop.permute.xlu0 %812
      %814 = vrot.lane.b32.xlu0 %v432, 120
      %v815 = vpop.permute.xlu0 %814
      %816 = vrot.lane.b32.xlu0 %v439, 120
      %v817 = vpop.permute.xlu0 %816
      %818 = vrot.lane.b32.xlu0 %v446, 120
      %v819 = vpop.permute.xlu0 %818
      %820 = vrot.lane.b32.xlu0 %v453, 120
      %v821 = vpop.permute.xlu0 %820
      %822 = vrot.lane.b32.xlu0 %v460, 120
      %v823 = vpop.permute.xlu0 %822
      %824 = vrot.lane.b32.xlu0 %v467, 120
      %v825 = vpop.permute.xlu0 %824
      %826 = vrot.lane.b32.xlu0 %v474, 120
      %v827 = vpop.permute.xlu0 %826
      %828 = vrot.lane.b32.xlu0 %v481, 120
      %v829 = vpop.permute.xlu0 %828
      %830 = vrot.lane.b32.xlu0 %v488, 120
      %v831 = vpop.permute.xlu0 %830
      %832 = vrot.lane.b32.xlu0 %v495, 120
      %v833 = vpop.permute.xlu0 %832
      %834 = vrot.lane.b32.xlu0 %v502, 120
      %v835 = vpop.permute.xlu0 %834
      %836 = vrot.lane.b32.xlu0 %v509, 120
      %v837 = vpop.permute.xlu0 %836
      %838 = vrot.lane.b32.xlu0 %v516, 120
      %v839 = vpop.permute.xlu0 %838
      %840 = vrot.lane.b32.xlu0 %v523, 120
      %v841 = vpop.permute.xlu0 %840
      %842 = vrot.lane.b32.xlu0 %v530, 120
      %v843 = vpop.permute.xlu0 %842
      %844 = vrot.lane.b32.xlu0 %v537, 120
      %v845 = vpop.permute.xlu0 %844
      %846 = vrot.lane.b32.xlu0 %v544, 120
      %v847 = vpop.permute.xlu0 %846
      %848 = vrot.lane.b32.xlu0 %v551, 120
      %v849 = vpop.permute.xlu0 %848
      %850 = vrot.lane.b32.xlu0 %v558, 120
      %v851 = vpop.permute.xlu0 %850
      %852 = vrot.lane.b32.xlu0 %v565, 120
      %v853 = vpop.permute.xlu0 %852
      %854 = vrot.lane.b32.xlu0 %v348, 118
      %v855 = vpop.permute.xlu0 %854
      %856 = vrot.lane.b32.xlu0 %v355, 118
      %v857 = vpop.permute.xlu0 %856
      %858 = vrot.lane.b32.xlu0 %v362, 118
      %v859 = vpop.permute.xlu0 %858
      %860 = vrot.lane.b32.xlu0 %v369, 118
      %v861 = vpop.permute.xlu0 %860
      %862 = vrot.lane.b32.xlu0 %v376, 118
      %v863 = vpop.permute.xlu0 %862
      %864 = vrot.lane.b32.xlu0 %v383, 118
      %v865 = vpop.permute.xlu0 %864
      %866 = vrot.lane.b32.xlu0 %v390, 118
      %v867 = vpop.permute.xlu0 %866
      %868 = vrot.lane.b32.xlu0 %v397, 118
      %v869 = vpop.permute.xlu0 %868
      %870 = vrot.lane.b32.xlu0 %v404, 118
      %v871 = vpop.permute.xlu0 %870
      %872 = vrot.lane.b32.xlu0 %v411, 118
      %v873 = vpop.permute.xlu0 %872
      %874 = vrot.lane.b32.xlu0 %v418, 118
      %v875 = vpop.permute.xlu0 %874
      %876 = vrot.lane.b32.xlu0 %v425, 118
      %v877 = vpop.permute.xlu0 %876
      %878 = vrot.lane.b32.xlu0 %v432, 118
      %v879 = vpop.permute.xlu0 %878
      %880 = vrot.lane.b32.xlu0 %v439, 118
      %v881 = vpop.permute.xlu0 %880
      %882 = vrot.lane.b32.xlu0 %v446, 118
      %v883 = vpop.permute.xlu0 %882
      %884 = vrot.lane.b32.xlu0 %v453, 118
      %v885 = vpop.permute.xlu0 %884
      %886 = vrot.lane.b32.xlu0 %v460, 118
      %v887 = vpop.permute.xlu0 %886
      %888 = vrot.lane.b32.xlu0 %v467, 118
      %v889 = vpop.permute.xlu0 %888
      %890 = vrot.lane.b32.xlu0 %v474, 118
      %v891 = vpop.permute.xlu0 %890
      %892 = vrot.lane.b32.xlu0 %v481, 118
      %v893 = vpop.permute.xlu0 %892
      %894 = vrot.lane.b32.xlu0 %v488, 118
      %v895 = vpop.permute.xlu0 %894
      %896 = vrot.lane.b32.xlu0 %v495, 118
      %v897 = vpop.permute.xlu0 %896
      %898 = vrot.lane.b32.xlu0 %v502, 118
      %v899 = vpop.permute.xlu0 %898
      %900 = vrot.lane.b32.xlu0 %v509, 118
      %v901 = vpop.permute.xlu0 %900
      %902 = vrot.lane.b32.xlu0 %v516, 118
      %v903 = vpop.permute.xlu0 %902
      %904 = vrot.lane.b32.xlu0 %v523, 118
      %v905 = vpop.permute.xlu0 %904
      %906 = vrot.lane.b32.xlu0 %v530, 118
      %v907 = vpop.permute.xlu0 %906
      %908 = vrot.lane.b32.xlu0 %v537, 118
      %v909 = vpop.permute.xlu0 %908
      %910 = vrot.lane.b32.xlu0 %v544, 118
      %v911 = vpop.permute.xlu0 %910
      %912 = vrot.lane.b32.xlu0 %v551, 118
      %v913 = vpop.permute.xlu0 %912
      %914 = vrot.lane.b32.xlu0 %v558, 118
      %v915 = vpop.permute.xlu0 %914
      %916 = vrot.lane.b32.xlu0 %v565, 118
      %v917 = vpop.permute.xlu0 %916
      %918 = vrot.lane.b32.xlu0 %v348, 116
      %v919 = vpop.permute.xlu0 %918
      %920 = vrot.lane.b32.xlu0 %v355, 116
      %v921 = vpop.permute.xlu0 %920
      %922 = vrot.lane.b32.xlu0 %v362, 116
      %v923 = vpop.permute.xlu0 %922
      %924 = vrot.lane.b32.xlu0 %v369, 116
      %v925 = vpop.permute.xlu0 %924
      %926 = vrot.lane.b32.xlu0 %v376, 116
      %v927 = vpop.permute.xlu0 %926
      %928 = vrot.lane.b32.xlu0 %v383, 116
      %v929 = vpop.permute.xlu0 %928
      %930 = vrot.lane.b32.xlu0 %v390, 116
      %v931 = vpop.permute.xlu0 %930
      %932 = vrot.lane.b32.xlu0 %v397, 116
      %v933 = vpop.permute.xlu0 %932
      %934 = vrot.lane.b32.xlu0 %v404, 116
      %v935 = vpop.permute.xlu0 %934
      %936 = vrot.lane.b32.xlu0 %v411, 116
      %v937 = vpop.permute.xlu0 %936
      %938 = vrot.lane.b32.xlu0 %v418, 116
      %v939 = vpop.permute.xlu0 %938
      %940 = vrot.lane.b32.xlu0 %v425, 116
      %v941 = vpop.permute.xlu0 %940
      %942 = vrot.lane.b32.xlu0 %v432, 116
      %v943 = vpop.permute.xlu0 %942
      %944 = vrot.lane.b32.xlu0 %v439, 116
      %v945 = vpop.permute.xlu0 %944
      %946 = vrot.lane.b32.xlu0 %v446, 116
      %v947 = vpop.permute.xlu0 %946
      %948 = vrot.lane.b32.xlu0 %v453, 116
      %v949 = vpop.permute.xlu0 %948
      %950 = vrot.lane.b32.xlu0 %v460, 116
      %v951 = vpop.permute.xlu0 %950
      %952 = vrot.lane.b32.xlu0 %v467, 116
      %v953 = vpop.permute.xlu0 %952
      %954 = vrot.lane.b32.xlu0 %v474, 116
      %v955 = vpop.permute.xlu0 %954
      %956 = vrot.lane.b32.xlu0 %v481, 116
      %v957 = vpop.permute.xlu0 %956
      %958 = vrot.lane.b32.xlu0 %v488, 116
      %v959 = vpop.permute.xlu0 %958
      %960 = vrot.lane.b32.xlu0 %v495, 116
      %v961 = vpop.permute.xlu0 %960
      %962 = vrot.lane.b32.xlu0 %v502, 116
      %v963 = vpop.permute.xlu0 %962
      %964 = vrot.lane.b32.xlu0 %v509, 116
      %v965 = vpop.permute.xlu0 %964
      %966 = vrot.lane.b32.xlu0 %v516, 116
      %v967 = vpop.permute.xlu0 %966
      %968 = vrot.lane.b32.xlu0 %v523, 116
      %v969 = vpop.permute.xlu0 %968
      %970 = vrot.lane.b32.xlu0 %v530, 116
      %v971 = vpop.permute.xlu0 %970
      %972 = vrot.lane.b32.xlu0 %v537, 116
      %v973 = vpop.permute.xlu0 %972
      %974 = vrot.lane.b32.xlu0 %v544, 116
      %v975 = vpop.permute.xlu0 %974
      %976 = vrot.lane.b32.xlu0 %v551, 116
      %v977 = vpop.permute.xlu0 %976
      %978 = vrot.lane.b32.xlu0 %v558, 116
      %v979 = vpop.permute.xlu0 %978
      %980 = vrot.lane.b32.xlu0 %v565, 116
      %v981 = vpop.permute.xlu0 %980
      %982 = vrot.lane.b32.xlu0 %v348, 114
      %v983 = vpop.permute.xlu0 %982
      %984 = vrot.lane.b32.xlu0 %v355, 114
      %v985 = vpop.permute.xlu0 %984
      %986 = vrot.lane.b32.xlu0 %v362, 114
      %v987 = vpop.permute.xlu0 %986
      %988 = vrot.lane.b32.xlu0 %v369, 114
      %v989 = vpop.permute.xlu0 %988
      %990 = vrot.lane.b32.xlu0 %v376, 114
      %v991 = vpop.permute.xlu0 %990
      %992 = vrot.lane.b32.xlu0 %v383, 114
      %v993 = vpop.permute.xlu0 %992
      %994 = vrot.lane.b32.xlu0 %v390, 114
      %v995 = vpop.permute.xlu0 %994
      %996 = vrot.lane.b32.xlu0 %v397, 114
      %v997 = vpop.permute.xlu0 %996
      %998 = vrot.lane.b32.xlu0 %v404, 114
      %v999 = vpop.permute.xlu0 %998
      %1000 = vrot.lane.b32.xlu0 %v411, 114
      %v1001 = vpop.permute.xlu0 %1000
      %1002 = vrot.lane.b32.xlu0 %v418, 114
      %v1003 = vpop.permute.xlu0 %1002
      %1004 = vrot.lane.b32.xlu0 %v425, 114
      %v1005 = vpop.permute.xlu0 %1004
      %1006 = vrot.lane.b32.xlu0 %v432, 114
      %v1007 = vpop.permute.xlu0 %1006
      %1008 = vrot.lane.b32.xlu0 %v439, 114
      %v1009 = vpop.permute.xlu0 %1008
      %1010 = vrot.lane.b32.xlu0 %v446, 114
      %v1011 = vpop.permute.xlu0 %1010
      %1012 = vrot.lane.b32.xlu0 %v453, 114
      %v1013 = vpop.permute.xlu0 %1012
      %1014 = vrot.lane.b32.xlu0 %v460, 114
      %v1015 = vpop.permute.xlu0 %1014
      %1016 = vrot.lane.b32.xlu0 %v467, 114
      %v1017 = vpop.permute.xlu0 %1016
      %1018 = vrot.lane.b32.xlu0 %v474, 114
      %v1019 = vpop.permute.xlu0 %1018
      %1020 = vrot.lane.b32.xlu0 %v481, 114
      %v1021 = vpop.permute.xlu0 %1020
      %1022 = vrot.lane.b32.xlu0 %v488, 114
      %v1023 = vpop.permute.xlu0 %1022
      %1024 = vrot.lane.b32.xlu0 %v495, 114
      %v1025 = vpop.permute.xlu0 %1024
      %1026 = vrot.lane.b32.xlu0 %v502, 114
      %v1027 = vpop.permute.xlu0 %1026
      %1028 = vrot.lane.b32.xlu0 %v509, 114
      %v1029 = vpop.permute.xlu0 %1028
      %1030 = vrot.lane.b32.xlu0 %v516, 114
      %v1031 = vpop.permute.xlu0 %1030
      %1032 = vrot.lane.b32.xlu0 %v523, 114
      %v1033 = vpop.permute.xlu0 %1032
      %1034 = vrot.lane.b32.xlu0 %v530, 114
      %v1035 = vpop.permute.xlu0 %1034
      %1036 = vrot.lane.b32.xlu0 %v537, 114
      %v1037 = vpop.permute.xlu0 %1036
      %1038 = vrot.lane.b32.xlu0 %v544, 114
      %v1039 = vpop.permute.xlu0 %1038
      %1040 = vrot.lane.b32.xlu0 %v551, 114
      %v1041 = vpop.permute.xlu0 %1040
      %1042 = vrot.lane.b32.xlu0 %v558, 114
      %v1043 = vpop.permute.xlu0 %1042
      %1044 = vrot.lane.b32.xlu0 %v565, 114
      %v1045 = vpop.permute.xlu0 %1044
      %v1046 = vrot.slane %v355, 7
      %vm1047 = vcmask 1041409
      %v1048 = vsel %vm1047, %v1046, %v348
      %v1049 = vrot.slane %v362, 6
      %vm1050 = vcmask 1042434
      %v1051 = vsel %vm1050, %v1049, %v1048
      %v1052 = vrot.slane %v369, 5
      %vm1053 = vcmask 1043459
      %v1054 = vsel %vm1053, %v1052, %v1051
      %v1055 = vrot.slane %v376, 4
      %vm1056 = vcmask 1044484
      %v1057 = vsel %vm1056, %v1055, %v1054
      %v1058 = vrot.slane %v383, 3
      %vm1059 = vcmask 1045509
      %v1060 = vsel %vm1059, %v1058, %v1057
      %v1061 = vrot.slane %v390, 2
      %vm1062 = vcmask 1046534
      %v1063 = vsel %vm1062, %v1061, %v1060
      %v1064 = vrot.slane %v397, 1
      %vm1065 = vcmask 1047559
      %v1066 = vsel %vm1065, %v1064, %v1063
      %v1067 = vrot.slane %v601, 7
      %v1068 = vsel %vm1047, %v1067, %v599
      %v1069 = vrot.slane %v603, 6
      %v1070 = vsel %vm1050, %v1069, %v1068
      %v1071 = vrot.slane %v605, 5
      %v1072 = vsel %vm1053, %v1071, %v1070
      %v1073 = vrot.slane %v607, 4
      %v1074 = vsel %vm1056, %v1073, %v1072
      %v1075 = vrot.slane %v609, 3
      %v1076 = vsel %vm1059, %v1075, %v1074
      %v1077 = vrot.slane %v611, 2
      %v1078 = vsel %vm1062, %v1077, %v1076
      %v1079 = vrot.slane %v613, 1
      %v1080 = vsel %vm1065, %v1079, %v1078
      %v1081 = vrot.slane %v665, 7
      %v1082 = vsel %vm1047, %v1081, %v663
      %v1083 = vrot.slane %v667, 6
      %v1084 = vsel %vm1050, %v1083, %v1082
      %v1085 = vrot.slane %v669, 5
      %v1086 = vsel %vm1053, %v1085, %v1084
      %v1087 = vrot.slane %v671, 4
      %v1088 = vsel %vm1056, %v1087, %v1086
      %v1089 = vrot.slane %v673, 3
      %v1090 = vsel %vm1059, %v1089, %v1088
      %v1091 = vrot.slane %v675, 2
      %v1092 = vsel %vm1062, %v1091, %v1090
      %v1093 = vrot.slane %v677, 1
      %v1094 = vsel %vm1065, %v1093, %v1092
      %v1095 = vrot.slane %v729, 7
      %v1096 = vsel %vm1047, %v1095, %v727
      %v1097 = vrot.slane %v731, 6
      %v1098 = vsel %vm1050, %v1097, %v1096
      %v1099 = vrot.slane %v733, 5
      %v1100 = vsel %vm1053, %v1099, %v1098
      %v1101 = vrot.slane %v735, 4
      %v1102 = vsel %vm1056, %v1101, %v1100
      %v1103 = vrot.slane %v737, 3
      %v1104 = vsel %vm1059, %v1103, %v1102
      %v1105 = vrot.slane %v739, 2
      %v1106 = vsel %vm1062, %v1105, %v1104
      %v1107 = vrot.slane %v741, 1
      %v1108 = vsel %vm1065, %v1107, %v1106
      %v1109 = vrot.slane %v793, 7
      %v1110 = vsel %vm1047, %v1109, %v791
      %v1111 = vrot.slane %v795, 6
      %v1112 = vsel %vm1050, %v1111, %v1110
      %v1113 = vrot.slane %v797, 5
      %v1114 = vsel %vm1053, %v1113, %v1112
      %v1115 = vrot.slane %v799, 4
      %v1116 = vsel %vm1056, %v1115, %v1114
      %v1117 = vrot.slane %v801, 3
      %v1118 = vsel %vm1059, %v1117, %v1116
      %v1119 = vrot.slane %v803, 2
      %v1120 = vsel %vm1062, %v1119, %v1118
      %v1121 = vrot.slane %v805, 1
      %v1122 = vsel %vm1065, %v1121, %v1120
      %v1123 = vrot.slane %v857, 7
      %v1124 = vsel %vm1047, %v1123, %v855
      %v1125 = vrot.slane %v859, 6
      %v1126 = vsel %vm1050, %v1125, %v1124
      %v1127 = vrot.slane %v861, 5
      %v1128 = vsel %vm1053, %v1127, %v1126
      %v1129 = vrot.slane %v863, 4
      %v1130 = vsel %vm1056, %v1129, %v1128
      %v1131 = vrot.slane %v865, 3
      %v1132 = vsel %vm1059, %v1131, %v1130
      %v1133 = vrot.slane %v867, 2
      %v1134 = vsel %vm1062, %v1133, %v1132
      %v1135 = vrot.slane %v869, 1
      %v1136 = vsel %vm1065, %v1135, %v1134
      %v1137 = vrot.slane %v921, 7
      %v1138 = vsel %vm1047, %v1137, %v919
      %v1139 = vrot.slane %v923, 6
      %v1140 = vsel %vm1050, %v1139, %v1138
      %v1141 = vrot.slane %v925, 5
      %v1142 = vsel %vm1053, %v1141, %v1140
      %v1143 = vrot.slane %v927, 4
      %v1144 = vsel %vm1056, %v1143, %v1142
      %v1145 = vrot.slane %v929, 3
      %v1146 = vsel %vm1059, %v1145, %v1144
      %v1147 = vrot.slane %v931, 2
      %v1148 = vsel %vm1062, %v1147, %v1146
      %v1149 = vrot.slane %v933, 1
      %v1150 = vsel %vm1065, %v1149, %v1148
      %v1151 = vrot.slane %v985, 7
      %v1152 = vsel %vm1047, %v1151, %v983
      %v1153 = vrot.slane %v987, 6
      %v1154 = vsel %vm1050, %v1153, %v1152
      %v1155 = vrot.slane %v989, 5
      %v1156 = vsel %vm1053, %v1155, %v1154
      %v1157 = vrot.slane %v991, 4
      %v1158 = vsel %vm1056, %v1157, %v1156
      %v1159 = vrot.slane %v993, 3
      %v1160 = vsel %vm1059, %v1159, %v1158
      %v1161 = vrot.slane %v995, 2
      %v1162 = vsel %vm1062, %v1161, %v1160
      %v1163 = vrot.slane %v997, 1
      %v1164 = vsel %vm1065, %v1163, %v1162
      %v1165 = vrot.slane %v411, 7
      %v1166 = vsel %vm1047, %v1165, %v404
      %v1167 = vrot.slane %v418, 6
      %v1168 = vsel %vm1050, %v1167, %v1166
      %v1169 = vrot.slane %v425, 5
      %v1170 = vsel %vm1053, %v1169, %v1168
      %v1171 = vrot.slane %v432, 4
      %v1172 = vsel %vm1056, %v1171, %v1170
      %v1173 = vrot.slane %v439, 3
      %v1174 = vsel %vm1059, %v1173, %v1172
      %v1175 = vrot.slane %v446, 2
      %v1176 = vsel %vm1062, %v1175, %v1174
      %v1177 = vrot.slane %v453, 1
      %v1178 = vsel %vm1065, %v1177, %v1176
      %v1179 = vrot.slane %v617, 7
      %v1180 = vsel %vm1047, %v1179, %v615
      %v1181 = vrot.slane %v619, 6
      %v1182 = vsel %vm1050, %v1181, %v1180
      %v1183 = vrot.slane %v621, 5
      %v1184 = vsel %vm1053, %v1183, %v1182
      %v1185 = vrot.slane %v623, 4
      %v1186 = vsel %vm1056, %v1185, %v1184
      %v1187 = vrot.slane %v625, 3
      %v1188 = vsel %vm1059, %v1187, %v1186
      %v1189 = vrot.slane %v627, 2
      %v1190 = vsel %vm1062, %v1189, %v1188
      %v1191 = vrot.slane %v629, 1
      %v1192 = vsel %vm1065, %v1191, %v1190
      %v1193 = vrot.slane %v681, 7
      %v1194 = vsel %vm1047, %v1193, %v679
      %v1195 = vrot.slane %v683, 6
      %v1196 = vsel %vm1050, %v1195, %v1194
      %v1197 = vrot.slane %v685, 5
      %v1198 = vsel %vm1053, %v1197, %v1196
      %v1199 = vrot.slane %v687, 4
      %v1200 = vsel %vm1056, %v1199, %v1198
      %v1201 = vrot.slane %v689, 3
      %v1202 = vsel %vm1059, %v1201, %v1200
      %v1203 = vrot.slane %v691, 2
      %v1204 = vsel %vm1062, %v1203, %v1202
      %v1205 = vrot.slane %v693, 1
      %v1206 = vsel %vm1065, %v1205, %v1204
      %v1207 = vrot.slane %v745, 7
      %v1208 = vsel %vm1047, %v1207, %v743
      %v1209 = vrot.slane %v747, 6
      %v1210 = vsel %vm1050, %v1209, %v1208
      %v1211 = vrot.slane %v749, 5
      %v1212 = vsel %vm1053, %v1211, %v1210
      %v1213 = vrot.slane %v751, 4
      %v1214 = vsel %vm1056, %v1213, %v1212
      %v1215 = vrot.slane %v753, 3
      %v1216 = vsel %vm1059, %v1215, %v1214
      %v1217 = vrot.slane %v755, 2
      %v1218 = vsel %vm1062, %v1217, %v1216
      %v1219 = vrot.slane %v757, 1
      %v1220 = vsel %vm1065, %v1219, %v1218
      %v1221 = vrot.slane %v809, 7
      %v1222 = vsel %vm1047, %v1221, %v807
      %v1223 = vrot.slane %v811, 6
      %v1224 = vsel %vm1050, %v1223, %v1222
      %v1225 = vrot.slane %v813, 5
      %v1226 = vsel %vm1053, %v1225, %v1224
      %v1227 = vrot.slane %v815, 4
      %v1228 = vsel %vm1056, %v1227, %v1226
      %v1229 = vrot.slane %v817, 3
      %v1230 = vsel %vm1059, %v1229, %v1228
      %v1231 = vrot.slane %v819, 2
      %v1232 = vsel %vm1062, %v1231, %v1230
      %v1233 = vrot.slane %v821, 1
      %v1234 = vsel %vm1065, %v1233, %v1232
      %v1235 = vrot.slane %v873, 7
      %v1236 = vsel %vm1047, %v1235, %v871
      %v1237 = vrot.slane %v875, 6
      %v1238 = vsel %vm1050, %v1237, %v1236
      %v1239 = vrot.slane %v877, 5
      %v1240 = vsel %vm1053, %v1239, %v1238
      %v1241 = vrot.slane %v879, 4
      %v1242 = vsel %vm1056, %v1241, %v1240
      %v1243 = vrot.slane %v881, 3
      %v1244 = vsel %vm1059, %v1243, %v1242
      %v1245 = vrot.slane %v883, 2
      %v1246 = vsel %vm1062, %v1245, %v1244
      %v1247 = vrot.slane %v885, 1
      %v1248 = vsel %vm1065, %v1247, %v1246
      %v1249 = vrot.slane %v937, 7
      %v1250 = vsel %vm1047, %v1249, %v935
      %v1251 = vrot.slane %v939, 6
      %v1252 = vsel %vm1050, %v1251, %v1250
      %v1253 = vrot.slane %v941, 5
      %v1254 = vsel %vm1053, %v1253, %v1252
      %v1255 = vrot.slane %v943, 4
      %v1256 = vsel %vm1056, %v1255, %v1254
      %v1257 = vrot.slane %v945, 3
      %v1258 = vsel %vm1059, %v1257, %v1256
      %v1259 = vrot.slane %v947, 2
      %v1260 = vsel %vm1062, %v1259, %v1258
      %v1261 = vrot.slane %v949, 1
      %v1262 = vsel %vm1065, %v1261, %v1260
      %v1263 = vrot.slane %v1001, 7
      %v1264 = vsel %vm1047, %v1263, %v999
      %v1265 = vrot.slane %v1003, 6
      %v1266 = vsel %vm1050, %v1265, %v1264
      %v1267 = vrot.slane %v1005, 5
      %v1268 = vsel %vm1053, %v1267, %v1266
      %v1269 = vrot.slane %v1007, 4
      %v1270 = vsel %vm1056, %v1269, %v1268
      %v1271 = vrot.slane %v1009, 3
      %v1272 = vsel %vm1059, %v1271, %v1270
      %v1273 = vrot.slane %v1011, 2
      %v1274 = vsel %vm1062, %v1273, %v1272
      %v1275 = vrot.slane %v1013, 1
      %v1276 = vsel %vm1065, %v1275, %v1274
      %v1277 = vrot.slane %v467, 7
      %v1278 = vsel %vm1047, %v1277, %v460
      %v1279 = vrot.slane %v474, 6
      %v1280 = vsel %vm1050, %v1279, %v1278
      %v1281 = vrot.slane %v481, 5
      %v1282 = vsel %vm1053, %v1281, %v1280
      %v1283 = vrot.slane %v488, 4
      %v1284 = vsel %vm1056, %v1283, %v1282
      %v1285 = vrot.slane %v495, 3
      %v1286 = vsel %vm1059, %v1285, %v1284
      %v1287 = vrot.slane %v502, 2
      %v1288 = vsel %vm1062, %v1287, %v1286
      %v1289 = vrot.slane %v509, 1
      %v1290 = vsel %vm1065, %v1289, %v1288
      %v1291 = vrot.slane %v633, 7
      %v1292 = vsel %vm1047, %v1291, %v631
      %v1293 = vrot.slane %v635, 6
      %v1294 = vsel %vm1050, %v1293, %v1292
      %v1295 = vrot.slane %v637, 5
      %v1296 = vsel %vm1053, %v1295, %v1294
      %v1297 = vrot.slane %v639, 4
      %v1298 = vsel %vm1056, %v1297, %v1296
      %v1299 = vrot.slane %v641, 3
      %v1300 = vsel %vm1059, %v1299, %v1298
      %v1301 = vrot.slane %v643, 2
      %v1302 = vsel %vm1062, %v1301, %v1300
      %v1303 = vrot.slane %v645, 1
      %v1304 = vsel %vm1065, %v1303, %v1302
      %v1305 = vrot.slane %v697, 7
      %v1306 = vsel %vm1047, %v1305, %v695
      %v1307 = vrot.slane %v699, 6
      %v1308 = vsel %vm1050, %v1307, %v1306
      %v1309 = vrot.slane %v701, 5
      %v1310 = vsel %vm1053, %v1309, %v1308
      %v1311 = vrot.slane %v703, 4
      %v1312 = vsel %vm1056, %v1311, %v1310
      %v1313 = vrot.slane %v705, 3
      %v1314 = vsel %vm1059, %v1313, %v1312
      %v1315 = vrot.slane %v707, 2
      %v1316 = vsel %vm1062, %v1315, %v1314
      %v1317 = vrot.slane %v709, 1
      %v1318 = vsel %vm1065, %v1317, %v1316
      %v1319 = vrot.slane %v761, 7
      %v1320 = vsel %vm1047, %v1319, %v759
      %v1321 = vrot.slane %v763, 6
      %v1322 = vsel %vm1050, %v1321, %v1320
      %v1323 = vrot.slane %v765, 5
      %v1324 = vsel %vm1053, %v1323, %v1322
      %v1325 = vrot.slane %v767, 4
      %v1326 = vsel %vm1056, %v1325, %v1324
      %v1327 = vrot.slane %v769, 3
      %v1328 = vsel %vm1059, %v1327, %v1326
      %v1329 = vrot.slane %v771, 2
      %v1330 = vsel %vm1062, %v1329, %v1328
      %v1331 = vrot.slane %v773, 1
      %v1332 = vsel %vm1065, %v1331, %v1330
      %v1333 = vrot.slane %v825, 7
      %v1334 = vsel %vm1047, %v1333, %v823
      %v1335 = vrot.slane %v827, 6
      %v1336 = vsel %vm1050, %v1335, %v1334
      %v1337 = vrot.slane %v829, 5
      %v1338 = vsel %vm1053, %v1337, %v1336
      %v1339 = vrot.slane %v831, 4
      %v1340 = vsel %vm1056, %v1339, %v1338
      %v1341 = vrot.slane %v833, 3
      %v1342 = vsel %vm1059, %v1341, %v1340
      %v1343 = vrot.slane %v835, 2
      %v1344 = vsel %vm1062, %v1343, %v1342
      %v1345 = vrot.slane %v837, 1
      %v1346 = vsel %vm1065, %v1345, %v1344
      %v1347 = vrot.slane %v889, 7
      %v1348 = vsel %vm1047, %v1347, %v887
      %v1349 = vrot.slane %v891, 6
      %v1350 = vsel %vm1050, %v1349, %v1348
      %v1351 = vrot.slane %v893, 5
      %v1352 = vsel %vm1053, %v1351, %v1350
      %v1353 = vrot.slane %v895, 4
      %v1354 = vsel %vm1056, %v1353, %v1352
      %v1355 = vrot.slane %v897, 3
      %v1356 = vsel %vm1059, %v1355, %v1354
      %v1357 = vrot.slane %v899, 2
      %v1358 = vsel %vm1062, %v1357, %v1356
      %v1359 = vrot.slane %v901, 1
      %v1360 = vsel %vm1065, %v1359, %v1358
      %v1361 = vrot.slane %v953, 7
      %v1362 = vsel %vm1047, %v1361, %v951
      %v1363 = vrot.slane %v955, 6
      %v1364 = vsel %vm1050, %v1363, %v1362
      %v1365 = vrot.slane %v957, 5
      %v1366 = vsel %vm1053, %v1365, %v1364
      %v1367 = vrot.slane %v959, 4
      %v1368 = vsel %vm1056, %v1367, %v1366
      %v1369 = vrot.slane %v961, 3
      %v1370 = vsel %vm1059, %v1369, %v1368
      %v1371 = vrot.slane %v963, 2
      %v1372 = vsel %vm1062, %v1371, %v1370
      %v1373 = vrot.slane %v965, 1
      %v1374 = vsel %vm1065, %v1373, %v1372
      %v1375 = vrot.slane %v1017, 7
      %v1376 = vsel %vm1047, %v1375, %v1015
      %v1377 = vrot.slane %v1019, 6
      %v1378 = vsel %vm1050, %v1377, %v1376
      %v1379 = vrot.slane %v1021, 5
      %v1380 = vsel %vm1053, %v1379, %v1378
      %v1381 = vrot.slane %v1023, 4
      %v1382 = vsel %vm1056, %v1381, %v1380
      %v1383 = vrot.slane %v1025, 3
      %v1384 = vsel %vm1059, %v1383, %v1382
      %v1385 = vrot.slane %v1027, 2
      %v1386 = vsel %vm1062, %v1385, %v1384
      %v1387 = vrot.slane %v1029, 1
      %v1388 = vsel %vm1065, %v1387, %v1386
      %v1389 = vrot.slane %v523, 7
      %v1390 = vsel %vm1047, %v1389, %v516
      %v1391 = vrot.slane %v530, 6
      %v1392 = vsel %vm1050, %v1391, %v1390
      %v1393 = vrot.slane %v537, 5
      %v1394 = vsel %vm1053, %v1393, %v1392
      %v1395 = vrot.slane %v544, 4
      %v1396 = vsel %vm1056, %v1395, %v1394
      %v1397 = vrot.slane %v551, 3
      %v1398 = vsel %vm1059, %v1397, %v1396
      %v1399 = vrot.slane %v558, 2
      %v1400 = vsel %vm1062, %v1399, %v1398
      %v1401 = vrot.slane %v565, 1
      %v1402 = vsel %vm1065, %v1401, %v1400
      %v1403 = vrot.slane %v649, 7
      %v1404 = vsel %vm1047, %v1403, %v647
      %v1405 = vrot.slane %v651, 6
      %v1406 = vsel %vm1050, %v1405, %v1404
      %v1407 = vrot.slane %v653, 5
      %v1408 = vsel %vm1053, %v1407, %v1406
      %v1409 = vrot.slane %v655, 4
      %v1410 = vsel %vm1056, %v1409, %v1408
      %v1411 = vrot.slane %v657, 3
      %v1412 = vsel %vm1059, %v1411, %v1410
      %v1413 = vrot.slane %v659, 2
      %v1414 = vsel %vm1062, %v1413, %v1412
      %v1415 = vrot.slane %v661, 1
      %v1416 = vsel %vm1065, %v1415, %v1414
      %v1417 = vrot.slane %v713, 7
      %v1418 = vsel %vm1047, %v1417, %v711
      %v1419 = vrot.slane %v715, 6
      %v1420 = vsel %vm1050, %v1419, %v1418
      %v1421 = vrot.slane %v717, 5
      %v1422 = vsel %vm1053, %v1421, %v1420
      %v1423 = vrot.slane %v719, 4
      %v1424 = vsel %vm1056, %v1423, %v1422
      %v1425 = vrot.slane %v721, 3
      %v1426 = vsel %vm1059, %v1425, %v1424
      %v1427 = vrot.slane %v723, 2
      %v1428 = vsel %vm1062, %v1427, %v1426
      %v1429 = vrot.slane %v725, 1
      %v1430 = vsel %vm1065, %v1429, %v1428
      %v1431 = vrot.slane %v777, 7
      %v1432 = vsel %vm1047, %v1431, %v775
      %v1433 = vrot.slane %v779, 6
      %v1434 = vsel %vm1050, %v1433, %v1432
      %v1435 = vrot.slane %v781, 5
      %v1436 = vsel %vm1053, %v1435, %v1434
      %v1437 = vrot.slane %v783, 4
      %v1438 = vsel %vm1056, %v1437, %v1436
      %v1439 = vrot.slane %v785, 3
      %v1440 = vsel %vm1059, %v1439, %v1438
      %v1441 = vrot.slane %v787, 2
      %v1442 = vsel %vm1062, %v1441, %v1440
      %v1443 = vrot.slane %v789, 1
      %v1444 = vsel %vm1065, %v1443, %v1442
      %v1445 = vrot.slane %v841, 7
      %v1446 = vsel %vm1047, %v1445, %v839
      %v1447 = vrot.slane %v843, 6
      %v1448 = vsel %vm1050, %v1447, %v1446
      %v1449 = vrot.slane %v845, 5
      %v1450 = vsel %vm1053, %v1449, %v1448
      %v1451 = vrot.slane %v847, 4
      %v1452 = vsel %vm1056, %v1451, %v1450
      %v1453 = vrot.slane %v849, 3
      %v1454 = vsel %vm1059, %v1453, %v1452
      %v1455 = vrot.slane %v851, 2
      %v1456 = vsel %vm1062, %v1455, %v1454
      %v1457 = vrot.slane %v853, 1
      %v1458 = vsel %vm1065, %v1457, %v1456
      %v1459 = vrot.slane %v905, 7
      %v1460 = vsel %vm1047, %v1459, %v903
      %v1461 = vrot.slane %v907, 6
      %v1462 = vsel %vm1050, %v1461, %v1460
      %v1463 = vrot.slane %v909, 5
      %v1464 = vsel %vm1053, %v1463, %v1462
      %v1465 = vrot.slane %v911, 4
      %v1466 = vsel %vm1056, %v1465, %v1464
      %v1467 = vrot.slane %v913, 3
      %v1468 = vsel %vm1059, %v1467, %v1466
      %v1469 = vrot.slane %v915, 2
      %v1470 = vsel %vm1062, %v1469, %v1468
      %v1471 = vrot.slane %v917, 1
      %v1472 = vsel %vm1065, %v1471, %v1470
      %v1473 = vrot.slane %v969, 7
      %v1474 = vsel %vm1047, %v1473, %v967
      %v1475 = vrot.slane %v971, 6
      %v1476 = vsel %vm1050, %v1475, %v1474
      %v1477 = vrot.slane %v973, 5
      %v1478 = vsel %vm1053, %v1477, %v1476
      %v1479 = vrot.slane %v975, 4
      %v1480 = vsel %vm1056, %v1479, %v1478
      %v1481 = vrot.slane %v977, 3
      %v1482 = vsel %vm1059, %v1481, %v1480
      %v1483 = vrot.slane %v979, 2
      %v1484 = vsel %vm1062, %v1483, %v1482
      %v1485 = vrot.slane %v981, 1
      %v1486 = vsel %vm1065, %v1485, %v1484
      %v1487 = vrot.slane %v1033, 7
      %v1488 = vsel %vm1047, %v1487, %v1031
      %v1489 = vrot.slane %v1035, 6
      %v1490 = vsel %vm1050, %v1489, %v1488
      %v1491 = vrot.slane %v1037, 5
      %v1492 = vsel %vm1053, %v1491, %v1490
      %v1493 = vrot.slane %v1039, 4
      %v1494 = vsel %vm1056, %v1493, %v1492
      %v1495 = vrot.slane %v1041, 3
      %v1496 = vsel %vm1059, %v1495, %v1494
      %v1497 = vrot.slane %v1043, 2
      %v1498 = vsel %vm1062, %v1497, %v1496
      %v1499 = vrot.slane %v1045, 1
      %v1500 = vsel %vm1065, %v1499, %v1498
      %v1533 = vrot.slane %v1094, 4
      %vm1534 = vcmask 1047556
      %v1535 = vsel %vm1534, %v1533, %v1066
      %v1536 = vrot.slane %v1066, 4
      %v1537 = vsel %vm1534, %v1094, %v1536
      %v1539 = vunpack.c.l.s4 1983009808
      %v1540 = vunpack.c.0.s8 %v1539
      %v1541 = vperm.slane %v1535, %v1540
      %v1543 = vunpack.c.l.s4 1983009808
      %v1544 = vunpack.c.0.s8 %v1543
      %v1545 = vperm.slane %v1537, %v1544
      %v1546 = vrot.slane %v1108, 4
      %v1547 = vsel %vm1534, %v1546, %v1080
      %v1548 = vrot.slane %v1080, 4
      %v1549 = vsel %vm1534, %v1108, %v1548
      %v1551 = vunpack.c.l.s4 1983009808
      %v1552 = vunpack.c.0.s8 %v1551
      %v1553 = vperm.slane %v1547, %v1552
      %v1555 = vunpack.c.l.s4 1983009808
      %v1556 = vunpack.c.0.s8 %v1555
      %v1557 = vperm.slane %v1549, %v1556
      %v1558 = vrot.slane %v1150, 4
      %v1559 = vsel %vm1534, %v1558, %v1122
      %v1560 = vrot.slane %v1122, 4
      %v1561 = vsel %vm1534, %v1150, %v1560
      %v1563 = vunpack.c.l.s4 1983009808
      %v1564 = vunpack.c.0.s8 %v1563
      %v1565 = vperm.slane %v1559, %v1564
      %v1567 = vunpack.c.l.s4 1983009808
      %v1568 = vunpack.c.0.s8 %v1567
      %v1569 = vperm.slane %v1561, %v1568
      %v1570 = vrot.slane %v1164, 4
      %v1571 = vsel %vm1534, %v1570, %v1136
      %v1572 = vrot.slane %v1136, 4
      %v1573 = vsel %vm1534, %v1164, %v1572
      %v1575 = vunpack.c.l.s4 1983009808
      %v1576 = vunpack.c.0.s8 %v1575
      %v1577 = vperm.slane %v1571, %v1576
      %v1579 = vunpack.c.l.s4 1983009808
      %v1580 = vunpack.c.0.s8 %v1579
      %v1581 = vperm.slane %v1573, %v1580
      %v1582 = vrot.slane %v1553, 4
      %v1583 = vsel %vm1534, %v1582, %v1541
      %v1584 = vrot.slane %v1541, 4
      %v1585 = vsel %vm1534, %v1553, %v1584
      %v1587 = vunpack.c.l.s4 1934713408
      %v1588 = vunpack.c.0.s8 %v1587
      %v1589 = vperm.slane %v1583, %v1588
      %v1591 = vunpack.c.l.s4 1934713408
      %v1592 = vunpack.c.0.s8 %v1591
      %v1593 = vperm.slane %v1585, %v1592
      %v1594 = vrot.slane %v1557, 4
      %v1595 = vsel %vm1534, %v1594, %v1545
      %v1596 = vrot.slane %v1545, 4
      %v1597 = vsel %vm1534, %v1557, %v1596
      %v1599 = vunpack.c.l.s4 1934713408
      %v1600 = vunpack.c.0.s8 %v1599
      %v1601 = vperm.slane %v1595, %v1600
      %v1603 = vunpack.c.l.s4 1934713408
      %v1604 = vunpack.c.0.s8 %v1603
      %v1605 = vperm.slane %v1597, %v1604
      %v1606 = vrot.slane %v1577, 4
      %v1607 = vsel %vm1534, %v1606, %v1565
      %v1608 = vrot.slane %v1565, 4
      %v1609 = vsel %vm1534, %v1577, %v1608
      %v1611 = vunpack.c.l.s4 1934713408
      %v1612 = vunpack.c.0.s8 %v1611
      %v1613 = vperm.slane %v1607, %v1612
      %v1615 = vunpack.c.l.s4 1934713408
      %v1616 = vunpack.c.0.s8 %v1615
      %v1617 = vperm.slane %v1609, %v1616
      %v1618 = vrot.slane %v1581, 4
      %v1619 = vsel %vm1534, %v1618, %v1569
      %v1620 = vrot.slane %v1569, 4
      %v1621 = vsel %vm1534, %v1581, %v1620
      %v1623 = vunpack.c.l.s4 1934713408
      %v1624 = vunpack.c.0.s8 %v1623
      %v1625 = vperm.slane %v1619, %v1624
      %v1627 = vunpack.c.l.s4 1934713408
      %v1628 = vunpack.c.0.s8 %v1627
      %v1629 = vperm.slane %v1621, %v1628
      %v1630 = vrot.slane %v1613, 4
      %v1631 = vsel %vm1534, %v1630, %v1589
      %v1632 = vrot.slane %v1589, 4
      %v1633 = vsel %vm1534, %v1613, %v1632
      %v1634 = vrot.slane %v1617, 4
      %v1635 = vsel %vm1534, %v1634, %v1593
      %v1636 = vrot.slane %v1593, 4
      %v1637 = vsel %vm1534, %v1617, %v1636
      %v1638 = vrot.slane %v1625, 4
      %v1639 = vsel %vm1534, %v1638, %v1601
      %v1640 = vrot.slane %v1601, 4
      %v1641 = vsel %vm1534, %v1625, %v1640
      %v1642 = vrot.slane %v1629, 4
      %v1643 = vsel %vm1534, %v1642, %v1605
      %v1644 = vrot.slane %v1605, 4
      %v1645 = vsel %vm1534, %v1629, %v1644
      %v1646 = vrot.slane %v1206, 4
      %v1647 = vsel %vm1534, %v1646, %v1178
      %v1648 = vrot.slane %v1178, 4
      %v1649 = vsel %vm1534, %v1206, %v1648
      %v1651 = vunpack.c.l.s4 1983009808
      %v1652 = vunpack.c.0.s8 %v1651
      %v1653 = vperm.slane %v1647, %v1652
      %v1655 = vunpack.c.l.s4 1983009808
      %v1656 = vunpack.c.0.s8 %v1655
      %v1657 = vperm.slane %v1649, %v1656
      %v1658 = vrot.slane %v1220, 4
      %v1659 = vsel %vm1534, %v1658, %v1192
      %v1660 = vrot.slane %v1192, 4
      %v1661 = vsel %vm1534, %v1220, %v1660
      %v1663 = vunpack.c.l.s4 1983009808
      %v1664 = vunpack.c.0.s8 %v1663
      %v1665 = vperm.slane %v1659, %v1664
      %v1667 = vunpack.c.l.s4 1983009808
      %v1668 = vunpack.c.0.s8 %v1667
      %v1669 = vperm.slane %v1661, %v1668
      %v1670 = vrot.slane %v1262, 4
      %v1671 = vsel %vm1534, %v1670, %v1234
      %v1672 = vrot.slane %v1234, 4
      %v1673 = vsel %vm1534, %v1262, %v1672
      %v1675 = vunpack.c.l.s4 1983009808
      %v1676 = vunpack.c.0.s8 %v1675
      %v1677 = vperm.slane %v1671, %v1676
      %v1679 = vunpack.c.l.s4 1983009808
      %v1680 = vunpack.c.0.s8 %v1679
      %v1681 = vperm.slane %v1673, %v1680
      %v1682 = vrot.slane %v1276, 4
      %v1683 = vsel %vm1534, %v1682, %v1248
      %v1684 = vrot.slane %v1248, 4
      %v1685 = vsel %vm1534, %v1276, %v1684
      %v1687 = vunpack.c.l.s4 1983009808
      %v1688 = vunpack.c.0.s8 %v1687
      %v1689 = vperm.slane %v1683, %v1688
      %v1691 = vunpack.c.l.s4 1983009808
      %v1692 = vunpack.c.0.s8 %v1691
      %v1693 = vperm.slane %v1685, %v1692
      %v1694 = vrot.slane %v1665, 4
      %v1695 = vsel %vm1534, %v1694, %v1653
      %v1696 = vrot.slane %v1653, 4
      %v1697 = vsel %vm1534, %v1665, %v1696
      %v1699 = vunpack.c.l.s4 1934713408
      %v1700 = vunpack.c.0.s8 %v1699
      %v1701 = vperm.slane %v1695, %v1700
      %v1703 = vunpack.c.l.s4 1934713408
      %v1704 = vunpack.c.0.s8 %v1703
      %v1705 = vperm.slane %v1697, %v1704
      %v1706 = vrot.slane %v1669, 4
      %v1707 = vsel %vm1534, %v1706, %v1657
      %v1708 = vrot.slane %v1657, 4
      %v1709 = vsel %vm1534, %v1669, %v1708
      %v1711 = vunpack.c.l.s4 1934713408
      %v1712 = vunpack.c.0.s8 %v1711
      %v1713 = vperm.slane %v1707, %v1712
      %v1715 = vunpack.c.l.s4 1934713408
      %v1716 = vunpack.c.0.s8 %v1715
      %v1717 = vperm.slane %v1709, %v1716
      %v1718 = vrot.slane %v1689, 4
      %v1719 = vsel %vm1534, %v1718, %v1677
      %v1720 = vrot.slane %v1677, 4
      %v1721 = vsel %vm1534, %v1689, %v1720
      %v1723 = vunpack.c.l.s4 1934713408
      %v1724 = vunpack.c.0.s8 %v1723
      %v1725 = vperm.slane %v1719, %v1724
      %v1727 = vunpack.c.l.s4 1934713408
      %v1728 = vunpack.c.0.s8 %v1727
      %v1729 = vperm.slane %v1721, %v1728
      %v1730 = vrot.slane %v1693, 4
      %v1731 = vsel %vm1534, %v1730, %v1681
      %v1732 = vrot.slane %v1681, 4
      %v1733 = vsel %vm1534, %v1693, %v1732
      %v1735 = vunpack.c.l.s4 1934713408
      %v1736 = vunpack.c.0.s8 %v1735
      %v1737 = vperm.slane %v1731, %v1736
      %v1739 = vunpack.c.l.s4 1934713408
      %v1740 = vunpack.c.0.s8 %v1739
      %v1741 = vperm.slane %v1733, %v1740
      %v1742 = vrot.slane %v1725, 4
      %v1743 = vsel %vm1534, %v1742, %v1701
      %v1744 = vrot.slane %v1701, 4
      %v1745 = vsel %vm1534, %v1725, %v1744
      %v1746 = vrot.slane %v1729, 4
      %v1747 = vsel %vm1534, %v1746, %v1705
      %v1748 = vrot.slane %v1705, 4
      %v1749 = vsel %vm1534, %v1729, %v1748
      %v1750 = vrot.slane %v1737, 4
      %v1751 = vsel %vm1534, %v1750, %v1713
      %v1752 = vrot.slane %v1713, 4
      %v1753 = vsel %vm1534, %v1737, %v1752
      %v1754 = vrot.slane %v1741, 4
      %v1755 = vsel %vm1534, %v1754, %v1717
      %v1756 = vrot.slane %v1717, 4
      %v1757 = vsel %vm1534, %v1741, %v1756
      %v1758 = vrot.slane %v1318, 4
      %v1759 = vsel %vm1534, %v1758, %v1290
      %v1760 = vrot.slane %v1290, 4
      %v1761 = vsel %vm1534, %v1318, %v1760
      %v1763 = vunpack.c.l.s4 1983009808
      %v1764 = vunpack.c.0.s8 %v1763
      %v1765 = vperm.slane %v1759, %v1764
      %v1767 = vunpack.c.l.s4 1983009808
      %v1768 = vunpack.c.0.s8 %v1767
      %v1769 = vperm.slane %v1761, %v1768
      %v1770 = vrot.slane %v1332, 4
      %v1771 = vsel %vm1534, %v1770, %v1304
      %v1772 = vrot.slane %v1304, 4
      %v1773 = vsel %vm1534, %v1332, %v1772
      %v1775 = vunpack.c.l.s4 1983009808
      %v1776 = vunpack.c.0.s8 %v1775
      %v1777 = vperm.slane %v1771, %v1776
      %v1779 = vunpack.c.l.s4 1983009808
      %v1780 = vunpack.c.0.s8 %v1779
      %v1781 = vperm.slane %v1773, %v1780
      %v1782 = vrot.slane %v1374, 4
      %v1783 = vsel %vm1534, %v1782, %v1346
      %v1784 = vrot.slane %v1346, 4
      %v1785 = vsel %vm1534, %v1374, %v1784
      %v1787 = vunpack.c.l.s4 1983009808
      %v1788 = vunpack.c.0.s8 %v1787
      %v1789 = vperm.slane %v1783, %v1788
      %v1791 = vunpack.c.l.s4 1983009808
      %v1792 = vunpack.c.0.s8 %v1791
      %v1793 = vperm.slane %v1785, %v1792
      %v1794 = vrot.slane %v1388, 4
      %v1795 = vsel %vm1534, %v1794, %v1360
      %v1796 = vrot.slane %v1360, 4
      %v1797 = vsel %vm1534, %v1388, %v1796
      %v1799 = vunpack.c.l.s4 1983009808
      %v1800 = vunpack.c.0.s8 %v1799
      %v1801 = vperm.slane %v1795, %v1800
      %v1803 = vunpack.c.l.s4 1983009808
      %v1804 = vunpack.c.0.s8 %v1803
      %v1805 = vperm.slane %v1797, %v1804
      %v1806 = vrot.slane %v1777, 4
      %v1807 = vsel %vm1534, %v1806, %v1765
      %v1808 = vrot.slane %v1765, 4
      %v1809 = vsel %vm1534, %v1777, %v1808
      %v1811 = vunpack.c.l.s4 1934713408
      %v1812 = vunpack.c.0.s8 %v1811
      %v1813 = vperm.slane %v1807, %v1812
      %v1815 = vunpack.c.l.s4 1934713408
      %v1816 = vunpack.c.0.s8 %v1815
      %v1817 = vperm.slane %v1809, %v1816
      %v1818 = vrot.slane %v1781, 4
      %v1819 = vsel %vm1534, %v1818, %v1769
      %v1820 = vrot.slane %v1769, 4
      %v1821 = vsel %vm1534, %v1781, %v1820
      %v1823 = vunpack.c.l.s4 1934713408
      %v1824 = vunpack.c.0.s8 %v1823
      %v1825 = vperm.slane %v1819, %v1824
      %v1827 = vunpack.c.l.s4 1934713408
      %v1828 = vunpack.c.0.s8 %v1827
      %v1829 = vperm.slane %v1821, %v1828
      %v1830 = vrot.slane %v1801, 4
      %v1831 = vsel %vm1534, %v1830, %v1789
      %v1832 = vrot.slane %v1789, 4
      %v1833 = vsel %vm1534, %v1801, %v1832
      %v1835 = vunpack.c.l.s4 1934713408
      %v1836 = vunpack.c.0.s8 %v1835
      %v1837 = vperm.slane %v1831, %v1836
      %v1839 = vunpack.c.l.s4 1934713408
      %v1840 = vunpack.c.0.s8 %v1839
      %v1841 = vperm.slane %v1833, %v1840
      %v1842 = vrot.slane %v1805, 4
      %v1843 = vsel %vm1534, %v1842, %v1793
      %v1844 = vrot.slane %v1793, 4
      %v1845 = vsel %vm1534, %v1805, %v1844
      %v1847 = vunpack.c.l.s4 1934713408
      %v1848 = vunpack.c.0.s8 %v1847
      %v1849 = vperm.slane %v1843, %v1848
      %v1851 = vunpack.c.l.s4 1934713408
      %v1852 = vunpack.c.0.s8 %v1851
      %v1853 = vperm.slane %v1845, %v1852
      %v1854 = vrot.slane %v1837, 4
      %v1855 = vsel %vm1534, %v1854, %v1813
      %v1856 = vrot.slane %v1813, 4
      %v1857 = vsel %vm1534, %v1837, %v1856
      %v1858 = vrot.slane %v1841, 4
      %v1859 = vsel %vm1534, %v1858, %v1817
      %v1860 = vrot.slane %v1817, 4
      %v1861 = vsel %vm1534, %v1841, %v1860
      %v1862 = vrot.slane %v1849, 4
      %v1863 = vsel %vm1534, %v1862, %v1825
      %v1864 = vrot.slane %v1825, 4
      %v1865 = vsel %vm1534, %v1849, %v1864
      %v1866 = vrot.slane %v1853, 4
      %v1867 = vsel %vm1534, %v1866, %v1829
      %v1868 = vrot.slane %v1829, 4
      %v1869 = vsel %vm1534, %v1853, %v1868
      %v1870 = vrot.slane %v1430, 4
      %v1871 = vsel %vm1534, %v1870, %v1402
      %v1872 = vrot.slane %v1402, 4
      %v1873 = vsel %vm1534, %v1430, %v1872
      %v1875 = vunpack.c.l.s4 1983009808
      %v1876 = vunpack.c.0.s8 %v1875
      %v1877 = vperm.slane %v1871, %v1876
      %v1879 = vunpack.c.l.s4 1983009808
      %v1880 = vunpack.c.0.s8 %v1879
      %v1881 = vperm.slane %v1873, %v1880
      %v1882 = vrot.slane %v1444, 4
      %v1883 = vsel %vm1534, %v1882, %v1416
      %v1884 = vrot.slane %v1416, 4
      %v1885 = vsel %vm1534, %v1444, %v1884
      %v1887 = vunpack.c.l.s4 1983009808
      %v1888 = vunpack.c.0.s8 %v1887
      %v1889 = vperm.slane %v1883, %v1888
      %v1891 = vunpack.c.l.s4 1983009808
      %v1892 = vunpack.c.0.s8 %v1891
      %v1893 = vperm.slane %v1885, %v1892
      %v1894 = vrot.slane %v1486, 4
      %v1895 = vsel %vm1534, %v1894, %v1458
      %v1896 = vrot.slane %v1458, 4
      %v1897 = vsel %vm1534, %v1486, %v1896
      %v1899 = vunpack.c.l.s4 1983009808
      %v1900 = vunpack.c.0.s8 %v1899
      %v1901 = vperm.slane %v1895, %v1900
      %v1903 = vunpack.c.l.s4 1983009808
      %v1904 = vunpack.c.0.s8 %v1903
      %v1905 = vperm.slane %v1897, %v1904
      %v1906 = vrot.slane %v1500, 4
      %v1907 = vsel %vm1534, %v1906, %v1472
      %v1908 = vrot.slane %v1472, 4
      %v1909 = vsel %vm1534, %v1500, %v1908
      %v1911 = vunpack.c.l.s4 1983009808
      %v1912 = vunpack.c.0.s8 %v1911
      %v1913 = vperm.slane %v1907, %v1912
      %v1915 = vunpack.c.l.s4 1983009808
      %v1916 = vunpack.c.0.s8 %v1915
      %v1917 = vperm.slane %v1909, %v1916
      %v1918 = vrot.slane %v1889, 4
      %v1919 = vsel %vm1534, %v1918, %v1877
      %v1920 = vrot.slane %v1877, 4
      %v1921 = vsel %vm1534, %v1889, %v1920
      %v1923 = vunpack.c.l.s4 1934713408
      %v1924 = vunpack.c.0.s8 %v1923
      %v1925 = vperm.slane %v1919, %v1924
      %v1927 = vunpack.c.l.s4 1934713408
      %v1928 = vunpack.c.0.s8 %v1927
      %v1929 = vperm.slane %v1921, %v1928
      %v1930 = vrot.slane %v1893, 4
      %v1931 = vsel %vm1534, %v1930, %v1881
      %v1932 = vrot.slane %v1881, 4
      %v1933 = vsel %vm1534, %v1893, %v1932
      %v1935 = vunpack.c.l.s4 1934713408
      %v1936 = vunpack.c.0.s8 %v1935
      %v1937 = vperm.slane %v1931, %v1936
      %v1939 = vunpack.c.l.s4 1934713408
      %v1940 = vunpack.c.0.s8 %v1939
      %v1941 = vperm.slane %v1933, %v1940
      %v1942 = vrot.slane %v1913, 4
      %v1943 = vsel %vm1534, %v1942, %v1901
      %v1944 = vrot.slane %v1901, 4
      %v1945 = vsel %vm1534, %v1913, %v1944
      %v1947 = vunpack.c.l.s4 1934713408
      %v1948 = vunpack.c.0.s8 %v1947
      %v1949 = vperm.slane %v1943, %v1948
      %v1951 = vunpack.c.l.s4 1934713408
      %v1952 = vunpack.c.0.s8 %v1951
      %v1953 = vperm.slane %v1945, %v1952
      %v1954 = vrot.slane %v1917, 4
      %v1955 = vsel %vm1534, %v1954, %v1905
      %v1956 = vrot.slane %v1905, 4
      %v1957 = vsel %vm1534, %v1917, %v1956
      %v1959 = vunpack.c.l.s4 1934713408
      %v1960 = vunpack.c.0.s8 %v1959
      %v1961 = vperm.slane %v1955, %v1960
      %v1963 = vunpack.c.l.s4 1934713408
      %v1964 = vunpack.c.0.s8 %v1963
      %v1965 = vperm.slane %v1957, %v1964
      %v1966 = vrot.slane %v1949, 4
      %v1967 = vsel %vm1534, %v1966, %v1925
      %v1968 = vrot.slane %v1925, 4
      %v1969 = vsel %vm1534, %v1949, %v1968
      %v1970 = vrot.slane %v1953, 4
      %v1971 = vsel %vm1534, %v1970, %v1929
      %v1972 = vrot.slane %v1929, 4
      %v1973 = vsel %vm1534, %v1953, %v1972
      %v1974 = vrot.slane %v1961, 4
      %v1975 = vsel %vm1534, %v1974, %v1937
      %v1976 = vrot.slane %v1937, 4
      %v1977 = vsel %vm1534, %v1961, %v1976
      %v1978 = vrot.slane %v1965, 4
      %v1979 = vsel %vm1534, %v1978, %v1941
      %v1980 = vrot.slane %v1941, 4
      %v1981 = vsel %vm1534, %v1965, %v1980
      %vm1982 = vcmask 15360
      %v1983 = vsel %vm1982, %v1631, -inf
      %1984 = vmax.xlane.f32.xlu0 %v1983
      %v1985 = vpop.xlane.xlu0 %1984
      %v1986 = vsel %vm1982, %v1633, -inf
      %1987 = vmax.xlane.f32.xlu0 %v1986
      %v1988 = vpop.xlane.xlu0 %1987
      %v1989 = vsel %vm1982, %v1635, -inf
      %1990 = vmax.xlane.f32.xlu0 %v1989
      %v1991 = vpop.xlane.xlu0 %1990
      %v1992 = vsel %vm1982, %v1637, -inf
      %1993 = vmax.xlane.f32.xlu0 %v1992
      %v1994 = vpop.xlane.xlu0 %1993
      %v1995 = vsel %vm1982, %v1639, -inf
      %1996 = vmax.xlane.f32.xlu0 %v1995
      %v1997 = vpop.xlane.xlu0 %1996
      %v1998 = vsel %vm1982, %v1641, -inf
      %1999 = vmax.xlane.f32.xlu0 %v1998
      %v2000 = vpop.xlane.xlu0 %1999
      %v2001 = vsel %vm1982, %v1643, -inf
      %2002 = vmax.xlane.f32.xlu0 %v2001
      %v2003 = vpop.xlane.xlu0 %2002
      %v2004 = vsel %vm1982, %v1645, -inf
      %2005 = vmax.xlane.f32.xlu0 %v2004
      %v2006 = vpop.xlane.xlu0 %2005
      %v2007 = vsel %vm1982, %v1743, -inf
      %2008 = vmax.xlane.f32.xlu0 %v2007
      %v2009 = vpop.xlane.xlu0 %2008
      %v2010 = vsel %vm1982, %v1745, -inf
      %2011 = vmax.xlane.f32.xlu0 %v2010
      %v2012 = vpop.xlane.xlu0 %2011
      %v2013 = vsel %vm1982, %v1747, -inf
      %2014 = vmax.xlane.f32.xlu0 %v2013
      %v2015 = vpop.xlane.xlu0 %2014
      %v2016 = vsel %vm1982, %v1749, -inf
      %2017 = vmax.xlane.f32.xlu0 %v2016
      %v2018 = vpop.xlane.xlu0 %2017
      %v2019 = vsel %vm1982, %v1751, -inf
      %2020 = vmax.xlane.f32.xlu0 %v2019
      %v2021 = vpop.xlane.xlu0 %2020
      %v2022 = vsel %vm1982, %v1753, -inf
      %2023 = vmax.xlane.f32.xlu0 %v2022
      %v2024 = vpop.xlane.xlu0 %2023
      %v2025 = vsel %vm1982, %v1755, -inf
      %2026 = vmax.xlane.f32.xlu0 %v2025
      %v2027 = vpop.xlane.xlu0 %2026
      %v2028 = vsel %vm1982, %v1757, -inf
      %2029 = vmax.xlane.f32.xlu0 %v2028
      %v2030 = vpop.xlane.xlu0 %2029
      %v2031 = vsel %vm1982, %v1855, -inf
      %2032 = vmax.xlane.f32.xlu0 %v2031
      %v2033 = vpop.xlane.xlu0 %2032
      %v2034 = vsel %vm1982, %v1857, -inf
      %2035 = vmax.xlane.f32.xlu0 %v2034
      %v2036 = vpop.xlane.xlu0 %2035
      %v2037 = vsel %vm1982, %v1859, -inf
      %2038 = vmax.xlane.f32.xlu0 %v2037
      %v2039 = vpop.xlane.xlu0 %2038
      %v2040 = vsel %vm1982, %v1861, -inf
      %2041 = vmax.xlane.f32.xlu0 %v2040
      %v2042 = vpop.xlane.xlu0 %2041
      %v2043 = vsel %vm1982, %v1863, -inf
      %2044 = vmax.xlane.f32.xlu0 %v2043
      %v2045 = vpop.xlane.xlu0 %2044
      %v2046 = vsel %vm1982, %v1865, -inf
      %2047 = vmax.xlane.f32.xlu0 %v2046
      %v2048 = vpop.xlane.xlu0 %2047
      %v2049 = vsel %vm1982, %v1867, -inf
      %2050 = vmax.xlane.f32.xlu0 %v2049
      %v2051 = vpop.xlane.xlu0 %2050
      %v2052 = vsel %vm1982, %v1869, -inf
      %2053 = vmax.xlane.f32.xlu0 %v2052
      %v2054 = vpop.xlane.xlu0 %2053
      %v2055 = vsel %vm1982, %v1967, -inf
      %2056 = vmax.xlane.f32.xlu0 %v2055
      %v2057 = vpop.xlane.xlu0 %2056
      %v2058 = vsel %vm1982, %v1969, -inf
      %2059 = vmax.xlane.f32.xlu0 %v2058
      %v2060 = vpop.xlane.xlu0 %2059
      %v2061 = vsel %vm1982, %v1971, -inf
      %2062 = vmax.xlane.f32.xlu0 %v2061
      %v2063 = vpop.xlane.xlu0 %2062
      %v2064 = vsel %vm1982, %v1973, -inf
      %2065 = vmax.xlane.f32.xlu0 %v2064
      %v2066 = vpop.xlane.xlu0 %2065
      %v2067 = vsel %vm1982, %v1975, -inf
      %2068 = vmax.xlane.f32.xlu0 %v2067
      %v2069 = vpop.xlane.xlu0 %2068
      %v2070 = vsel %vm1982, %v1977, -inf
      %2071 = vmax.xlane.f32.xlu0 %v2070
      %v2072 = vpop.xlane.xlu0 %2071
      %v2073 = vsel %vm1982, %v1979, -inf
      %2074 = vmax.xlane.f32.xlu0 %v2073
      %v2075 = vpop.xlane.xlu0 %2074
      %v2076 = vsel %vm1982, %v1981, -inf
      %2077 = vmax.xlane.f32.xlu0 %v2076
      %v2078 = vpop.xlane.xlu0 %2077
      %v2111 = vlaneseq
      %v2112 = vand.u32 %v2111, 127
      %v2113 = vadd.s32 %v2112, 4294967295
      %v2114 = vperm.slane %v1985, %v2113
      %v2115 = vperm.slane %v1988, %v2113
      %v2116 = vperm.slane %v1991, %v2113
      %v2117 = vperm.slane %v1994, %v2113
      %v2118 = vperm.slane %v1997, %v2113
      %v2119 = vperm.slane %v2000, %v2113
      %v2120 = vperm.slane %v2003, %v2113
      %v2121 = vperm.slane %v2006, %v2113
      %v2122 = vperm.slane %v2009, %v2113
      %v2123 = vperm.slane %v2012, %v2113
      %v2124 = vperm.slane %v2015, %v2113
      %v2125 = vperm.slane %v2018, %v2113
      %v2126 = vperm.slane %v2021, %v2113
      %v2127 = vperm.slane %v2024, %v2113
      %v2128 = vperm.slane %v2027, %v2113
      %v2129 = vperm.slane %v2030, %v2113
      %v2130 = vperm.slane %v2033, %v2113
      %v2131 = vperm.slane %v2036, %v2113
      %v2132 = vperm.slane %v2039, %v2113
      %v2133 = vperm.slane %v2042, %v2113
      %v2134 = vperm.slane %v2045, %v2113
      %v2135 = vperm.slane %v2048, %v2113
      %v2136 = vperm.slane %v2051, %v2113
      %v2137 = vperm.slane %v2054, %v2113
      %v2138 = vperm.slane %v2057, %v2113
      %v2139 = vperm.slane %v2060, %v2113
      %v2140 = vperm.slane %v2063, %v2113
      %v2141 = vperm.slane %v2066, %v2113
      %v2142 = vperm.slane %v2069, %v2113
      %v2143 = vperm.slane %v2072, %v2113
      %v2144 = vperm.slane %v2075, %v2113
      %v2145 = vperm.slane %v2078, %v2113
      %v2146 = vsel %vm1047, %v2115, %v2114
      %v2147 = vsel %vm1050, %v2116, %v2146
      %v2148 = vsel %vm1053, %v2117, %v2147
      %v2149 = vsel %vm1056, %v2118, %v2148
      %v2150 = vsel %vm1059, %v2119, %v2149
      %v2151 = vsel %vm1062, %v2120, %v2150
      %v2152 = vsel %vm1065, %v2121, %v2151
      %v2153 = vsel %vm1047, %v2123, %v2122
      %v2154 = vsel %vm1050, %v2124, %v2153
      %v2155 = vsel %vm1053, %v2125, %v2154
      %v2156 = vsel %vm1056, %v2126, %v2155
      %v2157 = vsel %vm1059, %v2127, %v2156
      %v2158 = vsel %vm1062, %v2128, %v2157
      %v2159 = vsel %vm1065, %v2129, %v2158
      %v2160 = vsel %vm1047, %v2131, %v2130
      %v2161 = vsel %vm1050, %v2132, %v2160
      %v2162 = vsel %vm1053, %v2133, %v2161
      %v2163 = vsel %vm1056, %v2134, %v2162
      %v2164 = vsel %vm1059, %v2135, %v2163
      %v2165 = vsel %vm1062, %v2136, %v2164
      %v2166 = vsel %vm1065, %v2137, %v2165
      %v2167 = vsel %vm1047, %v2139, %v2138
      %v2168 = vsel %vm1050, %v2140, %v2167
      %v2169 = vsel %vm1053, %v2141, %v2168
      %v2170 = vsel %vm1056, %v2142, %v2169
      %v2171 = vsel %vm1059, %v2143, %v2170
      %v2172 = vsel %vm1062, %v2144, %v2171
      %v2173 = vsel %vm1065, %v2145, %v2172
      %vm2178 = vcmask 7168
      %v2179 = vsel %vm2178, 0.0, %v2152
      %v2180 = vsel %vm2178, 0.0, %v2159
      %v2181 = vsel %vm2178, 0.0, %v2166
      %v2182 = vsel %vm2178, 0.0, %v2173
      %vm2183 = vcmask 72704
      %v2184 = vsel %vm2183, %v2179, 0.0
      %v2185 = vsel %vm2183, %v2180, 0.0
      %v2186 = vsel %vm2183, %v2181, 0.0
      %v2187 = vsel %vm2183, %v2182, 0.0
      %v2192 = vrot.slane %v2184, 7
      %v2193 = vrot.slane %v2185, 7
      %v2194 = vrot.slane %v2186, 7
      %v2195 = vrot.slane %v2187, 7
      %vm2200 = vcmask 1040384
      %v2201 = vsel %vm2200, 0.0, %v2192
      %v2202 = vsel %vm2200, 0.0, %v2193
      %v2203 = vsel %vm2200, 0.0, %v2194
      %v2204 = vsel %vm2200, 0.0, %v2195
      %v2205 = vsel %vm2200, %v2192, 0.0
      %v2206 = vsel %vm2200, %v2193, 0.0
      %v2207 = vsel %vm2200, %v2194, 0.0
      %v2208 = vsel %vm2200, %v2195, 0.0
      %2213 = vrot.lane.b32.xlu0 %v2201, 127
      %v2214 = vpop.permute.xlu0 %2213
      %2215 = vrot.lane.b32.xlu0 %v2202, 127
      %v2216 = vpop.permute.xlu0 %2215
      %2217 = vrot.lane.b32.xlu0 %v2203, 127
      %v2218 = vpop.permute.xlu0 %2217
      %2219 = vrot.lane.b32.xlu0 %v2204, 127
      %v2220 = vpop.permute.xlu0 %2219
      %2225 = vrot.lane.b32.xlu0 %v2201, 126
      %v2226 = vpop.permute.xlu0 %2225
      %2227 = vrot.lane.b32.xlu0 %v2202, 126
      %v2228 = vpop.permute.xlu0 %2227
      %2229 = vrot.lane.b32.xlu0 %v2203, 126
      %v2230 = vpop.permute.xlu0 %2229
      %2231 = vrot.lane.b32.xlu0 %v2204, 126
      %v2232 = vpop.permute.xlu0 %2231
      %vm2241 = vcmask 1046528
      %v2242 = vrot.slane %v2201, 1
      %v2243 = vrot.slane %v2205, 1
      %v2244 = vsel %vm2241, %v2242, %v2243
      %v2245 = vrot.slane %v2202, 1
      %v2246 = vrot.slane %v2206, 1
      %v2247 = vsel %vm2241, %v2245, %v2246
      %v2248 = vrot.slane %v2203, 1
      %v2249 = vrot.slane %v2207, 1
      %v2250 = vsel %vm2241, %v2248, %v2249
      %v2251 = vrot.slane %v2204, 1
      %v2252 = vrot.slane %v2208, 1
      %v2253 = vsel %vm2241, %v2251, %v2252
      %2258 = vrot.lane.b32.xlu0 %v2244, 127
      %v2259 = vpop.permute.xlu0 %2258
      %2260 = vrot.lane.b32.xlu0 %v2247, 127
      %v2261 = vpop.permute.xlu0 %2260
      %2262 = vrot.lane.b32.xlu0 %v2250, 127
      %v2263 = vpop.permute.xlu0 %2262
      %2264 = vrot.lane.b32.xlu0 %v2253, 127
      %v2265 = vpop.permute.xlu0 %2264
      %2270 = vrot.lane.b32.xlu0 %v2244, 126
      %v2271 = vpop.permute.xlu0 %2270
      %2272 = vrot.lane.b32.xlu0 %v2247, 126
      %v2273 = vpop.permute.xlu0 %2272
      %2274 = vrot.lane.b32.xlu0 %v2250, 126
      %v2275 = vpop.permute.xlu0 %2274
      %2276 = vrot.lane.b32.xlu0 %v2253, 126
      %v2277 = vpop.permute.xlu0 %2276
      %vm2282 = vcmask 1045504
      %v2283 = vrot.slane %v2201, 2
      %v2284 = vrot.slane %v2205, 2
      %v2285 = vsel %vm2282, %v2283, %v2284
      %v2286 = vrot.slane %v2202, 2
      %v2287 = vrot.slane %v2206, 2
      %v2288 = vsel %vm2282, %v2286, %v2287
      %v2289 = vrot.slane %v2203, 2
      %v2290 = vrot.slane %v2207, 2
      %v2291 = vsel %vm2282, %v2289, %v2290
      %v2292 = vrot.slane %v2204, 2
      %v2293 = vrot.slane %v2208, 2
      %v2294 = vsel %vm2282, %v2292, %v2293
      %2299 = vrot.lane.b32.xlu0 %v2285, 127
      %v2300 = vpop.permute.xlu0 %2299
      %2301 = vrot.lane.b32.xlu0 %v2288, 127
      %v2302 = vpop.permute.xlu0 %2301
      %2303 = vrot.lane.b32.xlu0 %v2291, 127
      %v2304 = vpop.permute.xlu0 %2303
      %2305 = vrot.lane.b32.xlu0 %v2294, 127
      %v2306 = vpop.permute.xlu0 %2305
      %2311 = vrot.lane.b32.xlu0 %v2285, 126
      %v2312 = vpop.permute.xlu0 %2311
      %2313 = vrot.lane.b32.xlu0 %v2288, 126
      %v2314 = vpop.permute.xlu0 %2313
      %2315 = vrot.lane.b32.xlu0 %v2291, 126
      %v2316 = vpop.permute.xlu0 %2315
      %2317 = vrot.lane.b32.xlu0 %v2294, 126
      %v2318 = vpop.permute.xlu0 %2317
      %v2323 = vrot.slane %v2203, 4
      %v2324 = vsel %vm1534, %v2323, %v2201
      %v2325 = vrot.slane %v2201, 4
      %v2326 = vsel %vm1534, %v2203, %v2325
      %v2328 = vunpack.c.l.s4 1983009808
      %v2329 = vunpack.c.0.s8 %v2328
      %v2330 = vperm.slane %v2324, %v2329
      %v2332 = vunpack.c.l.s4 1983009808
      %v2333 = vunpack.c.0.s8 %v2332
      %v2334 = vperm.slane %v2326, %v2333
      %v2335 = vrot.slane %v2204, 4
      %v2336 = vsel %vm1534, %v2335, %v2202
      %v2337 = vrot.slane %v2202, 4
      %v2338 = vsel %vm1534, %v2204, %v2337
      %v2340 = vunpack.c.l.s4 1983009808
      %v2341 = vunpack.c.0.s8 %v2340
      %v2342 = vperm.slane %v2336, %v2341
      %v2344 = vunpack.c.l.s4 1983009808
      %v2345 = vunpack.c.0.s8 %v2344
      %v2346 = vperm.slane %v2338, %v2345
      %v2347 = vrot.slane %v2218, 4
      %v2348 = vsel %vm1534, %v2347, %v2214
      %v2349 = vrot.slane %v2214, 4
      %v2350 = vsel %vm1534, %v2218, %v2349
      %v2352 = vunpack.c.l.s4 1983009808
      %v2353 = vunpack.c.0.s8 %v2352
      %v2354 = vperm.slane %v2348, %v2353
      %v2356 = vunpack.c.l.s4 1983009808
      %v2357 = vunpack.c.0.s8 %v2356
      %v2358 = vperm.slane %v2350, %v2357
      %v2359 = vrot.slane %v2220, 4
      %v2360 = vsel %vm1534, %v2359, %v2216
      %v2361 = vrot.slane %v2216, 4
      %v2362 = vsel %vm1534, %v2220, %v2361
      %v2364 = vunpack.c.l.s4 1983009808
      %v2365 = vunpack.c.0.s8 %v2364
      %v2366 = vperm.slane %v2360, %v2365
      %v2368 = vunpack.c.l.s4 1983009808
      %v2369 = vunpack.c.0.s8 %v2368
      %v2370 = vperm.slane %v2362, %v2369
      %v2371 = vrot.slane %v2342, 4
      %v2372 = vsel %vm1534, %v2371, %v2330
      %v2373 = vrot.slane %v2330, 4
      %v2374 = vsel %vm1534, %v2342, %v2373
      %v2376 = vunpack.c.l.s4 1934713408
      %v2377 = vunpack.c.0.s8 %v2376
      %v2378 = vperm.slane %v2372, %v2377
      %v2380 = vunpack.c.l.s4 1934713408
      %v2381 = vunpack.c.0.s8 %v2380
      %v2382 = vperm.slane %v2374, %v2381
      %v2383 = vrot.slane %v2346, 4
      %v2384 = vsel %vm1534, %v2383, %v2334
      %v2385 = vrot.slane %v2334, 4
      %v2386 = vsel %vm1534, %v2346, %v2385
      %v2388 = vunpack.c.l.s4 1934713408
      %v2389 = vunpack.c.0.s8 %v2388
      %v2390 = vperm.slane %v2384, %v2389
      %v2392 = vunpack.c.l.s4 1934713408
      %v2393 = vunpack.c.0.s8 %v2392
      %v2394 = vperm.slane %v2386, %v2393
      %v2395 = vrot.slane %v2366, 4
      %v2396 = vsel %vm1534, %v2395, %v2354
      %v2397 = vrot.slane %v2354, 4
      %v2398 = vsel %vm1534, %v2366, %v2397
      %v2400 = vunpack.c.l.s4 1934713408
      %v2401 = vunpack.c.0.s8 %v2400
      %v2402 = vperm.slane %v2396, %v2401
      %v2404 = vunpack.c.l.s4 1934713408
      %v2405 = vunpack.c.0.s8 %v2404
      %v2406 = vperm.slane %v2398, %v2405
      %v2407 = vrot.slane %v2370, 4
      %v2408 = vsel %vm1534, %v2407, %v2358
      %v2409 = vrot.slane %v2358, 4
      %v2410 = vsel %vm1534, %v2370, %v2409
      %v2412 = vunpack.c.l.s4 1934713408
      %v2413 = vunpack.c.0.s8 %v2412
      %v2414 = vperm.slane %v2408, %v2413
      %v2416 = vunpack.c.l.s4 1934713408
      %v2417 = vunpack.c.0.s8 %v2416
      %v2418 = vperm.slane %v2410, %v2417
      %v2419 = vrot.slane %v2402, 4
      %v2420 = vsel %vm1534, %v2419, %v2378
      %v2421 = vrot.slane %v2378, 4
      %v2422 = vsel %vm1534, %v2402, %v2421
      %v2423 = vrot.slane %v2406, 4
      %v2424 = vsel %vm1534, %v2423, %v2382
      %v2425 = vrot.slane %v2382, 4
      %v2426 = vsel %vm1534, %v2406, %v2425
      %v2427 = vrot.slane %v2414, 4
      %v2428 = vsel %vm1534, %v2427, %v2390
      %v2429 = vrot.slane %v2390, 4
      %v2430 = vsel %vm1534, %v2414, %v2429
      %v2431 = vrot.slane %v2418, 4
      %v2432 = vsel %vm1534, %v2431, %v2394
      %v2433 = vrot.slane %v2394, 4
      %v2434 = vsel %vm1534, %v2418, %v2433
      %v2435 = vrot.slane %v2230, 4
      %v2436 = vsel %vm1534, %v2435, %v2226
      %v2437 = vrot.slane %v2226, 4
      %v2438 = vsel %vm1534, %v2230, %v2437
      %v2440 = vunpack.c.l.s4 1983009808
      %v2441 = vunpack.c.0.s8 %v2440
      %v2442 = vperm.slane %v2436, %v2441
      %v2444 = vunpack.c.l.s4 1983009808
      %v2445 = vunpack.c.0.s8 %v2444
      %v2446 = vperm.slane %v2438, %v2445
      %v2447 = vrot.slane %v2232, 4
      %v2448 = vsel %vm1534, %v2447, %v2228
      %v2449 = vrot.slane %v2228, 4
      %v2450 = vsel %vm1534, %v2232, %v2449
      %v2452 = vunpack.c.l.s4 1983009808
      %v2453 = vunpack.c.0.s8 %v2452
      %v2454 = vperm.slane %v2448, %v2453
      %v2456 = vunpack.c.l.s4 1983009808
      %v2457 = vunpack.c.0.s8 %v2456
      %v2458 = vperm.slane %v2450, %v2457
      %v2459 = vrot.slane %v2250, 4
      %v2460 = vsel %vm1534, %v2459, %v2244
      %v2461 = vrot.slane %v2244, 4
      %v2462 = vsel %vm1534, %v2250, %v2461
      %v2464 = vunpack.c.l.s4 1983009808
      %v2465 = vunpack.c.0.s8 %v2464
      %v2466 = vperm.slane %v2460, %v2465
      %v2468 = vunpack.c.l.s4 1983009808
      %v2469 = vunpack.c.0.s8 %v2468
      %v2470 = vperm.slane %v2462, %v2469
      %v2471 = vrot.slane %v2253, 4
      %v2472 = vsel %vm1534, %v2471, %v2247
      %v2473 = vrot.slane %v2247, 4
      %v2474 = vsel %vm1534, %v2253, %v2473
      %v2476 = vunpack.c.l.s4 1983009808
      %v2477 = vunpack.c.0.s8 %v2476
      %v2478 = vperm.slane %v2472, %v2477
      %v2480 = vunpack.c.l.s4 1983009808
      %v2481 = vunpack.c.0.s8 %v2480
      %v2482 = vperm.slane %v2474, %v2481
      %v2483 = vrot.slane %v2454, 4
      %v2484 = vsel %vm1534, %v2483, %v2442
      %v2485 = vrot.slane %v2442, 4
      %v2486 = vsel %vm1534, %v2454, %v2485
      %v2488 = vunpack.c.l.s4 1934713408
      %v2489 = vunpack.c.0.s8 %v2488
      %v2490 = vperm.slane %v2484, %v2489
      %v2492 = vunpack.c.l.s4 1934713408
      %v2493 = vunpack.c.0.s8 %v2492
      %v2494 = vperm.slane %v2486, %v2493
      %v2495 = vrot.slane %v2458, 4
      %v2496 = vsel %vm1534, %v2495, %v2446
      %v2497 = vrot.slane %v2446, 4
      %v2498 = vsel %vm1534, %v2458, %v2497
      %v2500 = vunpack.c.l.s4 1934713408
      %v2501 = vunpack.c.0.s8 %v2500
      %v2502 = vperm.slane %v2496, %v2501
      %v2504 = vunpack.c.l.s4 1934713408
      %v2505 = vunpack.c.0.s8 %v2504
      %v2506 = vperm.slane %v2498, %v2505
      %v2507 = vrot.slane %v2478, 4
      %v2508 = vsel %vm1534, %v2507, %v2466
      %v2509 = vrot.slane %v2466, 4
      %v2510 = vsel %vm1534, %v2478, %v2509
      %v2512 = vunpack.c.l.s4 1934713408
      %v2513 = vunpack.c.0.s8 %v2512
      %v2514 = vperm.slane %v2508, %v2513
      %v2516 = vunpack.c.l.s4 1934713408
      %v2517 = vunpack.c.0.s8 %v2516
      %v2518 = vperm.slane %v2510, %v2517
      %v2519 = vrot.slane %v2482, 4
      %v2520 = vsel %vm1534, %v2519, %v2470
      %v2521 = vrot.slane %v2470, 4
      %v2522 = vsel %vm1534, %v2482, %v2521
      %v2524 = vunpack.c.l.s4 1934713408
      %v2525 = vunpack.c.0.s8 %v2524
      %v2526 = vperm.slane %v2520, %v2525
      %v2528 = vunpack.c.l.s4 1934713408
      %v2529 = vunpack.c.0.s8 %v2528
      %v2530 = vperm.slane %v2522, %v2529
      %v2531 = vrot.slane %v2514, 4
      %v2532 = vsel %vm1534, %v2531, %v2490
      %v2533 = vrot.slane %v2490, 4
      %v2534 = vsel %vm1534, %v2514, %v2533
      %v2535 = vrot.slane %v2518, 4
      %v2536 = vsel %vm1534, %v2535, %v2494
      %v2537 = vrot.slane %v2494, 4
      %v2538 = vsel %vm1534, %v2518, %v2537
      %v2539 = vrot.slane %v2526, 4
      %v2540 = vsel %vm1534, %v2539, %v2502
      %v2541 = vrot.slane %v2502, 4
      %v2542 = vsel %vm1534, %v2526, %v2541
      %v2543 = vrot.slane %v2530, 4
      %v2544 = vsel %vm1534, %v2543, %v2506
      %v2545 = vrot.slane %v2506, 4
      %v2546 = vsel %vm1534, %v2530, %v2545
      %v2547 = vrot.slane %v2263, 4
      %v2548 = vsel %vm1534, %v2547, %v2259
      %v2549 = vrot.slane %v2259, 4
      %v2550 = vsel %vm1534, %v2263, %v2549
      %v2552 = vunpack.c.l.s4 1983009808
      %v2553 = vunpack.c.0.s8 %v2552
      %v2554 = vperm.slane %v2548, %v2553
      %v2556 = vunpack.c.l.s4 1983009808
      %v2557 = vunpack.c.0.s8 %v2556
      %v2558 = vperm.slane %v2550, %v2557
      %v2559 = vrot.slane %v2265, 4
      %v2560 = vsel %vm1534, %v2559, %v2261
      %v2561 = vrot.slane %v2261, 4
      %v2562 = vsel %vm1534, %v2265, %v2561
      %v2564 = vunpack.c.l.s4 1983009808
      %v2565 = vunpack.c.0.s8 %v2564
      %v2566 = vperm.slane %v2560, %v2565
      %v2568 = vunpack.c.l.s4 1983009808
      %v2569 = vunpack.c.0.s8 %v2568
      %v2570 = vperm.slane %v2562, %v2569
      %v2571 = vrot.slane %v2275, 4
      %v2572 = vsel %vm1534, %v2571, %v2271
      %v2573 = vrot.slane %v2271, 4
      %v2574 = vsel %vm1534, %v2275, %v2573
      %v2576 = vunpack.c.l.s4 1983009808
      %v2577 = vunpack.c.0.s8 %v2576
      %v2578 = vperm.slane %v2572, %v2577
      %v2580 = vunpack.c.l.s4 1983009808
      %v2581 = vunpack.c.0.s8 %v2580
      %v2582 = vperm.slane %v2574, %v2581
      %v2583 = vrot.slane %v2277, 4
      %v2584 = vsel %vm1534, %v2583, %v2273
      %v2585 = vrot.slane %v2273, 4
      %v2586 = vsel %vm1534, %v2277, %v2585
      %v2588 = vunpack.c.l.s4 1983009808
      %v2589 = vunpack.c.0.s8 %v2588
      %v2590 = vperm.slane %v2584, %v2589
      %v2592 = vunpack.c.l.s4 1983009808
      %v2593 = vunpack.c.0.s8 %v2592
      %v2594 = vperm.slane %v2586, %v2593
      %v2595 = vrot.slane %v2566, 4
      %v2596 = vsel %vm1534, %v2595, %v2554
      %v2597 = vrot.slane %v2554, 4
      %v2598 = vsel %vm1534, %v2566, %v2597
      %v2600 = vunpack.c.l.s4 1934713408
      %v2601 = vunpack.c.0.s8 %v2600
      %v2602 = vperm.slane %v2596, %v2601
      %v2604 = vunpack.c.l.s4 1934713408
      %v2605 = vunpack.c.0.s8 %v2604
      %v2606 = vperm.slane %v2598, %v2605
      %v2607 = vrot.slane %v2570, 4
      %v2608 = vsel %vm1534, %v2607, %v2558
      %v2609 = vrot.slane %v2558, 4
      %v2610 = vsel %vm1534, %v2570, %v2609
      %v2612 = vunpack.c.l.s4 1934713408
      %v2613 = vunpack.c.0.s8 %v2612
      %v2614 = vperm.slane %v2608, %v2613
      %v2616 = vunpack.c.l.s4 1934713408
      %v2617 = vunpack.c.0.s8 %v2616
      %v2618 = vperm.slane %v2610, %v2617
      %v2619 = vrot.slane %v2590, 4
      %v2620 = vsel %vm1534, %v2619, %v2578
      %v2621 = vrot.slane %v2578, 4
      %v2622 = vsel %vm1534, %v2590, %v2621
      %v2624 = vunpack.c.l.s4 1934713408
      %v2625 = vunpack.c.0.s8 %v2624
      %v2626 = vperm.slane %v2620, %v2625
      %v2628 = vunpack.c.l.s4 1934713408
      %v2629 = vunpack.c.0.s8 %v2628
      %v2630 = vperm.slane %v2622, %v2629
      %v2631 = vrot.slane %v2594, 4
      %v2632 = vsel %vm1534, %v2631, %v2582
      %v2633 = vrot.slane %v2582, 4
      %v2634 = vsel %vm1534, %v2594, %v2633
      %v2636 = vunpack.c.l.s4 1934713408
      %v2637 = vunpack.c.0.s8 %v2636
      %v2638 = vperm.slane %v2632, %v2637
      %v2640 = vunpack.c.l.s4 1934713408
      %v2641 = vunpack.c.0.s8 %v2640
      %v2642 = vperm.slane %v2634, %v2641
      %v2643 = vrot.slane %v2626, 4
      %v2644 = vsel %vm1534, %v2643, %v2602
      %v2645 = vrot.slane %v2602, 4
      %v2646 = vsel %vm1534, %v2626, %v2645
      %v2647 = vrot.slane %v2630, 4
      %v2648 = vsel %vm1534, %v2647, %v2606
      %v2649 = vrot.slane %v2606, 4
      %v2650 = vsel %vm1534, %v2630, %v2649
      %v2651 = vrot.slane %v2638, 4
      %v2652 = vsel %vm1534, %v2651, %v2614
      %v2653 = vrot.slane %v2614, 4
      %v2654 = vsel %vm1534, %v2638, %v2653
      %v2655 = vrot.slane %v2642, 4
      %v2656 = vsel %vm1534, %v2655, %v2618
      %v2657 = vrot.slane %v2618, 4
      %v2658 = vsel %vm1534, %v2642, %v2657
      %v2659 = vrot.slane %v2291, 4
      %v2660 = vsel %vm1534, %v2659, %v2285
      %v2661 = vrot.slane %v2285, 4
      %v2662 = vsel %vm1534, %v2291, %v2661
      %v2664 = vunpack.c.l.s4 1983009808
      %v2665 = vunpack.c.0.s8 %v2664
      %v2666 = vperm.slane %v2660, %v2665
      %v2668 = vunpack.c.l.s4 1983009808
      %v2669 = vunpack.c.0.s8 %v2668
      %v2670 = vperm.slane %v2662, %v2669
      %v2671 = vrot.slane %v2294, 4
      %v2672 = vsel %vm1534, %v2671, %v2288
      %v2673 = vrot.slane %v2288, 4
      %v2674 = vsel %vm1534, %v2294, %v2673
      %v2676 = vunpack.c.l.s4 1983009808
      %v2677 = vunpack.c.0.s8 %v2676
      %v2678 = vperm.slane %v2672, %v2677
      %v2680 = vunpack.c.l.s4 1983009808
      %v2681 = vunpack.c.0.s8 %v2680
      %v2682 = vperm.slane %v2674, %v2681
      %v2683 = vrot.slane %v2304, 4
      %v2684 = vsel %vm1534, %v2683, %v2300
      %v2685 = vrot.slane %v2300, 4
      %v2686 = vsel %vm1534, %v2304, %v2685
      %v2688 = vunpack.c.l.s4 1983009808
      %v2689 = vunpack.c.0.s8 %v2688
      %v2690 = vperm.slane %v2684, %v2689
      %v2692 = vunpack.c.l.s4 1983009808
      %v2693 = vunpack.c.0.s8 %v2692
      %v2694 = vperm.slane %v2686, %v2693
      %v2695 = vrot.slane %v2306, 4
      %v2696 = vsel %vm1534, %v2695, %v2302
      %v2697 = vrot.slane %v2302, 4
      %v2698 = vsel %vm1534, %v2306, %v2697
      %v2700 = vunpack.c.l.s4 1983009808
      %v2701 = vunpack.c.0.s8 %v2700
      %v2702 = vperm.slane %v2696, %v2701
      %v2704 = vunpack.c.l.s4 1983009808
      %v2705 = vunpack.c.0.s8 %v2704
      %v2706 = vperm.slane %v2698, %v2705
      %v2707 = vrot.slane %v2678, 4
      %v2708 = vsel %vm1534, %v2707, %v2666
      %v2709 = vrot.slane %v2666, 4
      %v2710 = vsel %vm1534, %v2678, %v2709
      %v2712 = vunpack.c.l.s4 1934713408
      %v2713 = vunpack.c.0.s8 %v2712
      %v2714 = vperm.slane %v2708, %v2713
      %v2716 = vunpack.c.l.s4 1934713408
      %v2717 = vunpack.c.0.s8 %v2716
      %v2718 = vperm.slane %v2710, %v2717
      %v2719 = vrot.slane %v2682, 4
      %v2720 = vsel %vm1534, %v2719, %v2670
      %v2721 = vrot.slane %v2670, 4
      %v2722 = vsel %vm1534, %v2682, %v2721
      %v2724 = vunpack.c.l.s4 1934713408
      %v2725 = vunpack.c.0.s8 %v2724
      %v2726 = vperm.slane %v2720, %v2725
      %v2728 = vunpack.c.l.s4 1934713408
      %v2729 = vunpack.c.0.s8 %v2728
      %v2730 = vperm.slane %v2722, %v2729
      %v2731 = vrot.slane %v2702, 4
      %v2732 = vsel %vm1534, %v2731, %v2690
      %v2733 = vrot.slane %v2690, 4
      %v2734 = vsel %vm1534, %v2702, %v2733
      %v2736 = vunpack.c.l.s4 1934713408
      %v2737 = vunpack.c.0.s8 %v2736
      %v2738 = vperm.slane %v2732, %v2737
      %v2740 = vunpack.c.l.s4 1934713408
      %v2741 = vunpack.c.0.s8 %v2740
      %v2742 = vperm.slane %v2734, %v2741
      %v2743 = vrot.slane %v2706, 4
      %v2744 = vsel %vm1534, %v2743, %v2694
      %v2745 = vrot.slane %v2694, 4
      %v2746 = vsel %vm1534, %v2706, %v2745
      %v2748 = vunpack.c.l.s4 1934713408
      %v2749 = vunpack.c.0.s8 %v2748
      %v2750 = vperm.slane %v2744, %v2749
      %v2752 = vunpack.c.l.s4 1934713408
      %v2753 = vunpack.c.0.s8 %v2752
      %v2754 = vperm.slane %v2746, %v2753
      %v2755 = vrot.slane %v2738, 4
      %v2756 = vsel %vm1534, %v2755, %v2714
      %v2757 = vrot.slane %v2714, 4
      %v2758 = vsel %vm1534, %v2738, %v2757
      %v2759 = vrot.slane %v2742, 4
      %v2760 = vsel %vm1534, %v2759, %v2718
      %v2761 = vrot.slane %v2718, 4
      %v2762 = vsel %vm1534, %v2742, %v2761
      %v2763 = vrot.slane %v2750, 4
      %v2764 = vsel %vm1534, %v2763, %v2726
      %v2765 = vrot.slane %v2726, 4
      %v2766 = vsel %vm1534, %v2750, %v2765
      %v2767 = vrot.slane %v2754, 4
      %v2768 = vsel %vm1534, %v2767, %v2730
      %v2769 = vrot.slane %v2730, 4
      %v2770 = vsel %vm1534, %v2754, %v2769
      %v2771 = vrot.slane %v2316, 4
      %v2772 = vsel %vm1534, %v2771, %v2312
      %v2773 = vrot.slane %v2312, 4
      %v2774 = vsel %vm1534, %v2316, %v2773
      %v2776 = vunpack.c.l.s4 1983009808
      %v2777 = vunpack.c.0.s8 %v2776
      %v2778 = vperm.slane %v2772, %v2777
      %v2780 = vunpack.c.l.s4 1983009808
      %v2781 = vunpack.c.0.s8 %v2780
      %v2782 = vperm.slane %v2774, %v2781
      %v2783 = vrot.slane %v2318, 4
      %v2784 = vsel %vm1534, %v2783, %v2314
      %v2785 = vrot.slane %v2314, 4
      %v2786 = vsel %vm1534, %v2318, %v2785
      %v2788 = vunpack.c.l.s4 1983009808
      %v2789 = vunpack.c.0.s8 %v2788
      %v2790 = vperm.slane %v2784, %v2789
      %v2792 = vunpack.c.l.s4 1983009808
      %v2793 = vunpack.c.0.s8 %v2792
      %v2794 = vperm.slane %v2786, %v2793
      %v2795 = vrot.slane %v2790, 4
      %v2796 = vsel %vm1534, %v2795, %v2778
      %v2797 = vrot.slane %v2778, 4
      %v2798 = vsel %vm1534, %v2790, %v2797
      %v2800 = vunpack.c.l.s4 1934713408
      %v2801 = vunpack.c.0.s8 %v2800
      %v2802 = vperm.slane %v2796, %v2801
      %v2804 = vunpack.c.l.s4 1934713408
      %v2805 = vunpack.c.0.s8 %v2804
      %v2806 = vperm.slane %v2798, %v2805
      %v2807 = vrot.slane %v2794, 4
      %v2808 = vsel %vm1534, %v2807, %v2782
      %v2809 = vrot.slane %v2782, 4
      %v2810 = vsel %vm1534, %v2794, %v2809
      %v2812 = vunpack.c.l.s4 1934713408
      %v2813 = vunpack.c.0.s8 %v2812
      %v2814 = vperm.slane %v2808, %v2813
      %v2816 = vunpack.c.l.s4 1934713408
      %v2817 = vunpack.c.0.s8 %v2816
      %v2818 = vperm.slane %v2810, %v2817
      %v2819 = vrot.slane %v2802, 4
      %v2820 = vsel %vm1534, 0.0, %v2819
      %v2821 = vrot.slane %v2806, 4
      %v2822 = vsel %vm1534, 0.0, %v2821
      %v2823 = vrot.slane %v2814, 4
      %v2824 = vsel %vm1534, 0.0, %v2823
      %v2825 = vrot.slane %v2818, 4
      %v2826 = vsel %vm1534, 0.0, %v2825
      %2832 = vrot.lane.b32.xlu0 %v2422, 8
      %v2833 = vpop.permute.xlu0 %2832
      %2834 = vrot.lane.b32.xlu0 %v2534, 8
      %v2835 = vpop.permute.xlu0 %2834
      %2836 = vrot.lane.b32.xlu0 %v2646, 8
      %v2837 = vpop.permute.xlu0 %2836
      %2838 = vrot.lane.b32.xlu0 %v2758, 8
      %v2839 = vpop.permute.xlu0 %2838
      %2840 = vrot.lane.b32.xlu0 %v2820, 8
      %v2841 = vpop.permute.xlu0 %2840
      %2852 = vrot.lane.b32.xlu0 %v2424, 16
      %v2853 = vpop.permute.xlu0 %2852
      %2854 = vrot.lane.b32.xlu0 %v2536, 16
      %v2855 = vpop.permute.xlu0 %2854
      %2856 = vrot.lane.b32.xlu0 %v2648, 16
      %v2857 = vpop.permute.xlu0 %2856
      %2858 = vrot.lane.b32.xlu0 %v2760, 16
      %v2859 = vpop.permute.xlu0 %2858
      %2860 = vrot.lane.b32.xlu0 %v2806, 16
      %v2861 = vpop.permute.xlu0 %2860
      %2872 = vrot.lane.b32.xlu0 %v2426, 24
      %v2873 = vpop.permute.xlu0 %2872
      %2874 = vrot.lane.b32.xlu0 %v2538, 24
      %v2875 = vpop.permute.xlu0 %2874
      %2876 = vrot.lane.b32.xlu0 %v2650, 24
      %v2877 = vpop.permute.xlu0 %2876
      %2878 = vrot.lane.b32.xlu0 %v2762, 24
      %v2879 = vpop.permute.xlu0 %2878
      %2880 = vrot.lane.b32.xlu0 %v2822, 24
      %v2881 = vpop.permute.xlu0 %2880
      %2892 = vrot.lane.b32.xlu0 %v2428, 32
      %v2893 = vpop.permute.xlu0 %2892
      %2894 = vrot.lane.b32.xlu0 %v2540, 32
      %v2895 = vpop.permute.xlu0 %2894
      %2896 = vrot.lane.b32.xlu0 %v2652, 32
      %v2897 = vpop.permute.xlu0 %2896
      %2898 = vrot.lane.b32.xlu0 %v2764, 32
      %v2899 = vpop.permute.xlu0 %2898
      %2900 = vrot.lane.b32.xlu0 %v2814, 32
      %v2901 = vpop.permute.xlu0 %2900
      %2912 = vrot.lane.b32.xlu0 %v2430, 40
      %v2913 = vpop.permute.xlu0 %2912
      %2914 = vrot.lane.b32.xlu0 %v2542, 40
      %v2915 = vpop.permute.xlu0 %2914
      %2916 = vrot.lane.b32.xlu0 %v2654, 40
      %v2917 = vpop.permute.xlu0 %2916
      %2918 = vrot.lane.b32.xlu0 %v2766, 40
      %v2919 = vpop.permute.xlu0 %2918
      %2920 = vrot.lane.b32.xlu0 %v2824, 40
      %v2921 = vpop.permute.xlu0 %2920
      %2932 = vrot.lane.b32.xlu0 %v2432, 48
      %v2933 = vpop.permute.xlu0 %2932
      %2934 = vrot.lane.b32.xlu0 %v2544, 48
      %v2935 = vpop.permute.xlu0 %2934
      %2936 = vrot.lane.b32.xlu0 %v2656, 48
      %v2937 = vpop.permute.xlu0 %2936
      %2938 = vrot.lane.b32.xlu0 %v2768, 48
      %v2939 = vpop.permute.xlu0 %2938
      %2940 = vrot.lane.b32.xlu0 %v2818, 48
      %v2941 = vpop.permute.xlu0 %2940
      %2952 = vrot.lane.b32.xlu0 %v2434, 56
      %v2953 = vpop.permute.xlu0 %2952
      %2954 = vrot.lane.b32.xlu0 %v2546, 56
      %v2955 = vpop.permute.xlu0 %2954
      %2956 = vrot.lane.b32.xlu0 %v2658, 56
      %v2957 = vpop.permute.xlu0 %2956
      %2958 = vrot.lane.b32.xlu0 %v2770, 56
      %v2959 = vpop.permute.xlu0 %2958
      %2960 = vrot.lane.b32.xlu0 %v2826, 56
      %v2961 = vpop.permute.xlu0 %2960
      %vm2967 = vcmask 64512
      %v2968 = vsel %vm2967, %v2420, %v2833
      %v2969 = vsel %vm2967, %v2532, %v2835
      %v2970 = vsel %vm2967, %v2644, %v2837
      %v2971 = vsel %vm2967, %v2756, %v2839
      %v2972 = vsel %vm2967, %v2802, %v2841
      %vm2973 = vcmask 130048
      %v2974 = vsel %vm2973, %v2968, %v2853
      %v2975 = vsel %vm2973, %v2969, %v2855
      %v2976 = vsel %vm2973, %v2970, %v2857
      %v2977 = vsel %vm2973, %v2971, %v2859
      %v2978 = vsel %vm2973, %v2972, %v2861
      %vm2979 = vcmask 195584
      %v2980 = vsel %vm2979, %v2974, %v2873
      %v2981 = vsel %vm2979, %v2975, %v2875
      %v2982 = vsel %vm2979, %v2976, %v2877
      %v2983 = vsel %vm2979, %v2977, %v2879
      %v2984 = vsel %vm2979, %v2978, %v2881
      %vm2985 = vcmask 261120
      %v2986 = vsel %vm2985, %v2980, %v2893
      %v2987 = vsel %vm2985, %v2981, %v2895
      %v2988 = vsel %vm2985, %v2982, %v2897
      %v2989 = vsel %vm2985, %v2983, %v2899
      %v2990 = vsel %vm2985, %v2984, %v2901
      %vm2991 = vcmask 326656
      %v2992 = vsel %vm2991, %v2986, %v2913
      %v2993 = vsel %vm2991, %v2987, %v2915
      %v2994 = vsel %vm2991, %v2988, %v2917
      %v2995 = vsel %vm2991, %v2989, %v2919
      %v2996 = vsel %vm2991, %v2990, %v2921
      %vm2997 = vcmask 392192
      %v2998 = vsel %vm2997, %v2992, %v2933
      %v2999 = vsel %vm2997, %v2993, %v2935
      %v3000 = vsel %vm2997, %v2994, %v2937
      %v3001 = vsel %vm2997, %v2995, %v2939
      %v3002 = vsel %vm2997, %v2996, %v2941
      %vm3003 = vcmask 457728
      %v3004 = vsel %vm3003, %v2998, %v2953
      %v3005 = vsel %vm3003, %v2999, %v2955
      %v3006 = vsel %vm3003, %v3000, %v2957
      %v3007 = vsel %vm3003, %v3001, %v2959
      %v3008 = vsel %vm3003, %v3002, %v2961
      %v3009 = vld [vmem:[%s1] sm:$0xff]
      %vm3010 = vcmask 293888
      %v3012 = vsel %vm3010, %v3009, 0
      %vm3014 = vcmask 1043456
      %v3016 = vsel %vm3014, %v3008, 0
      %3018 = vmatpush.msra.mxu0 0.0
      %3019 = vmatpush.msra.mxu0 0.0
      %3020 = vmatpush.msra.mxu0 0.0
      %3021 = vmatpush.msra.mxu0 0.0
      %3022 = vmatpush.msra.mxu0 0.0
      %3023 = vmatpush.msra.mxu0 0.0
      %3024 = vmatpush.msra.mxu0 0.0
      %3025 = vmatpush.msra.mxu0 0.0
      %3026 = vmatpush.msra.mxu0 0.0
      %3027 = vmatpush.msra.mxu0 0.0
      %3028 = vmatpush.msra.mxu0 0.0
      %3029 = vmatpush.msra.mxu0 %v3016
      %3030 = vmatpush.msra.mxu0 %v3007
      %3031 = vmatpush.msra.mxu0 %v3006
      %3032 = vmatpush.msra.mxu0 %v3005
      %3033 = vmatpush.msra.mxu0 %v3004
      %3034 = vmatmul.f32.gmra.mxu0 %v3012
      %v3035 = vpop.f32.mrf.mxu0
      %v3036 = vadd.f32 0.0, %v3035
      %3037 = vdwg.mxu0
      %v3038 = vld [vmem:[%s2] sm:$0xff]
      %3040 = vset.pattern.permute.xlu0 0
      %3041 = vperm.xlu0 %3040, %v3038
      %v3042 = vpop.permute.xlu0 %3041
      %v3044 = vmul.f32 %v3036, %v3042
      %v3045 = vld [vmem:[%s3] sm:$0xff]
      %3047 = vset.pattern.permute.xlu0 0
      %3048 = vperm.xlu0 %3047, %v3045
      %v3049 = vpop.permute.xlu0 %3048
      %v3051 = vadd.f32 %v3044, %v3049
      %v3052 = vmax.f32 %v3051, 0.0
      %3054 = vrot.lane.b32.xlu0 %v3052, 120
      %v3055 = vpop.permute.xlu0 %3054
      %3057 = vrot.lane.b32.xlu0 %v3052, 112
      %v3058 = vpop.permute.xlu0 %3057
      %3060 = vrot.lane.b32.xlu0 %v3052, 104
      %v3061 = vpop.permute.xlu0 %3060
      %3063 = vrot.lane.b32.xlu0 %v3052, 96
      %v3064 = vpop.permute.xlu0 %3063
      %3066 = vrot.lane.b32.xlu0 %v3052, 88
      %v3067 = vpop.permute.xlu0 %3066
      %3069 = vrot.lane.b32.xlu0 %v3052, 80
      %v3070 = vpop.permute.xlu0 %3069
      %3072 = vrot.lane.b32.xlu0 %v3052, 72
      %v3073 = vpop.permute.xlu0 %3072
      %v3075 = vrot.slane %v3058, 4
      %v3076 = vsel %vm1534, %v3075, %v3052
      %v3077 = vrot.slane %v3052, 4
      %v3078 = vsel %vm1534, %v3058, %v3077
      %v3080 = vunpack.c.l.s4 1983009808
      %v3081 = vunpack.c.0.s8 %v3080
      %v3082 = vperm.slane %v3076, %v3081
      %v3084 = vunpack.c.l.s4 1983009808
      %v3085 = vunpack.c.0.s8 %v3084
      %v3086 = vperm.slane %v3078, %v3085
      %v3087 = vrot.slane %v3061, 4
      %v3088 = vsel %vm1534, %v3087, %v3055
      %v3089 = vrot.slane %v3055, 4
      %v3090 = vsel %vm1534, %v3061, %v3089
      %v3092 = vunpack.c.l.s4 1983009808
      %v3093 = vunpack.c.0.s8 %v3092
      %v3094 = vperm.slane %v3088, %v3093
      %v3096 = vunpack.c.l.s4 1983009808
      %v3097 = vunpack.c.0.s8 %v3096
      %v3098 = vperm.slane %v3090, %v3097
      %v3099 = vrot.slane %v3070, 4
      %v3100 = vsel %vm1534, %v3099, %v3064
      %v3101 = vrot.slane %v3064, 4
      %v3102 = vsel %vm1534, %v3070, %v3101
      %v3104 = vunpack.c.l.s4 1983009808
      %v3105 = vunpack.c.0.s8 %v3104
      %v3106 = vperm.slane %v3100, %v3105
      %v3108 = vunpack.c.l.s4 1983009808
      %v3109 = vunpack.c.0.s8 %v3108
      %v3110 = vperm.slane %v3102, %v3109
      %v3111 = vrot.slane %v3073, 4
      %v3112 = vsel %vm1534, %v3111, %v3067
      %v3113 = vrot.slane %v3067, 4
      %v3114 = vsel %vm1534, %v3073, %v3113
      %v3116 = vunpack.c.l.s4 1983009808
      %v3117 = vunpack.c.0.s8 %v3116
      %v3118 = vperm.slane %v3112, %v3117
      %v3120 = vunpack.c.l.s4 1983009808
      %v3121 = vunpack.c.0.s8 %v3120
      %v3122 = vperm.slane %v3114, %v3121
      %v3123 = vrot.slane %v3094, 4
      %v3124 = vsel %vm1534, %v3123, %v3082
      %v3125 = vrot.slane %v3082, 4
      %v3126 = vsel %vm1534, %v3094, %v3125
      %v3128 = vunpack.c.l.s4 1934713408
      %v3129 = vunpack.c.0.s8 %v3128
      %v3130 = vperm.slane %v3124, %v3129
      %v3132 = vunpack.c.l.s4 1934713408
      %v3133 = vunpack.c.0.s8 %v3132
      %v3134 = vperm.slane %v3126, %v3133
      %v3135 = vrot.slane %v3098, 4
      %v3136 = vsel %vm1534, %v3135, %v3086
      %v3137 = vrot.slane %v3086, 4
      %v3138 = vsel %vm1534, %v3098, %v3137
      %v3140 = vunpack.c.l.s4 1934713408
      %v3141 = vunpack.c.0.s8 %v3140
      %v3142 = vperm.slane %v3136, %v3141
      %v3144 = vunpack.c.l.s4 1934713408
      %v3145 = vunpack.c.0.s8 %v3144
      %v3146 = vperm.slane %v3138, %v3145
      %v3147 = vrot.slane %v3118, 4
      %v3148 = vsel %vm1534, %v3147, %v3106
      %v3149 = vrot.slane %v3106, 4
      %v3150 = vsel %vm1534, %v3118, %v3149
      %v3152 = vunpack.c.l.s4 1934713408
      %v3153 = vunpack.c.0.s8 %v3152
      %v3154 = vperm.slane %v3148, %v3153
      %v3156 = vunpack.c.l.s4 1934713408
      %v3157 = vunpack.c.0.s8 %v3156
      %v3158 = vperm.slane %v3150, %v3157
      %v3159 = vrot.slane %v3122, 4
      %v3160 = vsel %vm1534, %v3159, %v3110
      %v3161 = vrot.slane %v3110, 4
      %v3162 = vsel %vm1534, %v3122, %v3161
      %v3164 = vunpack.c.l.s4 1934713408
      %v3165 = vunpack.c.0.s8 %v3164
      %v3166 = vperm.slane %v3160, %v3165
      %v3168 = vunpack.c.l.s4 1934713408
      %v3169 = vunpack.c.0.s8 %v3168
      %v3170 = vperm.slane %v3162, %v3169
      %v3171 = vrot.slane %v3154, 4
      %v3172 = vsel %vm1534, %v3171, %v3130
      %v3173 = vrot.slane %v3130, 4
      %v3174 = vsel %vm1534, %v3154, %v3173
      %v3175 = vrot.slane %v3158, 4
      %v3176 = vsel %vm1534, %v3175, %v3134
      %v3177 = vrot.slane %v3134, 4
      %v3178 = vsel %vm1534, %v3158, %v3177
      %v3179 = vrot.slane %v3166, 4
      %v3180 = vsel %vm1534, %v3179, %v3142
      %v3181 = vrot.slane %v3142, 4
      %v3182 = vsel %vm1534, %v3166, %v3181
      %v3183 = vrot.slane %v3170, 4
      %v3184 = vsel %vm1534, %v3183, %v3146
      %v3185 = vrot.slane %v3146, 4
      %v3186 = vsel %vm1534, %v3170, %v3185
      %3195 = vrot.lane.b32.xlu0 %v3172, 1
      %v3196 = vpop.permute.xlu0 %3195
      %3197 = vrot.lane.b32.xlu0 %v3174, 1
      %v3198 = vpop.permute.xlu0 %3197
      %3199 = vrot.lane.b32.xlu0 %v3176, 1
      %v3200 = vpop.permute.xlu0 %3199
      %3201 = vrot.lane.b32.xlu0 %v3178, 1
      %v3202 = vpop.permute.xlu0 %3201
      %3203 = vrot.lane.b32.xlu0 %v3180, 1
      %v3204 = vpop.permute.xlu0 %3203
      %3205 = vrot.lane.b32.xlu0 %v3182, 1
      %v3206 = vpop.permute.xlu0 %3205
      %3207 = vrot.lane.b32.xlu0 %v3184, 1
      %v3208 = vpop.permute.xlu0 %3207
      %3209 = vrot.lane.b32.xlu0 %v3186, 1
      %v3210 = vpop.permute.xlu0 %3209
      %v3219 = vsel %vm2178, 0.0, %v3196
      %v3220 = vsel %vm2178, 0.0, %v3198
      %v3221 = vsel %vm2178, 0.0, %v3200
      %v3222 = vsel %vm2178, 0.0, %v3202
      %v3223 = vsel %vm2178, 0.0, %v3204
      %v3224 = vsel %vm2178, 0.0, %v3206
      %v3225 = vsel %vm2178, 0.0, %v3208
      %v3226 = vsel %vm2178, 0.0, %v3210
      %v3227 = vsel %vm2183, %v3219, 0.0
      %v3228 = vsel %vm2183, %v3220, 0.0
      %v3229 = vsel %vm2183, %v3221, 0.0
      %v3230 = vsel %vm2183, %v3222, 0.0
      %v3231 = vsel %vm2183, %v3223, 0.0
      %v3232 = vsel %vm2183, %v3224, 0.0
      %v3233 = vsel %vm2183, %v3225, 0.0
      %v3234 = vsel %vm2183, %v3226, 0.0
      %v3243 = vrot.slane %v3227, 7
      %v3244 = vrot.slane %v3228, 7
      %v3245 = vrot.slane %v3229, 7
      %v3246 = vrot.slane %v3230, 7
      %v3247 = vrot.slane %v3231, 7
      %v3248 = vrot.slane %v3232, 7
      %v3249 = vrot.slane %v3233, 7
      %v3250 = vrot.slane %v3234, 7
      %v3259 = vsel %vm2200, 0.0, %v3243
      %v3260 = vsel %vm2200, 0.0, %v3244
      %v3261 = vsel %vm2200, 0.0, %v3245
      %v3262 = vsel %vm2200, 0.0, %v3246
      %v3263 = vsel %vm2200, 0.0, %v3247
      %v3264 = vsel %vm2200, 0.0, %v3248
      %v3265 = vsel %vm2200, 0.0, %v3249
      %v3266 = vsel %vm2200, 0.0, %v3250
      %v3267 = vsel %vm2200, %v3243, 0.0
      %v3268 = vsel %vm2200, %v3244, 0.0
      %v3269 = vsel %vm2200, %v3245, 0.0
      %v3270 = vsel %vm2200, %v3246, 0.0
      %v3271 = vsel %vm2200, %v3247, 0.0
      %v3272 = vsel %vm2200, %v3248, 0.0
      %v3273 = vsel %vm2200, %v3249, 0.0
      %v3274 = vsel %vm2200, %v3250, 0.0
      %3283 = vrot.lane.b32.xlu0 %v3259, 127
      %v3284 = vpop.permute.xlu0 %3283
      %3285 = vrot.lane.b32.xlu0 %v3260, 127
      %v3286 = vpop.permute.xlu0 %3285
      %3287 = vrot.lane.b32.xlu0 %v3261, 127
      %v3288 = vpop.permute.xlu0 %3287
      %3289 = vrot.lane.b32.xlu0 %v3262, 127
      %v3290 = vpop.permute.xlu0 %3289
      %3291 = vrot.lane.b32.xlu0 %v3263, 127
      %v3292 = vpop.permute.xlu0 %3291
      %3293 = vrot.lane.b32.xlu0 %v3264, 127
      %v3294 = vpop.permute.xlu0 %3293
      %3295 = vrot.lane.b32.xlu0 %v3265, 127
      %v3296 = vpop.permute.xlu0 %3295
      %3297 = vrot.lane.b32.xlu0 %v3266, 127
      %v3298 = vpop.permute.xlu0 %3297
      %3307 = vrot.lane.b32.xlu0 %v3259, 126
      %v3308 = vpop.permute.xlu0 %3307
      %3309 = vrot.lane.b32.xlu0 %v3260, 126
      %v3310 = vpop.permute.xlu0 %3309
      %3311 = vrot.lane.b32.xlu0 %v3261, 126
      %v3312 = vpop.permute.xlu0 %3311
      %3313 = vrot.lane.b32.xlu0 %v3262, 126
      %v3314 = vpop.permute.xlu0 %3313
      %3315 = vrot.lane.b32.xlu0 %v3263, 126
      %v3316 = vpop.permute.xlu0 %3315
      %3317 = vrot.lane.b32.xlu0 %v3264, 126
      %v3318 = vpop.permute.xlu0 %3317
      %3319 = vrot.lane.b32.xlu0 %v3265, 126
      %v3320 = vpop.permute.xlu0 %3319
      %3321 = vrot.lane.b32.xlu0 %v3266, 126
      %v3322 = vpop.permute.xlu0 %3321
      %v3339 = vrot.slane %v3259, 1
      %v3340 = vrot.slane %v3267, 1
      %v3341 = vsel %vm2241, %v3339, %v3340
      %v3342 = vrot.slane %v3260, 1
      %v3343 = vrot.slane %v3268, 1
      %v3344 = vsel %vm2241, %v3342, %v3343
      %v3345 = vrot.slane %v3261, 1
      %v3346 = vrot.slane %v3269, 1
      %v3347 = vsel %vm2241, %v3345, %v3346
      %v3348 = vrot.slane %v3262, 1
      %v3349 = vrot.slane %v3270, 1
      %v3350 = vsel %vm2241, %v3348, %v3349
      %v3351 = vrot.slane %v3263, 1
      %v3352 = vrot.slane %v3271, 1
      %v3353 = vsel %vm2241, %v3351, %v3352
      %v3354 = vrot.slane %v3264, 1
      %v3355 = vrot.slane %v3272, 1
      %v3356 = vsel %vm2241, %v3354, %v3355
      %v3357 = vrot.slane %v3265, 1
      %v3358 = vrot.slane %v3273, 1
      %v3359 = vsel %vm2241, %v3357, %v3358
      %v3360 = vrot.slane %v3266, 1
      %v3361 = vrot.slane %v3274, 1
      %v3362 = vsel %vm2241, %v3360, %v3361
      %3371 = vrot.lane.b32.xlu0 %v3341, 127
      %v3372 = vpop.permute.xlu0 %3371
      %3373 = vrot.lane.b32.xlu0 %v3344, 127
      %v3374 = vpop.permute.xlu0 %3373
      %3375 = vrot.lane.b32.xlu0 %v3347, 127
      %v3376 = vpop.permute.xlu0 %3375
      %3377 = vrot.lane.b32.xlu0 %v3350, 127
      %v3378 = vpop.permute.xlu0 %3377
      %3379 = vrot.lane.b32.xlu0 %v3353, 127
      %v3380 = vpop.permute.xlu0 %3379
      %3381 = vrot.lane.b32.xlu0 %v3356, 127
      %v3382 = vpop.permute.xlu0 %3381
      %3383 = vrot.lane.b32.xlu0 %v3359, 127
      %v3384 = vpop.permute.xlu0 %3383
      %3385 = vrot.lane.b32.xlu0 %v3362, 127
      %v3386 = vpop.permute.xlu0 %3385
      %3395 = vrot.lane.b32.xlu0 %v3341, 126
      %v3396 = vpop.permute.xlu0 %3395
      %3397 = vrot.lane.b32.xlu0 %v3344, 126
      %v3398 = vpop.permute.xlu0 %3397
      %3399 = vrot.lane.b32.xlu0 %v3347, 126
      %v3400 = vpop.permute.xlu0 %3399
      %3401 = vrot.lane.b32.xlu0 %v3350, 126
      %v3402 = vpop.permute.xlu0 %3401
      %3403 = vrot.lane.b32.xlu0 %v3353, 126
      %v3404 = vpop.permute.xlu0 %3403
      %3405 = vrot.lane.b32.xlu0 %v3356, 126
      %v3406 = vpop.permute.xlu0 %3405
      %3407 = vrot.lane.b32.xlu0 %v3359, 126
      %v3408 = vpop.permute.xlu0 %3407
      %3409 = vrot.lane.b32.xlu0 %v3362, 126
      %v3410 = vpop.permute.xlu0 %3409
      %v3419 = vrot.slane %v3259, 2
      %v3420 = vrot.slane %v3267, 2
      %v3421 = vsel %vm2282, %v3419, %v3420
      %v3422 = vrot.slane %v3260, 2
      %v3423 = vrot.slane %v3268, 2
      %v3424 = vsel %vm2282, %v3422, %v3423
      %v3425 = vrot.slane %v3261, 2
      %v3426 = vrot.slane %v3269, 2
      %v3427 = vsel %vm2282, %v3425, %v3426
      %v3428 = vrot.slane %v3262, 2
      %v3429 = vrot.slane %v3270, 2
      %v3430 = vsel %vm2282, %v3428, %v3429
      %v3431 = vrot.slane %v3263, 2
      %v3432 = vrot.slane %v3271, 2
      %v3433 = vsel %vm2282, %v3431, %v3432
      %v3434 = vrot.slane %v3264, 2
      %v3435 = vrot.slane %v3272, 2
      %v3436 = vsel %vm2282, %v3434, %v3435
      %v3437 = vrot.slane %v3265, 2
      %v3438 = vrot.slane %v3273, 2
      %v3439 = vsel %vm2282, %v3437, %v3438
      %v3440 = vrot.slane %v3266, 2
      %v3441 = vrot.slane %v3274, 2
      %v3442 = vsel %vm2282, %v3440, %v3441
      %3451 = vrot.lane.b32.xlu0 %v3421, 127
      %v3452 = vpop.permute.xlu0 %3451
      %3453 = vrot.lane.b32.xlu0 %v3424, 127
      %v3454 = vpop.permute.xlu0 %3453
      %3455 = vrot.lane.b32.xlu0 %v3427, 127
      %v3456 = vpop.permute.xlu0 %3455
      %3457 = vrot.lane.b32.xlu0 %v3430, 127
      %v3458 = vpop.permute.xlu0 %3457
      %3459 = vrot.lane.b32.xlu0 %v3433, 127
      %v3460 = vpop.permute.xlu0 %3459
      %3461 = vrot.lane.b32.xlu0 %v3436, 127
      %v3462 = vpop.permute.xlu0 %3461
      %3463 = vrot.lane.b32.xlu0 %v3439, 127
      %v3464 = vpop.permute.xlu0 %3463
      %3465 = vrot.lane.b32.xlu0 %v3442, 127
      %v3466 = vpop.permute.xlu0 %3465
      %3475 = vrot.lane.b32.xlu0 %v3421, 126
      %v3476 = vpop.permute.xlu0 %3475
      %3477 = vrot.lane.b32.xlu0 %v3424, 126
      %v3478 = vpop.permute.xlu0 %3477
      %3479 = vrot.lane.b32.xlu0 %v3427, 126
      %v3480 = vpop.permute.xlu0 %3479
      %3481 = vrot.lane.b32.xlu0 %v3430, 126
      %v3482 = vpop.permute.xlu0 %3481
      %3483 = vrot.lane.b32.xlu0 %v3433, 126
      %v3484 = vpop.permute.xlu0 %3483
      %3485 = vrot.lane.b32.xlu0 %v3436, 126
      %v3486 = vpop.permute.xlu0 %3485
      %3487 = vrot.lane.b32.xlu0 %v3439, 126
      %v3488 = vpop.permute.xlu0 %3487
      %3489 = vrot.lane.b32.xlu0 %v3442, 126
      %v3490 = vpop.permute.xlu0 %3489
      %v3499 = vrot.slane %v3261, 4
      %v3500 = vsel %vm1534, %v3499, %v3259
      %v3501 = vrot.slane %v3259, 4
      %v3502 = vsel %vm1534, %v3261, %v3501
      %v3504 = vunpack.c.l.s4 1983009808
      %v3505 = vunpack.c.0.s8 %v3504
      %v3506 = vperm.slane %v3500, %v3505
      %v3508 = vunpack.c.l.s4 1983009808
      %v3509 = vunpack.c.0.s8 %v3508
      %v3510 = vperm.slane %v3502, %v3509
      %v3511 = vrot.slane %v3262, 4
      %v3512 = vsel %vm1534, %v3511, %v3260
      %v3513 = vrot.slane %v3260, 4
      %v3514 = vsel %vm1534, %v3262, %v3513
      %v3516 = vunpack.c.l.s4 1983009808
      %v3517 = vunpack.c.0.s8 %v3516
      %v3518 = vperm.slane %v3512, %v3517
      %v3520 = vunpack.c.l.s4 1983009808
      %v3521 = vunpack.c.0.s8 %v3520
      %v3522 = vperm.slane %v3514, %v3521
      %v3523 = vrot.slane %v3265, 4
      %v3524 = vsel %vm1534, %v3523, %v3263
      %v3525 = vrot.slane %v3263, 4
      %v3526 = vsel %vm1534, %v3265, %v3525
      %v3528 = vunpack.c.l.s4 1983009808
      %v3529 = vunpack.c.0.s8 %v3528
      %v3530 = vperm.slane %v3524, %v3529
      %v3532 = vunpack.c.l.s4 1983009808
      %v3533 = vunpack.c.0.s8 %v3532
      %v3534 = vperm.slane %v3526, %v3533
      %v3535 = vrot.slane %v3266, 4
      %v3536 = vsel %vm1534, %v3535, %v3264
      %v3537 = vrot.slane %v3264, 4
      %v3538 = vsel %vm1534, %v3266, %v3537
      %v3540 = vunpack.c.l.s4 1983009808
      %v3541 = vunpack.c.0.s8 %v3540
      %v3542 = vperm.slane %v3536, %v3541
      %v3544 = vunpack.c.l.s4 1983009808
      %v3545 = vunpack.c.0.s8 %v3544
      %v3546 = vperm.slane %v3538, %v3545
      %v3547 = vrot.slane %v3518, 4
      %v3548 = vsel %vm1534, %v3547, %v3506
      %v3549 = vrot.slane %v3506, 4
      %v3550 = vsel %vm1534, %v3518, %v3549
      %v3552 = vunpack.c.l.s4 1934713408
      %v3553 = vunpack.c.0.s8 %v3552
      %v3554 = vperm.slane %v3548, %v3553
      %v3556 = vunpack.c.l.s4 1934713408
      %v3557 = vunpack.c.0.s8 %v3556
      %v3558 = vperm.slane %v3550, %v3557
      %v3559 = vrot.slane %v3522, 4
      %v3560 = vsel %vm1534, %v3559, %v3510
      %v3561 = vrot.slane %v3510, 4
      %v3562 = vsel %vm1534, %v3522, %v3561
      %v3564 = vunpack.c.l.s4 1934713408
      %v3565 = vunpack.c.0.s8 %v3564
      %v3566 = vperm.slane %v3560, %v3565
      %v3568 = vunpack.c.l.s4 1934713408
      %v3569 = vunpack.c.0.s8 %v3568
      %v3570 = vperm.slane %v3562, %v3569
      %v3571 = vrot.slane %v3542, 4
      %v3572 = vsel %vm1534, %v3571, %v3530
      %v3573 = vrot.slane %v3530, 4
      %v3574 = vsel %vm1534, %v3542, %v3573
      %v3576 = vunpack.c.l.s4 1934713408
      %v3577 = vunpack.c.0.s8 %v3576
      %v3578 = vperm.slane %v3572, %v3577
      %v3580 = vunpack.c.l.s4 1934713408
      %v3581 = vunpack.c.0.s8 %v3580
      %v3582 = vperm.slane %v3574, %v3581
      %v3583 = vrot.slane %v3546, 4
      %v3584 = vsel %vm1534, %v3583, %v3534
      %v3585 = vrot.slane %v3534, 4
      %v3586 = vsel %vm1534, %v3546, %v3585
      %v3588 = vunpack.c.l.s4 1934713408
      %v3589 = vunpack.c.0.s8 %v3588
      %v3590 = vperm.slane %v3584, %v3589
      %v3592 = vunpack.c.l.s4 1934713408
      %v3593 = vunpack.c.0.s8 %v3592
      %v3594 = vperm.slane %v3586, %v3593
      %v3595 = vrot.slane %v3578, 4
      %v3596 = vsel %vm1534, %v3595, %v3554
      %v3597 = vrot.slane %v3554, 4
      %v3598 = vsel %vm1534, %v3578, %v3597
      %v3599 = vrot.slane %v3582, 4
      %v3600 = vsel %vm1534, %v3599, %v3558
      %v3601 = vrot.slane %v3558, 4
      %v3602 = vsel %vm1534, %v3582, %v3601
      %v3603 = vrot.slane %v3590, 4
      %v3604 = vsel %vm1534, %v3603, %v3566
      %v3605 = vrot.slane %v3566, 4
      %v3606 = vsel %vm1534, %v3590, %v3605
      %v3607 = vrot.slane %v3594, 4
      %v3608 = vsel %vm1534, %v3607, %v3570
      %v3609 = vrot.slane %v3570, 4
      %v3610 = vsel %vm1534, %v3594, %v3609
      %v3611 = vrot.slane %v3288, 4
      %v3612 = vsel %vm1534, %v3611, %v3284
      %v3613 = vrot.slane %v3284, 4
      %v3614 = vsel %vm1534, %v3288, %v3613
      %v3616 = vunpack.c.l.s4 1983009808
      %v3617 = vunpack.c.0.s8 %v3616
      %v3618 = vperm.slane %v3612, %v3617
      %v3620 = vunpack.c.l.s4 1983009808
      %v3621 = vunpack.c.0.s8 %v3620
      %v3622 = vperm.slane %v3614, %v3621
      %v3623 = vrot.slane %v3290, 4
      %v3624 = vsel %vm1534, %v3623, %v3286
      %v3625 = vrot.slane %v3286, 4
      %v3626 = vsel %vm1534, %v3290, %v3625
      %v3628 = vunpack.c.l.s4 1983009808
      %v3629 = vunpack.c.0.s8 %v3628
      %v3630 = vperm.slane %v3624, %v3629
      %v3632 = vunpack.c.l.s4 1983009808
      %v3633 = vunpack.c.0.s8 %v3632
      %v3634 = vperm.slane %v3626, %v3633
      %v3635 = vrot.slane %v3296, 4
      %v3636 = vsel %vm1534, %v3635, %v3292
      %v3637 = vrot.slane %v3292, 4
      %v3638 = vsel %vm1534, %v3296, %v3637
      %v3640 = vunpack.c.l.s4 1983009808
      %v3641 = vunpack.c.0.s8 %v3640
      %v3642 = vperm.slane %v3636, %v3641
      %v3644 = vunpack.c.l.s4 1983009808
      %v3645 = vunpack.c.0.s8 %v3644
      %v3646 = vperm.slane %v3638, %v3645
      %v3647 = vrot.slane %v3298, 4
      %v3648 = vsel %vm1534, %v3647, %v3294
      %v3649 = vrot.slane %v3294, 4
      %v3650 = vsel %vm1534, %v3298, %v3649
      %v3652 = vunpack.c.l.s4 1983009808
      %v3653 = vunpack.c.0.s8 %v3652
      %v3654 = vperm.slane %v3648, %v3653
      %v3656 = vunpack.c.l.s4 1983009808
      %v3657 = vunpack.c.0.s8 %v3656
      %v3658 = vperm.slane %v3650, %v3657
      %v3659 = vrot.slane %v3630, 4
      %v3660 = vsel %vm1534, %v3659, %v3618
      %v3661 = vrot.slane %v3618, 4
      %v3662 = vsel %vm1534, %v3630, %v3661
      %v3664 = vunpack.c.l.s4 1934713408
      %v3665 = vunpack.c.0.s8 %v3664
      %v3666 = vperm.slane %v3660, %v3665
      %v3668 = vunpack.c.l.s4 1934713408
      %v3669 = vunpack.c.0.s8 %v3668
      %v3670 = vperm.slane %v3662, %v3669
      %v3671 = vrot.slane %v3634, 4
      %v3672 = vsel %vm1534, %v3671, %v3622
      %v3673 = vrot.slane %v3622, 4
      %v3674 = vsel %vm1534, %v3634, %v3673
      %v3676 = vunpack.c.l.s4 1934713408
      %v3677 = vunpack.c.0.s8 %v3676
      %v3678 = vperm.slane %v3672, %v3677
      %v3680 = vunpack.c.l.s4 1934713408
      %v3681 = vunpack.c.0.s8 %v3680
      %v3682 = vperm.slane %v3674, %v3681
      %v3683 = vrot.slane %v3654, 4
      %v3684 = vsel %vm1534, %v3683, %v3642
      %v3685 = vrot.slane %v3642, 4
      %v3686 = vsel %vm1534, %v3654, %v3685
      %v3688 = vunpack.c.l.s4 1934713408
      %v3689 = vunpack.c.0.s8 %v3688
      %v3690 = vperm.slane %v3684, %v3689
      %v3692 = vunpack.c.l.s4 1934713408
      %v3693 = vunpack.c.0.s8 %v3692
      %v3694 = vperm.slane %v3686, %v3693
      %v3695 = vrot.slane %v3658, 4
      %v3696 = vsel %vm1534, %v3695, %v3646
      %v3697 = vrot.slane %v3646, 4
      %v3698 = vsel %vm1534, %v3658, %v3697
      %v3700 = vunpack.c.l.s4 1934713408
      %v3701 = vunpack.c.0.s8 %v3700
      %v3702 = vperm.slane %v3696, %v3701
      %v3704 = vunpack.c.l.s4 1934713408
      %v3705 = vunpack.c.0.s8 %v3704
      %v3706 = vperm.slane %v3698, %v3705
      %v3707 = vrot.slane %v3690, 4
      %v3708 = vsel %vm1534, %v3707, %v3666
      %v3709 = vrot.slane %v3666, 4
      %v3710 = vsel %vm1534, %v3690, %v3709
      %v3711 = vrot.slane %v3694, 4
      %v3712 = vsel %vm1534, %v3711, %v3670
      %v3713 = vrot.slane %v3670, 4
      %v3714 = vsel %vm1534, %v3694, %v3713
      %v3715 = vrot.slane %v3702, 4
      %v3716 = vsel %vm1534, %v3715, %v3678
      %v3717 = vrot.slane %v3678, 4
      %v3718 = vsel %vm1534, %v3702, %v3717
      %v3719 = vrot.slane %v3706, 4
      %v3720 = vsel %vm1534, %v3719, %v3682
      %v3721 = vrot.slane %v3682, 4
      %v3722 = vsel %vm1534, %v3706, %v3721
      %v3723 = vrot.slane %v3312, 4
      %v3724 = vsel %vm1534, %v3723, %v3308
      %v3725 = vrot.slane %v3308, 4
      %v3726 = vsel %vm1534, %v3312, %v3725
      %v3728 = vunpack.c.l.s4 1983009808
      %v3729 = vunpack.c.0.s8 %v3728
      %v3730 = vperm.slane %v3724, %v3729
      %v3732 = vunpack.c.l.s4 1983009808
      %v3733 = vunpack.c.0.s8 %v3732
      %v3734 = vperm.slane %v3726, %v3733
      %v3735 = vrot.slane %v3314, 4
      %v3736 = vsel %vm1534, %v3735, %v3310
      %v3737 = vrot.slane %v3310, 4
      %v3738 = vsel %vm1534, %v3314, %v3737
      %v3740 = vunpack.c.l.s4 1983009808
      %v3741 = vunpack.c.0.s8 %v3740
      %v3742 = vperm.slane %v3736, %v3741
      %v3744 = vunpack.c.l.s4 1983009808
      %v3745 = vunpack.c.0.s8 %v3744
      %v3746 = vperm.slane %v3738, %v3745
      %v3747 = vrot.slane %v3320, 4
      %v3748 = vsel %vm1534, %v3747, %v3316
      %v3749 = vrot.slane %v3316, 4
      %v3750 = vsel %vm1534, %v3320, %v3749
      %v3752 = vunpack.c.l.s4 1983009808
      %v3753 = vunpack.c.0.s8 %v3752
      %v3754 = vperm.slane %v3748, %v3753
      %v3756 = vunpack.c.l.s4 1983009808
      %v3757 = vunpack.c.0.s8 %v3756
      %v3758 = vperm.slane %v3750, %v3757
      %v3759 = vrot.slane %v3322, 4
      %v3760 = vsel %vm1534, %v3759, %v3318
      %v3761 = vrot.slane %v3318, 4
      %v3762 = vsel %vm1534, %v3322, %v3761
      %v3764 = vunpack.c.l.s4 1983009808
      %v3765 = vunpack.c.0.s8 %v3764
      %v3766 = vperm.slane %v3760, %v3765
      %v3768 = vunpack.c.l.s4 1983009808
      %v3769 = vunpack.c.0.s8 %v3768
      %v3770 = vperm.slane %v3762, %v3769
      %v3771 = vrot.slane %v3742, 4
      %v3772 = vsel %vm1534, %v3771, %v3730
      %v3773 = vrot.slane %v3730, 4
      %v3774 = vsel %vm1534, %v3742, %v3773
      %v3776 = vunpack.c.l.s4 1934713408
      %v3777 = vunpack.c.0.s8 %v3776
      %v3778 = vperm.slane %v3772, %v3777
      %v3780 = vunpack.c.l.s4 1934713408
      %v3781 = vunpack.c.0.s8 %v3780
      %v3782 = vperm.slane %v3774, %v3781
      %v3783 = vrot.slane %v3746, 4
      %v3784 = vsel %vm1534, %v3783, %v3734
      %v3785 = vrot.slane %v3734, 4
      %v3786 = vsel %vm1534, %v3746, %v3785
      %v3788 = vunpack.c.l.s4 1934713408
      %v3789 = vunpack.c.0.s8 %v3788
      %v3790 = vperm.slane %v3784, %v3789
      %v3792 = vunpack.c.l.s4 1934713408
      %v3793 = vunpack.c.0.s8 %v3792
      %v3794 = vperm.slane %v3786, %v3793
      %v3795 = vrot.slane %v3766, 4
      %v3796 = vsel %vm1534, %v3795, %v3754
      %v3797 = vrot.slane %v3754, 4
      %v3798 = vsel %vm1534, %v3766, %v3797
      %v3800 = vunpack.c.l.s4 1934713408
      %v3801 = vunpack.c.0.s8 %v3800
      %v3802 = vperm.slane %v3796, %v3801
      %v3804 = vunpack.c.l.s4 1934713408
      %v3805 = vunpack.c.0.s8 %v3804
      %v3806 = vperm.slane %v3798, %v3805
      %v3807 = vrot.slane %v3770, 4
      %v3808 = vsel %vm1534, %v3807, %v3758
      %v3809 = vrot.slane %v3758, 4
      %v3810 = vsel %vm1534, %v3770, %v3809
      %v3812 = vunpack.c.l.s4 1934713408
      %v3813 = vunpack.c.0.s8 %v3812
      %v3814 = vperm.slane %v3808, %v3813
      %v3816 = vunpack.c.l.s4 1934713408
      %v3817 = vunpack.c.0.s8 %v3816
      %v3818 = vperm.slane %v3810, %v3817
      %v3819 = vrot.slane %v3802, 4
      %v3820 = vsel %vm1534, %v3819, %v3778
      %v3821 = vrot.slane %v3778, 4
      %v3822 = vsel %vm1534, %v3802, %v3821
      %v3823 = vrot.slane %v3806, 4
      %v3824 = vsel %vm1534, %v3823, %v3782
      %v3825 = vrot.slane %v3782, 4
      %v3826 = vsel %vm1534, %v3806, %v3825
      %v3827 = vrot.slane %v3814, 4
      %v3828 = vsel %vm1534, %v3827, %v3790
      %v3829 = vrot.slane %v3790, 4
      %v3830 = vsel %vm1534, %v3814, %v3829
      %v3831 = vrot.slane %v3818, 4
      %v3832 = vsel %vm1534, %v3831, %v3794
      %v3833 = vrot.slane %v3794, 4
      %v3834 = vsel %vm1534, %v3818, %v3833
      %v3835 = vrot.slane %v3347, 4
      %v3836 = vsel %vm1534, %v3835, %v3341
      %v3837 = vrot.slane %v3341, 4
      %v3838 = vsel %vm1534, %v3347, %v3837
      %v3840 = vunpack.c.l.s4 1983009808
      %v3841 = vunpack.c.0.s8 %v3840
      %v3842 = vperm.slane %v3836, %v3841
      %v3844 = vunpack.c.l.s4 1983009808
      %v3845 = vunpack.c.0.s8 %v3844
      %v3846 = vperm.slane %v3838, %v3845
      %v3847 = vrot.slane %v3350, 4
      %v3848 = vsel %vm1534, %v3847, %v3344
      %v3849 = vrot.slane %v3344, 4
      %v3850 = vsel %vm1534, %v3350, %v3849
      %v3852 = vunpack.c.l.s4 1983009808
      %v3853 = vunpack.c.0.s8 %v3852
      %v3854 = vperm.slane %v3848, %v3853
      %v3856 = vunpack.c.l.s4 1983009808
      %v3857 = vunpack.c.0.s8 %v3856
      %v3858 = vperm.slane %v3850, %v3857
      %v3859 = vrot.slane %v3359, 4
      %v3860 = vsel %vm1534, %v3859, %v3353
      %v3861 = vrot.slane %v3353, 4
      %v3862 = vsel %vm1534, %v3359, %v3861
      %v3864 = vunpack.c.l.s4 1983009808
      %v3865 = vunpack.c.0.s8 %v3864
      %v3866 = vperm.slane %v3860, %v3865
      %v3868 = vunpack.c.l.s4 1983009808
      %v3869 = vunpack.c.0.s8 %v3868
      %v3870 = vperm.slane %v3862, %v3869
      %v3871 = vrot.slane %v3362, 4
      %v3872 = vsel %vm1534, %v3871, %v3356
      %v3873 = vrot.slane %v3356, 4
      %v3874 = vsel %vm1534, %v3362, %v3873
      %v3876 = vunpack.c.l.s4 1983009808
      %v3877 = vunpack.c.0.s8 %v3876
      %v3878 = vperm.slane %v3872, %v3877
      %v3880 = vunpack.c.l.s4 1983009808
      %v3881 = vunpack.c.0.s8 %v3880
      %v3882 = vperm.slane %v3874, %v3881
      %v3883 = vrot.slane %v3854, 4
      %v3884 = vsel %vm1534, %v3883, %v3842
      %v3885 = vrot.slane %v3842, 4
      %v3886 = vsel %vm1534, %v3854, %v3885
      %v3888 = vunpack.c.l.s4 1934713408
      %v3889 = vunpack.c.0.s8 %v3888
      %v3890 = vperm.slane %v3884, %v3889
      %v3892 = vunpack.c.l.s4 1934713408
      %v3893 = vunpack.c.0.s8 %v3892
      %v3894 = vperm.slane %v3886, %v3893
      %v3895 = vrot.slane %v3858, 4
      %v3896 = vsel %vm1534, %v3895, %v3846
      %v3897 = vrot.slane %v3846, 4
      %v3898 = vsel %vm1534, %v3858, %v3897
      %v3900 = vunpack.c.l.s4 1934713408
      %v3901 = vunpack.c.0.s8 %v3900
      %v3902 = vperm.slane %v3896, %v3901
      %v3904 = vunpack.c.l.s4 1934713408
      %v3905 = vunpack.c.0.s8 %v3904
      %v3906 = vperm.slane %v3898, %v3905
      %v3907 = vrot.slane %v3878, 4
      %v3908 = vsel %vm1534, %v3907, %v3866
      %v3909 = vrot.slane %v3866, 4
      %v3910 = vsel %vm1534, %v3878, %v3909
      %v3912 = vunpack.c.l.s4 1934713408
      %v3913 = vunpack.c.0.s8 %v3912
      %v3914 = vperm.slane %v3908, %v3913
      %v3916 = vunpack.c.l.s4 1934713408
      %v3917 = vunpack.c.0.s8 %v3916
      %v3918 = vperm.slane %v3910, %v3917
      %v3919 = vrot.slane %v3882, 4
      %v3920 = vsel %vm1534, %v3919, %v3870
      %v3921 = vrot.slane %v3870, 4
      %v3922 = vsel %vm1534, %v3882, %v3921
      %v3924 = vunpack.c.l.s4 1934713408
      %v3925 = vunpack.c.0.s8 %v3924
      %v3926 = vperm.slane %v3920, %v3925
      %v3928 = vunpack.c.l.s4 1934713408
      %v3929 = vunpack.c.0.s8 %v3928
      %v3930 = vperm.slane %v3922, %v3929
      %v3931 = vrot.slane %v3914, 4
      %v3932 = vsel %vm1534, %v3931, %v3890
      %v3933 = vrot.slane %v3890, 4
      %v3934 = vsel %vm1534, %v3914, %v3933
      %v3935 = vrot.slane %v3918, 4
      %v3936 = vsel %vm1534, %v3935, %v3894
      %v3937 = vrot.slane %v3894, 4
      %v3938 = vsel %vm1534, %v3918, %v3937
      %v3939 = vrot.slane %v3926, 4
      %v3940 = vsel %vm1534, %v3939, %v3902
      %v3941 = vrot.slane %v3902, 4
      %v3942 = vsel %vm1534, %v3926, %v3941
      %v3943 = vrot.slane %v3930, 4
      %v3944 = vsel %vm1534, %v3943, %v3906
      %v3945 = vrot.slane %v3906, 4
      %v3946 = vsel %vm1534, %v3930, %v3945
      %v3947 = vrot.slane %v3376, 4
      %v3948 = vsel %vm1534, %v3947, %v3372
      %v3949 = vrot.slane %v3372, 4
      %v3950 = vsel %vm1534, %v3376, %v3949
      %v3952 = vunpack.c.l.s4 1983009808
      %v3953 = vunpack.c.0.s8 %v3952
      %v3954 = vperm.slane %v3948, %v3953
      %v3956 = vunpack.c.l.s4 1983009808
      %v3957 = vunpack.c.0.s8 %v3956
      %v3958 = vperm.slane %v3950, %v3957
      %v3959 = vrot.slane %v3378, 4
      %v3960 = vsel %vm1534, %v3959, %v3374
      %v3961 = vrot.slane %v3374, 4
      %v3962 = vsel %vm1534, %v3378, %v3961
      %v3964 = vunpack.c.l.s4 1983009808
      %v3965 = vunpack.c.0.s8 %v3964
      %v3966 = vperm.slane %v3960, %v3965
      %v3968 = vunpack.c.l.s4 1983009808
      %v3969 = vunpack.c.0.s8 %v3968
      %v3970 = vperm.slane %v3962, %v3969
      %v3971 = vrot.slane %v3384, 4
      %v3972 = vsel %vm1534, %v3971, %v3380
      %v3973 = vrot.slane %v3380, 4
      %v3974 = vsel %vm1534, %v3384, %v3973
      %v3976 = vunpack.c.l.s4 1983009808
      %v3977 = vunpack.c.0.s8 %v3976
      %v3978 = vperm.slane %v3972, %v3977
      %v3980 = vunpack.c.l.s4 1983009808
      %v3981 = vunpack.c.0.s8 %v3980
      %v3982 = vperm.slane %v3974, %v3981
      %v3983 = vrot.slane %v3386, 4
      %v3984 = vsel %vm1534, %v3983, %v3382
      %v3985 = vrot.slane %v3382, 4
      %v3986 = vsel %vm1534, %v3386, %v3985
      %v3988 = vunpack.c.l.s4 1983009808
      %v3989 = vunpack.c.0.s8 %v3988
      %v3990 = vperm.slane %v3984, %v3989
      %v3992 = vunpack.c.l.s4 1983009808
      %v3993 = vunpack.c.0.s8 %v3992
      %v3994 = vperm.slane %v3986, %v3993
      %v3995 = vrot.slane %v3966, 4
      %v3996 = vsel %vm1534, %v3995, %v3954
      %v3997 = vrot.slane %v3954, 4
      %v3998 = vsel %vm1534, %v3966, %v3997
      %v4000 = vunpack.c.l.s4 1934713408
      %v4001 = vunpack.c.0.s8 %v4000
      %v4002 = vperm.slane %v3996, %v4001
      %v4004 = vunpack.c.l.s4 1934713408
      %v4005 = vunpack.c.0.s8 %v4004
      %v4006 = vperm.slane %v3998, %v4005
      %v4007 = vrot.slane %v3970, 4
      %v4008 = vsel %vm1534, %v4007, %v3958
      %v4009 = vrot.slane %v3958, 4
      %v4010 = vsel %vm1534, %v3970, %v4009
      %v4012 = vunpack.c.l.s4 1934713408
      %v4013 = vunpack.c.0.s8 %v4012
      %v4014 = vperm.slane %v4008, %v4013
      %v4016 = vunpack.c.l.s4 1934713408
      %v4017 = vunpack.c.0.s8 %v4016
      %v4018 = vperm.slane %v4010, %v4017
      %v4019 = vrot.slane %v3990, 4
      %v4020 = vsel %vm1534, %v4019, %v3978
      %v4021 = vrot.slane %v3978, 4
      %v4022 = vsel %vm1534, %v3990, %v4021
      %v4024 = vunpack.c.l.s4 1934713408
      %v4025 = vunpack.c.0.s8 %v4024
      %v4026 = vperm.slane %v4020, %v4025
      %v4028 = vunpack.c.l.s4 1934713408
      %v4029 = vunpack.c.0.s8 %v4028
      %v4030 = vperm.slane %v4022, %v4029
      %v4031 = vrot.slane %v3994, 4
      %v4032 = vsel %vm1534, %v4031, %v3982
      %v4033 = vrot.slane %v3982, 4
      %v4034 = vsel %vm1534, %v3994, %v4033
      %v4036 = vunpack.c.l.s4 1934713408
      %v4037 = vunpack.c.0.s8 %v4036
      %v4038 = vperm.slane %v4032, %v4037
      %v4040 = vunpack.c.l.s4 1934713408
      %v4041 = vunpack.c.0.s8 %v4040
      %v4042 = vperm.slane %v4034, %v4041
      %v4043 = vrot.slane %v4026, 4
      %v4044 = vsel %vm1534, %v4043, %v4002
      %v4045 = vrot.slane %v4002, 4
      %v4046 = vsel %vm1534, %v4026, %v4045
      %v4047 = vrot.slane %v4030, 4
      %v4048 = vsel %vm1534, %v4047, %v4006
      %v4049 = vrot.slane %v4006, 4
      %v4050 = vsel %vm1534, %v4030, %v4049
      %v4051 = vrot.slane %v4038, 4
      %v4052 = vsel %vm1534, %v4051, %v4014
      %v4053 = vrot.slane %v4014, 4
      %v4054 = vsel %vm1534, %v4038, %v4053
      %v4055 = vrot.slane %v4042, 4
      %v4056 = vsel %vm1534, %v4055, %v4018
      %v4057 = vrot.slane %v4018, 4
      %v4058 = vsel %vm1534, %v4042, %v4057
      %v4059 = vrot.slane %v3400, 4
      %v4060 = vsel %vm1534, %v4059, %v3396
      %v4061 = vrot.slane %v3396, 4
      %v4062 = vsel %vm1534, %v3400, %v4061
      %v4064 = vunpack.c.l.s4 1983009808
      %v4065 = vunpack.c.0.s8 %v4064
      %v4066 = vperm.slane %v4060, %v4065
      %v4068 = vunpack.c.l.s4 1983009808
      %v4069 = vunpack.c.0.s8 %v4068
      %v4070 = vperm.slane %v4062, %v4069
      %v4071 = vrot.slane %v3402, 4
      %v4072 = vsel %vm1534, %v4071, %v3398
      %v4073 = vrot.slane %v3398, 4
      %v4074 = vsel %vm1534, %v3402, %v4073
      %v4076 = vunpack.c.l.s4 1983009808
      %v4077 = vunpack.c.0.s8 %v4076
      %v4078 = vperm.slane %v4072, %v4077
      %v4080 = vunpack.c.l.s4 1983009808
      %v4081 = vunpack.c.0.s8 %v4080
      %v4082 = vperm.slane %v4074, %v4081
      %v4083 = vrot.slane %v3408, 4
      %v4084 = vsel %vm1534, %v4083, %v3404
      %v4085 = vrot.slane %v3404, 4
      %v4086 = vsel %vm1534, %v3408, %v4085
      %v4088 = vunpack.c.l.s4 1983009808
      %v4089 = vunpack.c.0.s8 %v4088
      %v4090 = vperm.slane %v4084, %v4089
      %v4092 = vunpack.c.l.s4 1983009808
      %v4093 = vunpack.c.0.s8 %v4092
      %v4094 = vperm.slane %v4086, %v4093
      %v4095 = vrot.slane %v3410, 4
      %v4096 = vsel %vm1534, %v4095, %v3406
      %v4097 = vrot.slane %v3406, 4
      %v4098 = vsel %vm1534, %v3410, %v4097
      %v4100 = vunpack.c.l.s4 1983009808
      %v4101 = vunpack.c.0.s8 %v4100
      %v4102 = vperm.slane %v4096, %v4101
      %v4104 = vunpack.c.l.s4 1983009808
      %v4105 = vunpack.c.0.s8 %v4104
      %v4106 = vperm.slane %v4098, %v4105
      %v4107 = vrot.slane %v4078, 4
      %v4108 = vsel %vm1534, %v4107, %v4066
      %v4109 = vrot.slane %v4066, 4
      %v4110 = vsel %vm1534, %v4078, %v4109
      %v4112 = vunpack.c.l.s4 1934713408
      %v4113 = vunpack.c.0.s8 %v4112
      %v4114 = vperm.slane %v4108, %v4113
      %v4116 = vunpack.c.l.s4 1934713408
      %v4117 = vunpack.c.0.s8 %v4116
      %v4118 = vperm.slane %v4110, %v4117
      %v4119 = vrot.slane %v4082, 4
      %v4120 = vsel %vm1534, %v4119, %v4070
      %v4121 = vrot.slane %v4070, 4
      %v4122 = vsel %vm1534, %v4082, %v4121
      %v4124 = vunpack.c.l.s4 1934713408
      %v4125 = vunpack.c.0.s8 %v4124
      %v4126 = vperm.slane %v4120, %v4125
      %v4128 = vunpack.c.l.s4 1934713408
      %v4129 = vunpack.c.0.s8 %v4128
      %v4130 = vperm.slane %v4122, %v4129
      %v4131 = vrot.slane %v4102, 4
      %v4132 = vsel %vm1534, %v4131, %v4090
      %v4133 = vrot.slane %v4090, 4
      %v4134 = vsel %vm1534, %v4102, %v4133
      %v4136 = vunpack.c.l.s4 1934713408
      %v4137 = vunpack.c.0.s8 %v4136
      %v4138 = vperm.slane %v4132, %v4137
      %v4140 = vunpack.c.l.s4 1934713408
      %v4141 = vunpack.c.0.s8 %v4140
      %v4142 = vperm.slane %v4134, %v4141
      %v4143 = vrot.slane %v4106, 4
      %v4144 = vsel %vm1534, %v4143, %v4094
      %v4145 = vrot.slane %v4094, 4
      %v4146 = vsel %vm1534, %v4106, %v4145
      %v4148 = vunpack.c.l.s4 1934713408
      %v4149 = vunpack.c.0.s8 %v4148
      %v4150 = vperm.slane %v4144, %v4149
      %v4152 = vunpack.c.l.s4 1934713408
      %v4153 = vunpack.c.0.s8 %v4152
      %v4154 = vperm.slane %v4146, %v4153
      %v4155 = vrot.slane %v4138, 4
      %v4156 = vsel %vm1534, %v4155, %v4114
      %v4157 = vrot.slane %v4114, 4
      %v4158 = vsel %vm1534, %v4138, %v4157
      %v4159 = vrot.slane %v4142, 4
      %v4160 = vsel %vm1534, %v4159, %v4118
      %v4161 = vrot.slane %v4118, 4
      %v4162 = vsel %vm1534, %v4142, %v4161
      %v4163 = vrot.slane %v4150, 4
      %v4164 = vsel %vm1534, %v4163, %v4126
      %v4165 = vrot.slane %v4126, 4
      %v4166 = vsel %vm1534, %v4150, %v4165
      %v4167 = vrot.slane %v4154, 4
      %v4168 = vsel %vm1534, %v4167, %v4130
      %v4169 = vrot.slane %v4130, 4
      %v4170 = vsel %vm1534, %v4154, %v4169
      %v4171 = vrot.slane %v3427, 4
      %v4172 = vsel %vm1534, %v4171, %v3421
      %v4173 = vrot.slane %v3421, 4
      %v4174 = vsel %vm1534, %v3427, %v4173
      %v4176 = vunpack.c.l.s4 1983009808
      %v4177 = vunpack.c.0.s8 %v4176
      %v4178 = vperm.slane %v4172, %v4177
      %v4180 = vunpack.c.l.s4 1983009808
      %v4181 = vunpack.c.0.s8 %v4180
      %v4182 = vperm.slane %v4174, %v4181
      %v4183 = vrot.slane %v3430, 4
      %v4184 = vsel %vm1534, %v4183, %v3424
      %v4185 = vrot.slane %v3424, 4
      %v4186 = vsel %vm1534, %v3430, %v4185
      %v4188 = vunpack.c.l.s4 1983009808
      %v4189 = vunpack.c.0.s8 %v4188
      %v4190 = vperm.slane %v4184, %v4189
      %v4192 = vunpack.c.l.s4 1983009808
      %v4193 = vunpack.c.0.s8 %v4192
      %v4194 = vperm.slane %v4186, %v4193
      %v4195 = vrot.slane %v3439, 4
      %v4196 = vsel %vm1534, %v4195, %v3433
      %v4197 = vrot.slane %v3433, 4
      %v4198 = vsel %vm1534, %v3439, %v4197
      %v4200 = vunpack.c.l.s4 1983009808
      %v4201 = vunpack.c.0.s8 %v4200
      %v4202 = vperm.slane %v4196, %v4201
      %v4204 = vunpack.c.l.s4 1983009808
      %v4205 = vunpack.c.0.s8 %v4204
      %v4206 = vperm.slane %v4198, %v4205
      %v4207 = vrot.slane %v3442, 4
      %v4208 = vsel %vm1534, %v4207, %v3436
      %v4209 = vrot.slane %v3436, 4
      %v4210 = vsel %vm1534, %v3442, %v4209
      %v4212 = vunpack.c.l.s4 1983009808
      %v4213 = vunpack.c.0.s8 %v4212
      %v4214 = vperm.slane %v4208, %v4213
      %v4216 = vunpack.c.l.s4 1983009808
      %v4217 = vunpack.c.0.s8 %v4216
      %v4218 = vperm.slane %v4210, %v4217
      %v4219 = vrot.slane %v4190, 4
      %v4220 = vsel %vm1534, %v4219, %v4178
      %v4221 = vrot.slane %v4178, 4
      %v4222 = vsel %vm1534, %v4190, %v4221
      %v4224 = vunpack.c.l.s4 1934713408
      %v4225 = vunpack.c.0.s8 %v4224
      %v4226 = vperm.slane %v4220, %v4225
      %v4228 = vunpack.c.l.s4 1934713408
      %v4229 = vunpack.c.0.s8 %v4228
      %v4230 = vperm.slane %v4222, %v4229
      %v4231 = vrot.slane %v4194, 4
      %v4232 = vsel %vm1534, %v4231, %v4182
      %v4233 = vrot.slane %v4182, 4
      %v4234 = vsel %vm1534, %v4194, %v4233
      %v4236 = vunpack.c.l.s4 1934713408
      %v4237 = vunpack.c.0.s8 %v4236
      %v4238 = vperm.slane %v4232, %v4237
      %v4240 = vunpack.c.l.s4 1934713408
      %v4241 = vunpack.c.0.s8 %v4240
      %v4242 = vperm.slane %v4234, %v4241
      %v4243 = vrot.slane %v4214, 4
      %v4244 = vsel %vm1534, %v4243, %v4202
      %v4245 = vrot.slane %v4202, 4
      %v4246 = vsel %vm1534, %v4214, %v4245
      %v4248 = vunpack.c.l.s4 1934713408
      %v4249 = vunpack.c.0.s8 %v4248
      %v4250 = vperm.slane %v4244, %v4249
      %v4252 = vunpack.c.l.s4 1934713408
      %v4253 = vunpack.c.0.s8 %v4252
      %v4254 = vperm.slane %v4246, %v4253
      %v4255 = vrot.slane %v4218, 4
      %v4256 = vsel %vm1534, %v4255, %v4206
      %v4257 = vrot.slane %v4206, 4
      %v4258 = vsel %vm1534, %v4218, %v4257
      %v4260 = vunpack.c.l.s4 1934713408
      %v4261 = vunpack.c.0.s8 %v4260
      %v4262 = vperm.slane %v4256, %v4261
      %v4264 = vunpack.c.l.s4 1934713408
      %v4265 = vunpack.c.0.s8 %v4264
      %v4266 = vperm.slane %v4258, %v4265
      %v4267 = vrot.slane %v4250, 4
      %v4268 = vsel %vm1534, %v4267, %v4226
      %v4269 = vrot.slane %v4226, 4
      %v4270 = vsel %vm1534, %v4250, %v4269
      %v4271 = vrot.slane %v4254, 4
      %v4272 = vsel %vm1534, %v4271, %v4230
      %v4273 = vrot.slane %v4230, 4
      %v4274 = vsel %vm1534, %v4254, %v4273
      %v4275 = vrot.slane %v4262, 4
      %v4276 = vsel %vm1534, %v4275, %v4238
      %v4277 = vrot.slane %v4238, 4
      %v4278 = vsel %vm1534, %v4262, %v4277
      %v4279 = vrot.slane %v4266, 4
      %v4280 = vsel %vm1534, %v4279, %v4242
      %v4281 = vrot.slane %v4242, 4
      %v4282 = vsel %vm1534, %v4266, %v4281
      %v4283 = vrot.slane %v3456, 4
      %v4284 = vsel %vm1534, %v4283, %v3452
      %v4285 = vrot.slane %v3452, 4
      %v4286 = vsel %vm1534, %v3456, %v4285
      %v4288 = vunpack.c.l.s4 1983009808
      %v4289 = vunpack.c.0.s8 %v4288
      %v4290 = vperm.slane %v4284, %v4289
      %v4292 = vunpack.c.l.s4 1983009808
      %v4293 = vunpack.c.0.s8 %v4292
      %v4294 = vperm.slane %v4286, %v4293
      %v4295 = vrot.slane %v3458, 4
      %v4296 = vsel %vm1534, %v4295, %v3454
      %v4297 = vrot.slane %v3454, 4
      %v4298 = vsel %vm1534, %v3458, %v4297
      %v4300 = vunpack.c.l.s4 1983009808
      %v4301 = vunpack.c.0.s8 %v4300
      %v4302 = vperm.slane %v4296, %v4301
      %v4304 = vunpack.c.l.s4 1983009808
      %v4305 = vunpack.c.0.s8 %v4304
      %v4306 = vperm.slane %v4298, %v4305
      %v4307 = vrot.slane %v3464, 4
      %v4308 = vsel %vm1534, %v4307, %v3460
      %v4309 = vrot.slane %v3460, 4
      %v4310 = vsel %vm1534, %v3464, %v4309
      %v4312 = vunpack.c.l.s4 1983009808
      %v4313 = vunpack.c.0.s8 %v4312
      %v4314 = vperm.slane %v4308, %v4313
      %v4316 = vunpack.c.l.s4 1983009808
      %v4317 = vunpack.c.0.s8 %v4316
      %v4318 = vperm.slane %v4310, %v4317
      %v4319 = vrot.slane %v3466, 4
      %v4320 = vsel %vm1534, %v4319, %v3462
      %v4321 = vrot.slane %v3462, 4
      %v4322 = vsel %vm1534, %v3466, %v4321
      %v4324 = vunpack.c.l.s4 1983009808
      %v4325 = vunpack.c.0.s8 %v4324
      %v4326 = vperm.slane %v4320, %v4325
      %v4328 = vunpack.c.l.s4 1983009808
      %v4329 = vunpack.c.0.s8 %v4328
      %v4330 = vperm.slane %v4322, %v4329
      %v4331 = vrot.slane %v4302, 4
      %v4332 = vsel %vm1534, %v4331, %v4290
      %v4333 = vrot.slane %v4290, 4
      %v4334 = vsel %vm1534, %v4302, %v4333
      %v4336 = vunpack.c.l.s4 1934713408
      %v4337 = vunpack.c.0.s8 %v4336
      %v4338 = vperm.slane %v4332, %v4337
      %v4340 = vunpack.c.l.s4 1934713408
      %v4341 = vunpack.c.0.s8 %v4340
      %v4342 = vperm.slane %v4334, %v4341
      %v4343 = vrot.slane %v4306, 4
      %v4344 = vsel %vm1534, %v4343, %v4294
      %v4345 = vrot.slane %v4294, 4
      %v4346 = vsel %vm1534, %v4306, %v4345
      %v4348 = vunpack.c.l.s4 1934713408
      %v4349 = vunpack.c.0.s8 %v4348
      %v4350 = vperm.slane %v4344, %v4349
      %v4352 = vunpack.c.l.s4 1934713408
      %v4353 = vunpack.c.0.s8 %v4352
      %v4354 = vperm.slane %v4346, %v4353
      %v4355 = vrot.slane %v4326, 4
      %v4356 = vsel %vm1534, %v4355, %v4314
      %v4357 = vrot.slane %v4314, 4
      %v4358 = vsel %vm1534, %v4326, %v4357
      %v4360 = vunpack.c.l.s4 1934713408
      %v4361 = vunpack.c.0.s8 %v4360
      %v4362 = vperm.slane %v4356, %v4361
      %v4364 = vunpack.c.l.s4 1934713408
      %v4365 = vunpack.c.0.s8 %v4364
      %v4366 = vperm.slane %v4358, %v4365
      %v4367 = vrot.slane %v4330, 4
      %v4368 = vsel %vm1534, %v4367, %v4318
      %v4369 = vrot.slane %v4318, 4
      %v4370 = vsel %vm1534, %v4330, %v4369
      %v4372 = vunpack.c.l.s4 1934713408
      %v4373 = vunpack.c.0.s8 %v4372
      %v4374 = vperm.slane %v4368, %v4373
      %v4376 = vunpack.c.l.s4 1934713408
      %v4377 = vunpack.c.0.s8 %v4376
      %v4378 = vperm.slane %v4370, %v4377
      %v4379 = vrot.slane %v4362, 4
      %v4380 = vsel %vm1534, %v4379, %v4338
      %v4381 = vrot.slane %v4338, 4
      %v4382 = vsel %vm1534, %v4362, %v4381
      %v4383 = vrot.slane %v4366, 4
      %v4384 = vsel %vm1534, %v4383, %v4342
      %v4385 = vrot.slane %v4342, 4
      %v4386 = vsel %vm1534, %v4366, %v4385
      %v4387 = vrot.slane %v4374, 4
      %v4388 = vsel %vm1534, %v4387, %v4350
      %v4389 = vrot.slane %v4350, 4
      %v4390 = vsel %vm1534, %v4374, %v4389
      %v4391 = vrot.slane %v4378, 4
      %v4392 = vsel %vm1534, %v4391, %v4354
      %v4393 = vrot.slane %v4354, 4
      %v4394 = vsel %vm1534, %v4378, %v4393
      %v4395 = vrot.slane %v3480, 4
      %v4396 = vsel %vm1534, %v4395, %v3476
      %v4397 = vrot.slane %v3476, 4
      %v4398 = vsel %vm1534, %v3480, %v4397
      %v4400 = vunpack.c.l.s4 1983009808
      %v4401 = vunpack.c.0.s8 %v4400
      %v4402 = vperm.slane %v4396, %v4401
      %v4404 = vunpack.c.l.s4 1983009808
      %v4405 = vunpack.c.0.s8 %v4404
      %v4406 = vperm.slane %v4398, %v4405
      %v4407 = vrot.slane %v3482, 4
      %v4408 = vsel %vm1534, %v4407, %v3478
      %v4409 = vrot.slane %v3478, 4
      %v4410 = vsel %vm1534, %v3482, %v4409
      %v4412 = vunpack.c.l.s4 1983009808
      %v4413 = vunpack.c.0.s8 %v4412
      %v4414 = vperm.slane %v4408, %v4413
      %v4416 = vunpack.c.l.s4 1983009808
      %v4417 = vunpack.c.0.s8 %v4416
      %v4418 = vperm.slane %v4410, %v4417
      %v4419 = vrot.slane %v3488, 4
      %v4420 = vsel %vm1534, %v4419, %v3484
      %v4421 = vrot.slane %v3484, 4
      %v4422 = vsel %vm1534, %v3488, %v4421
      %v4424 = vunpack.c.l.s4 1983009808
      %v4425 = vunpack.c.0.s8 %v4424
      %v4426 = vperm.slane %v4420, %v4425
      %v4428 = vunpack.c.l.s4 1983009808
      %v4429 = vunpack.c.0.s8 %v4428
      %v4430 = vperm.slane %v4422, %v4429
      %v4431 = vrot.slane %v3490, 4
      %v4432 = vsel %vm1534, %v4431, %v3486
      %v4433 = vrot.slane %v3486, 4
      %v4434 = vsel %vm1534, %v3490, %v4433
      %v4436 = vunpack.c.l.s4 1983009808
      %v4437 = vunpack.c.0.s8 %v4436
      %v4438 = vperm.slane %v4432, %v4437
      %v4440 = vunpack.c.l.s4 1983009808
      %v4441 = vunpack.c.0.s8 %v4440
      %v4442 = vperm.slane %v4434, %v4441
      %v4443 = vrot.slane %v4414, 4
      %v4444 = vsel %vm1534, %v4443, %v4402
      %v4445 = vrot.slane %v4402, 4
      %v4446 = vsel %vm1534, %v4414, %v4445
      %v4448 = vunpack.c.l.s4 1934713408
      %v4449 = vunpack.c.0.s8 %v4448
      %v4450 = vperm.slane %v4444, %v4449
      %v4452 = vunpack.c.l.s4 1934713408
      %v4453 = vunpack.c.0.s8 %v4452
      %v4454 = vperm.slane %v4446, %v4453
      %v4455 = vrot.slane %v4418, 4
      %v4456 = vsel %vm1534, %v4455, %v4406
      %v4457 = vrot.slane %v4406, 4
      %v4458 = vsel %vm1534, %v4418, %v4457
      %v4460 = vunpack.c.l.s4 1934713408
      %v4461 = vunpack.c.0.s8 %v4460
      %v4462 = vperm.slane %v4456, %v4461
      %v4464 = vunpack.c.l.s4 1934713408
      %v4465 = vunpack.c.0.s8 %v4464
      %v4466 = vperm.slane %v4458, %v4465
      %v4467 = vrot.slane %v4438, 4
      %v4468 = vsel %vm1534, %v4467, %v4426
      %v4469 = vrot.slane %v4426, 4
      %v4470 = vsel %vm1534, %v4438, %v4469
      %v4472 = vunpack.c.l.s4 1934713408
      %v4473 = vunpack.c.0.s8 %v4472
      %v4474 = vperm.slane %v4468, %v4473
      %v4476 = vunpack.c.l.s4 1934713408
      %v4477 = vunpack.c.0.s8 %v4476
      %v4478 = vperm.slane %v4470, %v4477
      %v4479 = vrot.slane %v4442, 4
      %v4480 = vsel %vm1534, %v4479, %v4430
      %v4481 = vrot.slane %v4430, 4
      %v4482 = vsel %vm1534, %v4442, %v4481
      %v4484 = vunpack.c.l.s4 1934713408
      %v4485 = vunpack.c.0.s8 %v4484
      %v4486 = vperm.slane %v4480, %v4485
      %v4488 = vunpack.c.l.s4 1934713408
      %v4489 = vunpack.c.0.s8 %v4488
      %v4490 = vperm.slane %v4482, %v4489
      %v4491 = vrot.slane %v4474, 4
      %v4492 = vsel %vm1534, %v4491, %v4450
      %v4493 = vrot.slane %v4450, 4
      %v4494 = vsel %vm1534, %v4474, %v4493
      %v4495 = vrot.slane %v4478, 4
      %v4496 = vsel %vm1534, %v4495, %v4454
      %v4497 = vrot.slane %v4454, 4
      %v4498 = vsel %vm1534, %v4478, %v4497
      %v4499 = vrot.slane %v4486, 4
      %v4500 = vsel %vm1534, %v4499, %v4462
      %v4501 = vrot.slane %v4462, 4
      %v4502 = vsel %vm1534, %v4486, %v4501
      %v4503 = vrot.slane %v4490, 4
      %v4504 = vsel %vm1534, %v4503, %v4466
      %v4505 = vrot.slane %v4466, 4
      %v4506 = vsel %vm1534, %v4490, %v4505
      %4516 = vrot.lane.b32.xlu0 %v3598, 8
      %v4517 = vpop.permute.xlu0 %4516
      %4518 = vrot.lane.b32.xlu0 %v3710, 8
      %v4519 = vpop.permute.xlu0 %4518
      %4520 = vrot.lane.b32.xlu0 %v3822, 8
      %v4521 = vpop.permute.xlu0 %4520
      %4522 = vrot.lane.b32.xlu0 %v3934, 8
      %v4523 = vpop.permute.xlu0 %4522
      %4524 = vrot.lane.b32.xlu0 %v4046, 8
      %v4525 = vpop.permute.xlu0 %4524
      %4526 = vrot.lane.b32.xlu0 %v4158, 8
      %v4527 = vpop.permute.xlu0 %4526
      %4528 = vrot.lane.b32.xlu0 %v4270, 8
      %v4529 = vpop.permute.xlu0 %4528
      %4530 = vrot.lane.b32.xlu0 %v4382, 8
      %v4531 = vpop.permute.xlu0 %4530
      %4532 = vrot.lane.b32.xlu0 %v4494, 8
      %v4533 = vpop.permute.xlu0 %4532
      %4552 = vrot.lane.b32.xlu0 %v3600, 16
      %v4553 = vpop.permute.xlu0 %4552
      %4554 = vrot.lane.b32.xlu0 %v3712, 16
      %v4555 = vpop.permute.xlu0 %4554
      %4556 = vrot.lane.b32.xlu0 %v3824, 16
      %v4557 = vpop.permute.xlu0 %4556
      %4558 = vrot.lane.b32.xlu0 %v3936, 16
      %v4559 = vpop.permute.xlu0 %4558
      %4560 = vrot.lane.b32.xlu0 %v4048, 16
      %v4561 = vpop.permute.xlu0 %4560
      %4562 = vrot.lane.b32.xlu0 %v4160, 16
      %v4563 = vpop.permute.xlu0 %4562
      %4564 = vrot.lane.b32.xlu0 %v4272, 16
      %v4565 = vpop.permute.xlu0 %4564
      %4566 = vrot.lane.b32.xlu0 %v4384, 16
      %v4567 = vpop.permute.xlu0 %4566
      %4568 = vrot.lane.b32.xlu0 %v4496, 16
      %v4569 = vpop.permute.xlu0 %4568
      %4588 = vrot.lane.b32.xlu0 %v3602, 24
      %v4589 = vpop.permute.xlu0 %4588
      %4590 = vrot.lane.b32.xlu0 %v3714, 24
      %v4591 = vpop.permute.xlu0 %4590
      %4592 = vrot.lane.b32.xlu0 %v3826, 24
      %v4593 = vpop.permute.xlu0 %4592
      %4594 = vrot.lane.b32.xlu0 %v3938, 24
      %v4595 = vpop.permute.xlu0 %4594
      %4596 = vrot.lane.b32.xlu0 %v4050, 24
      %v4597 = vpop.permute.xlu0 %4596
      %4598 = vrot.lane.b32.xlu0 %v4162, 24
      %v4599 = vpop.permute.xlu0 %4598
      %4600 = vrot.lane.b32.xlu0 %v4274, 24
      %v4601 = vpop.permute.xlu0 %4600
      %4602 = vrot.lane.b32.xlu0 %v4386, 24
      %v4603 = vpop.permute.xlu0 %4602
      %4604 = vrot.lane.b32.xlu0 %v4498, 24
      %v4605 = vpop.permute.xlu0 %4604
      %4624 = vrot.lane.b32.xlu0 %v3604, 32
      %v4625 = vpop.permute.xlu0 %4624
      %4626 = vrot.lane.b32.xlu0 %v3716, 32
      %v4627 = vpop.permute.xlu0 %4626
      %4628 = vrot.lane.b32.xlu0 %v3828, 32
      %v4629 = vpop.permute.xlu0 %4628
      %4630 = vrot.lane.b32.xlu0 %v3940, 32
      %v4631 = vpop.permute.xlu0 %4630
      %4632 = vrot.lane.b32.xlu0 %v4052, 32
      %v4633 = vpop.permute.xlu0 %4632
      %4634 = vrot.lane.b32.xlu0 %v4164, 32
      %v4635 = vpop.permute.xlu0 %4634
      %4636 = vrot.lane.b32.xlu0 %v4276, 32
      %v4637 = vpop.permute.xlu0 %4636
      %4638 = vrot.lane.b32.xlu0 %v4388, 32
      %v4639 = vpop.permute.xlu0 %4638
      %4640 = vrot.lane.b32.xlu0 %v4500, 32
      %v4641 = vpop.permute.xlu0 %4640
      %4660 = vrot.lane.b32.xlu0 %v3606, 40
      %v4661 = vpop.permute.xlu0 %4660
      %4662 = vrot.lane.b32.xlu0 %v3718, 40
      %v4663 = vpop.permute.xlu0 %4662
      %4664 = vrot.lane.b32.xlu0 %v3830, 40
      %v4665 = vpop.permute.xlu0 %4664
      %4666 = vrot.lane.b32.xlu0 %v3942, 40
      %v4667 = vpop.permute.xlu0 %4666
      %4668 = vrot.lane.b32.xlu0 %v4054, 40
      %v4669 = vpop.permute.xlu0 %4668
      %4670 = vrot.lane.b32.xlu0 %v4166, 40
      %v4671 = vpop.permute.xlu0 %4670
      %4672 = vrot.lane.b32.xlu0 %v4278, 40
      %v4673 = vpop.permute.xlu0 %4672
      %4674 = vrot.lane.b32.xlu0 %v4390, 40
      %v4675 = vpop.permute.xlu0 %4674
      %4676 = vrot.lane.b32.xlu0 %v4502, 40
      %v4677 = vpop.permute.xlu0 %4676
      %4696 = vrot.lane.b32.xlu0 %v3608, 48
      %v4697 = vpop.permute.xlu0 %4696
      %4698 = vrot.lane.b32.xlu0 %v3720, 48
      %v4699 = vpop.permute.xlu0 %4698
      %4700 = vrot.lane.b32.xlu0 %v3832, 48
      %v4701 = vpop.permute.xlu0 %4700
      %4702 = vrot.lane.b32.xlu0 %v3944, 48
      %v4703 = vpop.permute.xlu0 %4702
      %4704 = vrot.lane.b32.xlu0 %v4056, 48
      %v4705 = vpop.permute.xlu0 %4704
      %4706 = vrot.lane.b32.xlu0 %v4168, 48
      %v4707 = vpop.permute.xlu0 %4706
      %4708 = vrot.lane.b32.xlu0 %v4280, 48
      %v4709 = vpop.permute.xlu0 %4708
      %4710 = vrot.lane.b32.xlu0 %v4392, 48
      %v4711 = vpop.permute.xlu0 %4710
      %4712 = vrot.lane.b32.xlu0 %v4504, 48
      %v4713 = vpop.permute.xlu0 %4712
      %4732 = vrot.lane.b32.xlu0 %v3610, 56
      %v4733 = vpop.permute.xlu0 %4732
      %4734 = vrot.lane.b32.xlu0 %v3722, 56
      %v4735 = vpop.permute.xlu0 %4734
      %4736 = vrot.lane.b32.xlu0 %v3834, 56
      %v4737 = vpop.permute.xlu0 %4736
      %4738 = vrot.lane.b32.xlu0 %v3946, 56
      %v4739 = vpop.permute.xlu0 %4738
      %4740 = vrot.lane.b32.xlu0 %v4058, 56
      %v4741 = vpop.permute.xlu0 %4740
      %4742 = vrot.lane.b32.xlu0 %v4170, 56
      %v4743 = vpop.permute.xlu0 %4742
      %4744 = vrot.lane.b32.xlu0 %v4282, 56
      %v4745 = vpop.permute.xlu0 %4744
      %4746 = vrot.lane.b32.xlu0 %v4394, 56
      %v4747 = vpop.permute.xlu0 %4746
      %4748 = vrot.lane.b32.xlu0 %v4506, 56
      %v4749 = vpop.permute.xlu0 %4748
      %v4759 = vsel %vm2967, %v3596, %v4517
      %v4760 = vsel %vm2967, %v3708, %v4519
      %v4761 = vsel %vm2967, %v3820, %v4521
      %v4762 = vsel %vm2967, %v3932, %v4523
      %v4763 = vsel %vm2967, %v4044, %v4525
      %v4764 = vsel %vm2967, %v4156, %v4527
      %v4765 = vsel %vm2967, %v4268, %v4529
      %v4766 = vsel %vm2967, %v4380, %v4531
      %v4767 = vsel %vm2967, %v4492, %v4533
      %v4768 = vsel %vm2973, %v4759, %v4553
      %v4769 = vsel %vm2973, %v4760, %v4555
      %v4770 = vsel %vm2973, %v4761, %v4557
      %v4771 = vsel %vm2973, %v4762, %v4559
      %v4772 = vsel %vm2973, %v4763, %v4561
      %v4773 = vsel %vm2973, %v4764, %v4563
      %v4774 = vsel %vm2973, %v4765, %v4565
      %v4775 = vsel %vm2973, %v4766, %v4567
      %v4776 = vsel %vm2973, %v4767, %v4569
      %v4777 = vsel %vm2979, %v4768, %v4589
      %v4778 = vsel %vm2979, %v4769, %v4591
      %v4779 = vsel %vm2979, %v4770, %v4593
      %v4780 = vsel %vm2979, %v4771, %v4595
      %v4781 = vsel %vm2979, %v4772, %v4597
      %v4782 = vsel %vm2979, %v4773, %v4599
      %v4783 = vsel %vm2979, %v4774, %v4601
      %v4784 = vsel %vm2979, %v4775, %v4603
      %v4785 = vsel %vm2979, %v4776, %v4605
      %v4786 = vsel %vm2985, %v4777, %v4625
      %v4787 = vsel %vm2985, %v4778, %v4627
      %v4788 = vsel %vm2985, %v4779, %v4629
      %v4789 = vsel %vm2985, %v4780, %v4631
      %v4790 = vsel %vm2985, %v4781, %v4633
      %v4791 = vsel %vm2985, %v4782, %v4635
      %v4792 = vsel %vm2985, %v4783, %v4637
      %v4793 = vsel %vm2985, %v4784, %v4639
      %v4794 = vsel %vm2985, %v4785, %v4641
      %v4795 = vsel %vm2991, %v4786, %v4661
      %v4796 = vsel %vm2991, %v4787, %v4663
      %v4797 = vsel %vm2991, %v4788, %v4665
      %v4798 = vsel %vm2991, %v4789, %v4667
      %v4799 = vsel %vm2991, %v4790, %v4669
      %v4800 = vsel %vm2991, %v4791, %v4671
      %v4801 = vsel %vm2991, %v4792, %v4673
      %v4802 = vsel %vm2991, %v4793, %v4675
      %v4803 = vsel %vm2991, %v4794, %v4677
      %v4804 = vsel %vm2997, %v4795, %v4697
      %v4805 = vsel %vm2997, %v4796, %v4699
      %v4806 = vsel %vm2997, %v4797, %v4701
      %v4807 = vsel %vm2997, %v4798, %v4703
      %v4808 = vsel %vm2997, %v4799, %v4705
      %v4809 = vsel %vm2997, %v4800, %v4707
      %v4810 = vsel %vm2997, %v4801, %v4709
      %v4811 = vsel %vm2997, %v4802, %v4711
      %v4812 = vsel %vm2997, %v4803, %v4713
      %v4813 = vsel %vm3003, %v4804, %v4733
      %v4814 = vsel %vm3003, %v4805, %v4735
      %v4815 = vsel %vm3003, %v4806, %v4737
      %v4816 = vsel %vm3003, %v4807, %v4739
      %v4817 = vsel %vm3003, %v4808, %v4741
      %v4818 = vsel %vm3003, %v4809, %v4743
      %v4819 = vsel %vm3003, %v4810, %v4745
      %v4820 = vsel %vm3003, %v4811, %v4747
      %v4821 = vsel %vm3003, %v4812, %v4749
      %v4822 = vld [vmem:[%s4] sm:$0xff]
      %vm4823 = vcmask 588800
      %v4825 = vsel %vm4823, %v4822, 0
      %4827 = vmatpush.msra.mxu0 0.0
      %4828 = vmatpush.msra.mxu0 0.0
      %4829 = vmatpush.msra.mxu0 0.0
      %4830 = vmatpush.msra.mxu0 0.0
      %4831 = vmatpush.msra.mxu0 0.0
      %4832 = vmatpush.msra.mxu0 0.0
      %4833 = vmatpush.msra.mxu0 0.0
      %4834 = vmatpush.msra.mxu0 %v4821
      %4835 = vmatpush.msra.mxu0 %v4820
      %4836 = vmatpush.msra.mxu0 %v4819
      %4837 = vmatpush.msra.mxu0 %v4818
      %4838 = vmatpush.msra.mxu0 %v4817
      %4839 = vmatpush.msra.mxu0 %v4816
      %4840 = vmatpush.msra.mxu0 %v4815
      %4841 = vmatpush.msra.mxu0 %v4814
      %4842 = vmatpush.msra.mxu0 %v4813
      %4843 = vmatmul.f32.gmra.mxu0 %v4825
      %v4844 = vpop.f32.mrf.mxu0
      %v4845 = vadd.f32 0.0, %v4844
      %4846 = vdwg.mxu0
      %v4847 = vld [vmem:[%s5] sm:$0xff]
      %4849 = vset.pattern.permute.xlu0 0
      %4850 = vperm.xlu0 %4849, %v4847
      %v4851 = vpop.permute.xlu0 %4850
      %v4853 = vmul.f32 %v4845, %v4851
      %v4854 = vld [vmem:[%s6] sm:$0xff]
      %4856 = vset.pattern.permute.xlu0 0
      %4857 = vperm.xlu0 %4856, %v4854
      %v4858 = vpop.permute.xlu0 %4857
      %v4860 = vadd.f32 %v4853, %v4858
      %v4861 = vmax.f32 %v4860, 0.0
      %vm4862 = vcmask 523264
      %4863 = vst.msk [vmem:[%s276] sm:$0xff] %vm4862, %v4861
      %p4864 = scmp.lt.s32.totalorder %s18, 1
      %s4865 = scalar_select %p4864, %s18, 1
      %s4866 = smul.addr %s4865, 8
      %s4867 = scalar_lea.vmem %s7, %s4866
      // Predicated region
      $region49: #{down_forward.1} parent=47 // pred_check
        %p4868 = pneg %p188
      $region50: #{down_forward.1} parent=47 // pred_check_branch
        %4870 = sbr.rel (%p4868) target = $region52
      $region51: #{down_forward.1} parent=47 // pred_region
        _
      $region52: #{down_forward.1} parent=47 // pred_fallthru
        _
    $region48: #{down_forward.1} parent=5 // pred_fallthru
      _
    %p4871 = scmp.le.s32.totalorder 2, %s13
    // Predicated region
    $region53: #{down_forward.1} parent=5 // pred_check
      %p4872 = pneg %p4871
    $region54: #{down_forward.1} parent=5 // pred_check_branch
      %4874 = sbr.rel (%p4872) target = $region56
    $region55: #{down_forward.1} parent=5 // pred_region
      %s4875 = ssub.s32 %s13, 2
      // Predicated region
      $region57: #{down_forward.1} parent=55 // pred_check
        %p4876 = pneg %p194
      $region58: #{down_forward.1} parent=55 // pred_check_branch
        %4878 = sbr.rel (%p4876) target = $region60
      $region59: #{down_forward.1} parent=55 // pred_region
        %p4879 = scmp.lt.s32.totalorder %s19, 1
        %s4880 = scalar_select %p4879, %s19, 1
        %s4881 = smul.addr %s4880, 8
        %s4882 = scalar_lea.vmem %s7, %s4881
      $region60: #{down_forward.1} parent=55 // pred_fallthru
        _
    $region56: #{down_forward.1} parent=5 // pred_fallthru
      _
  $region6: #{down_forward.1} parent=0 // loop_footer
    %s17 = sadd.s32 1, %s13
  $region7: #{down_forward.1} parent=0 // loop_footer_branch
    %12 = sbr.rel target = $region3
  $region8: #{down_forward.1} parent=0 // loop_exit
    _

</llo_original>
